<compile_context>
chip_gen: v7x
topology: tpu7x:2x2x1
jax: 0.10.0
libtpu: 0.0.40
codegen_flags: <defaults>
</compile_context>

<pallas_src>
import jax
import jax.numpy as jnp
import numpy as np
from jax import lax
from jax.experimental import pallas as pl
from jax.experimental.pallas import tpu as pltpu  # noqa: F401  (kept for TPU backend)

_LANE = 128
_SUBLANE = 8


def _round_up(x, m):
    return ((x + m - 1) // m) * m


# ----------------------------------------------------------------------------
# Fused Pallas kernel: all layers + all timesteps + classifier in one call
# ----------------------------------------------------------------------------
def _fused_lstm_kernel(x_ref, w_ref, b_ref, wcls_ref, bcls_ref, out_ref):
    """x_ref:    (T, B, P)      time-major embedded input, E zero-padded to P
       w_ref:    (L, 2P, 4P)    per-layer [W_ih^T ; W_hh^T], gate-padded to P lanes
       b_ref:    (L, 1, 4P)     per-layer b_ih + b_hh (gate-padded)
       wcls_ref: (P, 1)         classifier weight (zero-padded rows >= H)
       bcls_ref: (1, 1)         classifier bias
       out_ref:  (B, 1)         logits
    """
    T, B, P = x_ref.shape
    L = w_ref.shape[0]
    GP = 4 * P

    # Hoisted out of the time loop (JAX does not CSE broadcast_in_dim).
    biases = [jnp.broadcast_to(b_ref[l], (B, GP)) for l in range(L)]

    def cell(layer, x_t, h, c, bias):
        # Lane-aligned concat -> single MXU matmul for both input & recurrent terms.
        xh = jnp.concatenate([x_t, h], axis=-1)                    # (B, 2P)
        gates = jnp.dot(xh, w_ref[layer],
                        preferred_element_type=jnp.float32) + bias  # (B, 4P)
        # Full-vreg gate slices (each gate spans P=128 lanes). PyTorch order i,f,g,o.
        i_g = jax.nn.sigmoid(gates[:, 0 * P:1 * P])
        f_g = jax.nn.sigmoid(gates[:, 1 * P:2 * P])
        g_g = jnp.tanh(gates[:, 2 * P:3 * P])
        o_g = jax.nn.sigmoid(gates[:, 3 * P:4 * P])
        c_new = f_g * c + i_g * g_g
        h_new = o_g * jnp.tanh(c_new)
        return h_new, c_new

    zeros = jnp.zeros((B, P), jnp.float32)
    init = tuple(zeros for _ in range(2 * L))  # (h_0, c_0, h_1, c_1, ...)

    def step(t, carry):
        carry = list(carry)
        inp = x_ref[t]                                   # (B, P)
        for l in range(L):                               # layers interleaved per step
            h, c = cell(l, inp, carry[2 * l], carry[2 * l + 1], biases[l])
            carry[2 * l], carry[2 * l + 1] = h, c
            inp = h                                      # feeds next layer (same t)
        return tuple(carry)

    final = lax.fori_loop(0, T, step, init, unroll=True)
    h_last = final[2 * (L - 1)]                          # last layer, last timestep

    # Classifier fused here (Dropout is identity in eval mode).
    logits = (jnp.dot(h_last, wcls_ref[...], preferred_element_type=jnp.float32)
              + bcls_ref[...])
    out_ref[...] = logits.astype(out_ref.dtype)


@jax.jit
def lstm_model_forward(tokens, fused):
    # Embedding gather + transpose to time-major are glue ops in plain JAX.
    x = fused["emb_pad"][tokens]                          # (B, T, P)
    x = jnp.transpose(x, (1, 0, 2)).astype(jnp.float32)   # (T, B, P)
    T, B, P = x.shape
    B_pad = _round_up(max(B, _SUBLANE), _SUBLANE)         # sublane-aligned batch
    if B_pad != B:
        x = jnp.pad(x, ((0, 0), (0, B_pad - B), (0, 0)))
    out = pl.pallas_call(
        _fused_lstm_kernel,
        out_shape=jax.ShapeDtypeStruct((B_pad, 1), jnp.float32),
    )(x, fused["w_all"], fused["b_all"], fused["wcls_pad"], fused["bcls"])
    return out[:B]


# ----------------------------------------------------------------------------
# Parameter construction (natural PyTorch layout) + padded/fused packing
# ----------------------------------------------------------------------------
def make_params(key, vocab, embedding_dim, hidden_dim, num_layers):
    params = {}
    keys = jax.random.split(key, 1 + 4 * num_layers + 2)
    ki = iter(keys)

    params["embedding"] = jax.random.normal(
        next(ki), (vocab, embedding_dim), jnp.float32) * 0.1

    stdv = 1.0 / np.sqrt(hidden_dim)
    for layer in range(num_layers):
        in_dim = embedding_dim if layer == 0 else hidden_dim
        params[f"w_ih_{layer}"] = jax.random.uniform(
            next(ki), (4 * hidden_dim, in_dim), jnp.float32, -stdv, stdv)
        params[f"w_hh_{layer}"] = jax.random.uniform(
            next(ki), (4 * hidden_dim, hidden_dim), jnp.float32, -stdv, stdv)
        params[f"b_ih_{layer}"] = jax.random.uniform(
            next(ki), (4 * hidden_dim,), jnp.float32, -stdv, stdv)
        params[f"b_hh_{layer}"] = jax.random.uniform(
            next(ki), (4 * hidden_dim,), jnp.float32, -stdv, stdv)

    params["cls_w"] = jax.random.uniform(
        next(ki), (1, hidden_dim), jnp.float32, -stdv, stdv)
    params["cls_b"] = jax.random.uniform(
        next(ki), (1,), jnp.float32, -stdv, stdv)
    return params


def prepare_fused_params(params, num_layers, lane=_LANE):
    """Pack weights into the lane-dense padded layout the fused kernel expects."""
    emb = np.asarray(params["embedding"], np.float32)
    V, E = emb.shape
    H = np.asarray(params["w_hh_0"]).shape[1]
    P = max(_round_up(E, lane), _round_up(H, lane))   # common padded width

    emb_pad = np.zeros((V, P), np.float32)
    emb_pad[:, :E] = emb

    w_all = np.zeros((num_layers, 2 * P, 4 * P), np.float32)
    b_all = np.zeros((num_layers, 1, 4 * P), np.float32)
    for l in range(num_layers):
        w_ih = np.asarray(params[f"w_ih_{l}"], np.float32)   # (4H, in_l)
        w_hh = np.asarray(params[f"w_hh_{l}"], np.float32)   # (4H, H)
        b = (np.asarray(params[f"b_ih_{l}"], np.float32)
             + np.asarray(params[f"b_hh_{l}"], np.float32))  # (4H,)
        in_l = w_ih.shape[1]
        for g in range(4):  # PyTorch gate order: i, f, g, o
            w_all[l, :in_l, g * P:g * P + H] = w_ih[g * H:(g + 1) * H, :].T
            w_all[l, P:P + H, g * P:g * P + H] = w_hh[g * H:(g + 1) * H, :].T
            b_all[l, 0, g * P:g * P + H] = b[g * H:(g + 1) * H]

    cls_w = np.asarray(params["cls_w"], np.float32)           # (1, H)
    cls_b = np.asarray(params["cls_b"], np.float32)           # (1,)
    wcls_pad = np.zeros((P, 1), np.float32)
    wcls_pad[:H, 0] = cls_w[0]
    bcls = cls_b.reshape(1, 1)

    return {
        "emb_pad": jnp.asarray(emb_pad),
        "w_all": jnp.asarray(w_all),
        "b_all": jnp.asarray(b_all),
        "wcls_pad": jnp.asarray(wcls_pad),
        "bcls": jnp.asarray(bcls),
    }


# ----------------------------------------------------------------------------
# Pure-JAX reference (for correctness check)
# ----------------------------------------------------------------------------
def lstm_model_reference(tokens, params, num_layers):
    emb = params["embedding"]
    x = emb[tokens].astype(jnp.float32)     # (B, T, E)
    B, T, _ = x.shape
    for layer in range(num_layers):
        w_ih = params[f"w_ih_{layer}"]
        w_hh = params[f"w_hh_{layer}"]
        b = params[f"b_ih_{layer}"] + params[f"b_hh_{layer}"]
        H = w_hh.shape[1]
        h = jnp.zeros((B, H), jnp.float32)
        c = jnp.zeros((B, H), jnp.float32)
        ys = []
        for t in range(T):
            gates = x[:, t, :] @ w_ih.T + h @ w_hh.T + b
            i_g = jax.nn.sigmoid(gates[:, 0 * H:1 * H])
            f_g = jax.nn.sigmoid(gates[:, 1 * H:2 * H])
            g_g = jnp.tanh(gates[:, 2 * H:3 * H])
            o_g = jax.nn.sigmoid(gates[:, 3 * H:4 * H])
            c = f_g * c + i_g * g_g
            h = o_g * jnp.tanh(c)
            ys.append(h)
        x = jnp.stack(ys, axis=1)           # (B, T, H)
    return x[:, -1, :] @ params["cls_w"].T + params["cls_b"]


# ----------------------------------------------------------------------------
# Driver
# ----------------------------------------------------------------------------
if __name__ == "__main__":
    B, T = 2, 8
    VOCAB, E, H, NUM_LAYERS = 50, 32, 32, 2

    key = jax.random.PRNGKey(0)
    k_params, k_tokens = jax.random.split(key)
    params = make_params(k_params, VOCAB, E, H, NUM_LAYERS)
    fused = prepare_fused_params(params, NUM_LAYERS)
    tokens = jax.random.randint(k_tokens, (B, T), 0, VOCAB, dtype=jnp.int32)

    out = lstm_model_forward(tokens, fused)
    out = jax.block_until_ready(out)
    assert out.shape == (B, 1), out.shape

    ref = lstm_model_reference(tokens, params, NUM_LAYERS)
    np.testing.assert_allclose(np.asarray(out), np.asarray(ref),
                               rtol=1e-4, atol=1e-5)

    print("KERNEL_OK")
</pallas_src>

<mosaic_0001>
module attributes {stable_mosaic.version = 11 : i64} {
  func.func @_fused_lstm_kernel(%arg0: memref<8x8x128xf32, #tpu.memory_space<vmem>>, %arg1: memref<2x256x512xf32, #tpu.memory_space<vmem>>, %arg2: memref<2x1x512xf32, #tpu.memory_space<vmem>>, %arg3: memref<128x1xf32, #tpu.memory_space<vmem>>, %arg4: memref<1x1xf32, #tpu.memory_space<vmem>>, %arg5: memref<8x1xf32, #tpu.memory_space<vmem>>) attributes {dimension_semantics = [], scalar_prefetch = 0 : i64, scratch_operands = 0 : i64, tpu.core_type = #tpu.core_type<tc>} {
    %c0 = arith.constant 0 : index
    %c0_0 = arith.constant 0 : index
    %c0_1 = arith.constant 0 : index
    %0 = vector.load %arg2[%c0, %c0_0, %c0_1] : memref<2x1x512xf32, #tpu.memory_space<vmem>>, vector<1x1x512xf32>
    %1 = vector.shape_cast %0 : vector<1x1x512xf32> to vector<1x512xf32>
    %2 = vector.shape_cast %1 : vector<1x512xf32> to vector<1x512xf32>
    %3 = vector.broadcast %2 : vector<1x512xf32> to vector<8x512xf32>
    %c1 = arith.constant 1 : index
    %c0_2 = arith.constant 0 : index
    %c0_3 = arith.constant 0 : index
    %4 = vector.load %arg2[%c1, %c0_2, %c0_3] : memref<2x1x512xf32, #tpu.memory_space<vmem>>, vector<1x1x512xf32>
    %5 = vector.shape_cast %4 : vector<1x1x512xf32> to vector<1x512xf32>
    %6 = vector.shape_cast %5 : vector<1x512xf32> to vector<1x512xf32>
    %7 = vector.broadcast %6 : vector<1x512xf32> to vector<8x512xf32>
    %cst = arith.constant 0.000000e+00 : f32
    %8 = vector.broadcast %cst : f32 to vector<8x128xf32>
    %c0_i32 = arith.constant 0 : i32
    %9 = arith.index_cast %c0_i32 : i32 to index
    %c0_4 = arith.constant 0 : index
    %c0_5 = arith.constant 0 : index
    %10 = vector.load %arg0[%9, %c0_4, %c0_5] : memref<8x8x128xf32, #tpu.memory_space<vmem>>, vector<1x8x128xf32>
    %11 = vector.shape_cast %10 : vector<1x8x128xf32> to vector<8x128xf32>
    %12 = tpu.concatenate %11, %8 in 1 : vector<8x128xf32>, vector<8x128xf32> -> vector<8x256xf32>
    %c0_6 = arith.constant 0 : index
    %c0_7 = arith.constant 0 : index
    %c0_8 = arith.constant 0 : index
    %13 = vector.load %arg1[%c0_6, %c0_7, %c0_8] : memref<2x256x512xf32, #tpu.memory_space<vmem>>, vector<1x256x512xf32>
    %14 = vector.shape_cast %13 : vector<1x256x512xf32> to vector<256x512xf32>
    %cst_9 = arith.constant dense<0.000000e+00> : vector<8x512xf32>
    %15 = tpu.matmul %12, %14, %cst_9 {dimension_numbers = #tpu.dot_dimension_numbers<[1], [0], [0], [1], [0, 0, 1, 1], [], []>} : vector<8x256xf32>, vector<256x512xf32>, vector<8x512xf32> -> vector<8x512xf32>
    %16 = arith.addf %15, %3 : vector<8x512xf32>
    %17 = vector.extract_strided_slice %16 {offsets = [0, 0], sizes = [8, 128], strides = [1, 1]} : vector<8x512xf32> to vector<8x128xf32>
    %18 = arith.negf %17 : vector<8x128xf32>
    %19 = math.exp %18 : vector<8x128xf32>
    %cst_10 = arith.constant 1.000000e+00 : f32
    %20 = vector.broadcast %cst_10 : f32 to vector<8x128xf32>
    %21 = arith.addf %20, %19 : vector<8x128xf32>
    %22 = arith.divf %20, %21 : vector<8x128xf32>
    %23 = vector.extract_strided_slice %16 {offsets = [0, 128], sizes = [8, 128], strides = [1, 1]} : vector<8x512xf32> to vector<8x128xf32>
    %24 = arith.negf %23 : vector<8x128xf32>
    %25 = math.exp %24 : vector<8x128xf32>
    %cst_11 = arith.constant 1.000000e+00 : f32
    %26 = vector.broadcast %cst_11 : f32 to vector<8x128xf32>
    %27 = arith.addf %26, %25 : vector<8x128xf32>
    %28 = arith.divf %26, %27 : vector<8x128xf32>
    %29 = vector.extract_strided_slice %16 {offsets = [0, 256], sizes = [8, 128], strides = [1, 1]} : vector<8x512xf32> to vector<8x128xf32>
    %30 = math.tanh %29 : vector<8x128xf32>
    %31 = vector.extract_strided_slice %16 {offsets = [0, 384], sizes = [8, 128], strides = [1, 1]} : vector<8x512xf32> to vector<8x128xf32>
    %32 = arith.negf %31 : vector<8x128xf32>
    %33 = math.exp %32 : vector<8x128xf32>
    %cst_12 = arith.constant 1.000000e+00 : f32
    %34 = vector.broadcast %cst_12 : f32 to vector<8x128xf32>
    %35 = arith.addf %34, %33 : vector<8x128xf32>
    %36 = arith.divf %34, %35 : vector<8x128xf32>
    %37 = arith.mulf %28, %8 : vector<8x128xf32>
    %38 = arith.mulf %22, %30 : vector<8x128xf32>
    %39 = arith.addf %37, %38 : vector<8x128xf32>
    %40 = math.tanh %39 : vector<8x128xf32>
    %41 = arith.mulf %36, %40 : vector<8x128xf32>
    %42 = tpu.concatenate %41, %8 in 1 : vector<8x128xf32>, vector<8x128xf32> -> vector<8x256xf32>
    %c1_13 = arith.constant 1 : index
    %c0_14 = arith.constant 0 : index
    %c0_15 = arith.constant 0 : index
    %43 = vector.load %arg1[%c1_13, %c0_14, %c0_15] : memref<2x256x512xf32, #tpu.memory_space<vmem>>, vector<1x256x512xf32>
    %44 = vector.shape_cast %43 : vector<1x256x512xf32> to vector<256x512xf32>
    %cst_16 = arith.constant dense<0.000000e+00> : vector<8x512xf32>
    %45 = tpu.matmul %42, %44, %cst_16 {dimension_numbers = #tpu.dot_dimension_numbers<[1], [0], [0], [1], [0, 0, 1, 1], [], []>} : vector<8x256xf32>, vector<256x512xf32>, vector<8x512xf32> -> vector<8x512xf32>
    %46 = arith.addf %45, %7 : vector<8x512xf32>
    %47 = vector.extract_strided_slice %46 {offsets = [0, 0], sizes = [8, 128], strides = [1, 1]} : vector<8x512xf32> to vector<8x128xf32>
    %48 = arith.negf %47 : vector<8x128xf32>
    %49 = math.exp %48 : vector<8x128xf32>
    %cst_17 = arith.constant 1.000000e+00 : f32
    %50 = vector.broadcast %cst_17 : f32 to vector<8x128xf32>
    %51 = arith.addf %50, %49 : vector<8x128xf32>
    %52 = arith.divf %50, %51 : vector<8x128xf32>
    %53 = vector.extract_strided_slice %46 {offsets = [0, 128], sizes = [8, 128], strides = [1, 1]} : vector<8x512xf32> to vector<8x128xf32>
    %54 = arith.negf %53 : vector<8x128xf32>
    %55 = math.exp %54 : vector<8x128xf32>
    %cst_18 = arith.constant 1.000000e+00 : f32
    %56 = vector.broadcast %cst_18 : f32 to vector<8x128xf32>
    %57 = arith.addf %56, %55 : vector<8x128xf32>
    %58 = arith.divf %56, %57 : vector<8x128xf32>
    %59 = vector.extract_strided_slice %46 {offsets = [0, 256], sizes = [8, 128], strides = [1, 1]} : vector<8x512xf32> to vector<8x128xf32>
    %60 = math.tanh %59 : vector<8x128xf32>
    %61 = vector.extract_strided_slice %46 {offsets = [0, 384], sizes = [8, 128], strides = [1, 1]} : vector<8x512xf32> to vector<8x128xf32>
    %62 = arith.negf %61 : vector<8x128xf32>
    %63 = math.exp %62 : vector<8x128xf32>
    %cst_19 = arith.constant 1.000000e+00 : f32
    %64 = vector.broadcast %cst_19 : f32 to vector<8x128xf32>
    %65 = arith.addf %64, %63 : vector<8x128xf32>
    %66 = arith.divf %64, %65 : vector<8x128xf32>
    %67 = arith.mulf %58, %8 : vector<8x128xf32>
    %68 = arith.mulf %52, %60 : vector<8x128xf32>
    %69 = arith.addf %67, %68 : vector<8x128xf32>
    %70 = math.tanh %69 : vector<8x128xf32>
    %71 = arith.mulf %66, %70 : vector<8x128xf32>
    %c1_i32 = arith.constant 1 : i32
    %72 = arith.index_cast %c1_i32 : i32 to index
    %c0_20 = arith.constant 0 : index
    %c0_21 = arith.constant 0 : index
    %73 = vector.load %arg0[%72, %c0_20, %c0_21] : memref<8x8x128xf32, #tpu.memory_space<vmem>>, vector<1x8x128xf32>
    %74 = vector.shape_cast %73 : vector<1x8x128xf32> to vector<8x128xf32>
    %75 = tpu.concatenate %74, %41 in 1 : vector<8x128xf32>, vector<8x128xf32> -> vector<8x256xf32>
    %c0_22 = arith.constant 0 : index
    %c0_23 = arith.constant 0 : index
    %c0_24 = arith.constant 0 : index
    %76 = vector.load %arg1[%c0_22, %c0_23, %c0_24] : memref<2x256x512xf32, #tpu.memory_space<vmem>>, vector<1x256x512xf32>
    %77 = vector.shape_cast %76 : vector<1x256x512xf32> to vector<256x512xf32>
    %cst_25 = arith.constant dense<0.000000e+00> : vector<8x512xf32>
    %78 = tpu.matmul %75, %77, %cst_25 {dimension_numbers = #tpu.dot_dimension_numbers<[1], [0], [0], [1], [0, 0, 1, 1], [], []>} : vector<8x256xf32>, vector<256x512xf32>, vector<8x512xf32> -> vector<8x512xf32>
    %79 = arith.addf %78, %3 : vector<8x512xf32>
    %80 = vector.extract_strided_slice %79 {offsets = [0, 0], sizes = [8, 128], strides = [1, 1]} : vector<8x512xf32> to vector<8x128xf32>
    %81 = arith.negf %80 : vector<8x128xf32>
    %82 = math.exp %81 : vector<8x128xf32>
    %cst_26 = arith.constant 1.000000e+00 : f32
    %83 = vector.broadcast %cst_26 : f32 to vector<8x128xf32>
    %84 = arith.addf %83, %82 : vector<8x128xf32>
    %85 = arith.divf %83, %84 : vector<8x128xf32>
    %86 = vector.extract_strided_slice %79 {offsets = [0, 128], sizes = [8, 128], strides = [1, 1]} : vector<8x512xf32> to vector<8x128xf32>
    %87 = arith.negf %86 : vector<8x128xf32>
    %88 = math.exp %87 : vector<8x128xf32>
    %cst_27 = arith.constant 1.000000e+00 : f32
    %89 = vector.broadcast %cst_27 : f32 to vector<8x128xf32>
    %90 = arith.addf %89, %88 : vector<8x128xf32>
    %91 = arith.divf %89, %90 : vector<8x128xf32>
    %92 = vector.extract_strided_slice %79 {offsets = [0, 256], sizes = [8, 128], strides = [1, 1]} : vector<8x512xf32> to vector<8x128xf32>
    %93 = math.tanh %92 : vector<8x128xf32>
    %94 = vector.extract_strided_slice %79 {offsets = [0, 384], sizes = [8, 128], strides = [1, 1]} : vector<8x512xf32> to vector<8x128xf32>
    %95 = arith.negf %94 : vector<8x128xf32>
    %96 = math.exp %95 : vector<8x128xf32>
    %cst_28 = arith.constant 1.000000e+00 : f32
    %97 = vector.broadcast %cst_28 : f32 to vector<8x128xf32>
    %98 = arith.addf %97, %96 : vector<8x128xf32>
    %99 = arith.divf %97, %98 : vector<8x128xf32>
    %100 = arith.mulf %91, %39 : vector<8x128xf32>
    %101 = arith.mulf %85, %93 : vector<8x128xf32>
    %102 = arith.addf %100, %101 : vector<8x128xf32>
    %103 = math.tanh %102 : vector<8x128xf32>
    %104 = arith.mulf %99, %103 : vector<8x128xf32>
    %105 = tpu.concatenate %104, %71 in 1 : vector<8x128xf32>, vector<8x128xf32> -> vector<8x256xf32>
    %c1_29 = arith.constant 1 : index
    %c0_30 = arith.constant 0 : index
    %c0_31 = arith.constant 0 : index
    %106 = vector.load %arg1[%c1_29, %c0_30, %c0_31] : memref<2x256x512xf32, #tpu.memory_space<vmem>>, vector<1x256x512xf32>
    %107 = vector.shape_cast %106 : vector<1x256x512xf32> to vector<256x512xf32>
    %cst_32 = arith.constant dense<0.000000e+00> : vector<8x512xf32>
    %108 = tpu.matmul %105, %107, %cst_32 {dimension_numbers = #tpu.dot_dimension_numbers<[1], [0], [0], [1], [0, 0, 1, 1], [], []>} : vector<8x256xf32>, vector<256x512xf32>, vector<8x512xf32> -> vector<8x512xf32>
    %109 = arith.addf %108, %7 : vector<8x512xf32>
    %110 = vector.extract_strided_slice %109 {offsets = [0, 0], sizes = [8, 128], strides = [1, 1]} : vector<8x512xf32> to vector<8x128xf32>
    %111 = arith.negf %110 : vector<8x128xf32>
    %112 = math.exp %111 : vector<8x128xf32>
    %cst_33 = arith.constant 1.000000e+00 : f32
    %113 = vector.broadcast %cst_33 : f32 to vector<8x128xf32>
    %114 = arith.addf %113, %112 : vector<8x128xf32>
    %115 = arith.divf %113, %114 : vector<8x128xf32>
    %116 = vector.extract_strided_slice %109 {offsets = [0, 128], sizes = [8, 128], strides = [1, 1]} : vector<8x512xf32> to vector<8x128xf32>
    %117 = arith.negf %116 : vector<8x128xf32>
    %118 = math.exp %117 : vector<8x128xf32>
    %cst_34 = arith.constant 1.000000e+00 : f32
    %119 = vector.broadcast %cst_34 : f32 to vector<8x128xf32>
    %120 = arith.addf %119, %118 : vector<8x128xf32>
    %121 = arith.divf %119, %120 : vector<8x128xf32>
    %122 = vector.extract_strided_slice %109 {offsets = [0, 256], sizes = [8, 128], strides = [1, 1]} : vector<8x512xf32> to vector<8x128xf32>
    %123 = math.tanh %122 : vector<8x128xf32>
    %124 = vector.extract_strided_slice %109 {offsets = [0, 384], sizes = [8, 128], strides = [1, 1]} : vector<8x512xf32> to vector<8x128xf32>
    %125 = arith.negf %124 : vector<8x128xf32>
    %126 = math.exp %125 : vector<8x128xf32>
    %cst_35 = arith.constant 1.000000e+00 : f32
    %127 = vector.broadcast %cst_35 : f32 to vector<8x128xf32>
    %128 = arith.addf %127, %126 : vector<8x128xf32>
    %129 = arith.divf %127, %128 : vector<8x128xf32>
    %130 = arith.mulf %121, %69 : vector<8x128xf32>
    %131 = arith.mulf %115, %123 : vector<8x128xf32>
    %132 = arith.addf %130, %131 : vector<8x128xf32>
    %133 = math.tanh %132 : vector<8x128xf32>
    %134 = arith.mulf %129, %133 : vector<8x128xf32>
    %c2_i32 = arith.constant 2 : i32
    %135 = arith.index_cast %c2_i32 : i32 to index
    %c0_36 = arith.constant 0 : index
    %c0_37 = arith.constant 0 : index
    %136 = vector.load %arg0[%135, %c0_36, %c0_37] : memref<8x8x128xf32, #tpu.memory_space<vmem>>, vector<1x8x128xf32>
    %137 = vector.shape_cast %136 : vector<1x8x128xf32> to vector<8x128xf32>
    %138 = tpu.concatenate %137, %104 in 1 : vector<8x128xf32>, vector<8x128xf32> -> vector<8x256xf32>
    %c0_38 = arith.constant 0 : index
    %c0_39 = arith.constant 0 : index
    %c0_40 = arith.constant 0 : index
    %139 = vector.load %arg1[%c0_38, %c0_39, %c0_40] : memref<2x256x512xf32, #tpu.memory_space<vmem>>, vector<1x256x512xf32>
    %140 = vector.shape_cast %139 : vector<1x256x512xf32> to vector<256x512xf32>
    %cst_41 = arith.constant dense<0.000000e+00> : vector<8x512xf32>
    %141 = tpu.matmul %138, %140, %cst_41 {dimension_numbers = #tpu.dot_dimension_numbers<[1], [0], [0], [1], [0, 0, 1, 1], [], []>} : vector<8x256xf32>, vector<256x512xf32>, vector<8x512xf32> -> vector<8x512xf32>
    %142 = arith.addf %141, %3 : vector<8x512xf32>
    %143 = vector.extract_strided_slice %142 {offsets = [0, 0], sizes = [8, 128], strides = [1, 1]} : vector<8x512xf32> to vector<8x128xf32>
    %144 = arith.negf %143 : vector<8x128xf32>
    %145 = math.exp %144 : vector<8x128xf32>
    %cst_42 = arith.constant 1.000000e+00 : f32
    %146 = vector.broadcast %cst_42 : f32 to vector<8x128xf32>
    %147 = arith.addf %146, %145 : vector<8x128xf32>
    %148 = arith.divf %146, %147 : vector<8x128xf32>
    %149 = vector.extract_strided_slice %142 {offsets = [0, 128], sizes = [8, 128], strides = [1, 1]} : vector<8x512xf32> to vector<8x128xf32>
    %150 = arith.negf %149 : vector<8x128xf32>
    %151 = math.exp %150 : vector<8x128xf32>
    %cst_43 = arith.constant 1.000000e+00 : f32
    %152 = vector.broadcast %cst_43 : f32 to vector<8x128xf32>
    %153 = arith.addf %152, %151 : vector<8x128xf32>
    %154 = arith.divf %152, %153 : vector<8x128xf32>
    %155 = vector.extract_strided_slice %142 {offsets = [0, 256], sizes = [8, 128], strides = [1, 1]} : vector<8x512xf32> to vector<8x128xf32>
    %156 = math.tanh %155 : vector<8x128xf32>
    %157 = vector.extract_strided_slice %142 {offsets = [0, 384], sizes = [8, 128], strides = [1, 1]} : vector<8x512xf32> to vector<8x128xf32>
    %158 = arith.negf %157 : vector<8x128xf32>
    %159 = math.exp %158 : vector<8x128xf32>
    %cst_44 = arith.constant 1.000000e+00 : f32
    %160 = vector.broadcast %cst_44 : f32 to vector<8x128xf32>
    %161 = arith.addf %160, %159 : vector<8x128xf32>
    %162 = arith.divf %160, %161 : vector<8x128xf32>
    %163 = arith.mulf %154, %102 : vector<8x128xf32>
    %164 = arith.mulf %148, %156 : vector<8x128xf32>
    %165 = arith.addf %163, %164 : vector<8x128xf32>
    %166 = math.tanh %165 : vector<8x128xf32>
    %167 = arith.mulf %162, %166 : vector<8x128xf32>
    %168 = tpu.concatenate %167, %134 in 1 : vector<8x128xf32>, vector<8x128xf32> -> vector<8x256xf32>
    %c1_45 = arith.constant 1 : index
    %c0_46 = arith.constant 0 : index
    %c0_47 = arith.constant 0 : index
    %169 = vector.load %arg1[%c1_45, %c0_46, %c0_47] : memref<2x256x512xf32, #tpu.memory_space<vmem>>, vector<1x256x512xf32>
    %170 = vector.shape_cast %169 : vector<1x256x512xf32> to vector<256x512xf32>
    %cst_48 = arith.constant dense<0.000000e+00> : vector<8x512xf32>
    %171 = tpu.matmul %168, %170, %cst_48 {dimension_numbers = #tpu.dot_dimension_numbers<[1], [0], [0], [1], [0, 0, 1, 1], [], []>} : vector<8x256xf32>, vector<256x512xf32>, vector<8x512xf32> -> vector<8x512xf32>
    %172 = arith.addf %171, %7 : vector<8x512xf32>
    %173 = vector.extract_strided_slice %172 {offsets = [0, 0], sizes = [8, 128], strides = [1, 1]} : vector<8x512xf32> to vector<8x128xf32>
    %174 = arith.negf %173 : vector<8x128xf32>
    %175 = math.exp %174 : vector<8x128xf32>
    %cst_49 = arith.constant 1.000000e+00 : f32
    %176 = vector.broadcast %cst_49 : f32 to vector<8x128xf32>
    %177 = arith.addf %176, %175 : vector<8x128xf32>
    %178 = arith.divf %176, %177 : vector<8x128xf32>
    %179 = vector.extract_strided_slice %172 {offsets = [0, 128], sizes = [8, 128], strides = [1, 1]} : vector<8x512xf32> to vector<8x128xf32>
    %180 = arith.negf %179 : vector<8x128xf32>
    %181 = math.exp %180 : vector<8x128xf32>
    %cst_50 = arith.constant 1.000000e+00 : f32
    %182 = vector.broadcast %cst_50 : f32 to vector<8x128xf32>
    %183 = arith.addf %182, %181 : vector<8x128xf32>
    %184 = arith.divf %182, %183 : vector<8x128xf32>
    %185 = vector.extract_strided_slice %172 {offsets = [0, 256], sizes = [8, 128], strides = [1, 1]} : vector<8x512xf32> to vector<8x128xf32>
    %186 = math.tanh %185 : vector<8x128xf32>
    %187 = vector.extract_strided_slice %172 {offsets = [0, 384], sizes = [8, 128], strides = [1, 1]} : vector<8x512xf32> to vector<8x128xf32>
    %188 = arith.negf %187 : vector<8x128xf32>
    %189 = math.exp %188 : vector<8x128xf32>
    %cst_51 = arith.constant 1.000000e+00 : f32
    %190 = vector.broadcast %cst_51 : f32 to vector<8x128xf32>
    %191 = arith.addf %190, %189 : vector<8x128xf32>
    %192 = arith.divf %190, %191 : vector<8x128xf32>
    %193 = arith.mulf %184, %132 : vector<8x128xf32>
    %194 = arith.mulf %178, %186 : vector<8x128xf32>
    %195 = arith.addf %193, %194 : vector<8x128xf32>
    %196 = math.tanh %195 : vector<8x128xf32>
    %197 = arith.mulf %192, %196 : vector<8x128xf32>
    %c3_i32 = arith.constant 3 : i32
    %198 = arith.index_cast %c3_i32 : i32 to index
    %c0_52 = arith.constant 0 : index
    %c0_53 = arith.constant 0 : index
    %199 = vector.load %arg0[%198, %c0_52, %c0_53] : memref<8x8x128xf32, #tpu.memory_space<vmem>>, vector<1x8x128xf32>
    %200 = vector.shape_cast %199 : vector<1x8x128xf32> to vector<8x128xf32>
    %201 = tpu.concatenate %200, %167 in 1 : vector<8x128xf32>, vector<8x128xf32> -> vector<8x256xf32>
    %c0_54 = arith.constant 0 : index
    %c0_55 = arith.constant 0 : index
    %c0_56 = arith.constant 0 : index
    %202 = vector.load %arg1[%c0_54, %c0_55, %c0_56] : memref<2x256x512xf32, #tpu.memory_space<vmem>>, vector<1x256x512xf32>
    %203 = vector.shape_cast %202 : vector<1x256x512xf32> to vector<256x512xf32>
    %cst_57 = arith.constant dense<0.000000e+00> : vector<8x512xf32>
    %204 = tpu.matmul %201, %203, %cst_57 {dimension_numbers = #tpu.dot_dimension_numbers<[1], [0], [0], [1], [0, 0, 1, 1], [], []>} : vector<8x256xf32>, vector<256x512xf32>, vector<8x512xf32> -> vector<8x512xf32>
    %205 = arith.addf %204, %3 : vector<8x512xf32>
    %206 = vector.extract_strided_slice %205 {offsets = [0, 0], sizes = [8, 128], strides = [1, 1]} : vector<8x512xf32> to vector<8x128xf32>
    %207 = arith.negf %206 : vector<8x128xf32>
    %208 = math.exp %207 : vector<8x128xf32>
    %cst_58 = arith.constant 1.000000e+00 : f32
    %209 = vector.broadcast %cst_58 : f32 to vector<8x128xf32>
    %210 = arith.addf %209, %208 : vector<8x128xf32>
    %211 = arith.divf %209, %210 : vector<8x128xf32>
    %212 = vector.extract_strided_slice %205 {offsets = [0, 128], sizes = [8, 128], strides = [1, 1]} : vector<8x512xf32> to vector<8x128xf32>
    %213 = arith.negf %212 : vector<8x128xf32>
    %214 = math.exp %213 : vector<8x128xf32>
    %cst_59 = arith.constant 1.000000e+00 : f32
    %215 = vector.broadcast %cst_59 : f32 to vector<8x128xf32>
    %216 = arith.addf %215, %214 : vector<8x128xf32>
    %217 = arith.divf %215, %216 : vector<8x128xf32>
    %218 = vector.extract_strided_slice %205 {offsets = [0, 256], sizes = [8, 128], strides = [1, 1]} : vector<8x512xf32> to vector<8x128xf32>
    %219 = math.tanh %218 : vector<8x128xf32>
    %220 = vector.extract_strided_slice %205 {offsets = [0, 384], sizes = [8, 128], strides = [1, 1]} : vector<8x512xf32> to vector<8x128xf32>
    %221 = arith.negf %220 : vector<8x128xf32>
    %222 = math.exp %221 : vector<8x128xf32>
    %cst_60 = arith.constant 1.000000e+00 : f32
    %223 = vector.broadcast %cst_60 : f32 to vector<8x128xf32>
    %224 = arith.addf %223, %222 : vector<8x128xf32>
    %225 = arith.divf %223, %224 : vector<8x128xf32>
    %226 = arith.mulf %217, %165 : vector<8x128xf32>
    %227 = arith.mulf %211, %219 : vector<8x128xf32>
    %228 = arith.addf %226, %227 : vector<8x128xf32>
    %229 = math.tanh %228 : vector<8x128xf32>
    %230 = arith.mulf %225, %229 : vector<8x128xf32>
    %231 = tpu.concatenate %230, %197 in 1 : vector<8x128xf32>, vector<8x128xf32> -> vector<8x256xf32>
    %c1_61 = arith.constant 1 : index
    %c0_62 = arith.constant 0 : index
    %c0_63 = arith.constant 0 : index
    %232 = vector.load %arg1[%c1_61, %c0_62, %c0_63] : memref<2x256x512xf32, #tpu.memory_space<vmem>>, vector<1x256x512xf32>
    %233 = vector.shape_cast %232 : vector<1x256x512xf32> to vector<256x512xf32>
    %cst_64 = arith.constant dense<0.000000e+00> : vector<8x512xf32>
    %234 = tpu.matmul %231, %233, %cst_64 {dimension_numbers = #tpu.dot_dimension_numbers<[1], [0], [0], [1], [0, 0, 1, 1], [], []>} : vector<8x256xf32>, vector<256x512xf32>, vector<8x512xf32> -> vector<8x512xf32>
    %235 = arith.addf %234, %7 : vector<8x512xf32>
    %236 = vector.extract_strided_slice %235 {offsets = [0, 0], sizes = [8, 128], strides = [1, 1]} : vector<8x512xf32> to vector<8x128xf32>
    %237 = arith.negf %236 : vector<8x128xf32>
    %238 = math.exp %237 : vector<8x128xf32>
    %cst_65 = arith.constant 1.000000e+00 : f32
    %239 = vector.broadcast %cst_65 : f32 to vector<8x128xf32>
    %240 = arith.addf %239, %238 : vector<8x128xf32>
    %241 = arith.divf %239, %240 : vector<8x128xf32>
    %242 = vector.extract_strided_slice %235 {offsets = [0, 128], sizes = [8, 128], strides = [1, 1]} : vector<8x512xf32> to vector<8x128xf32>
    %243 = arith.negf %242 : vector<8x128xf32>
    %244 = math.exp %243 : vector<8x128xf32>
    %cst_66 = arith.constant 1.000000e+00 : f32
    %245 = vector.broadcast %cst_66 : f32 to vector<8x128xf32>
    %246 = arith.addf %245, %244 : vector<8x128xf32>
    %247 = arith.divf %245, %246 : vector<8x128xf32>
    %248 = vector.extract_strided_slice %235 {offsets = [0, 256], sizes = [8, 128], strides = [1, 1]} : vector<8x512xf32> to vector<8x128xf32>
    %249 = math.tanh %248 : vector<8x128xf32>
    %250 = vector.extract_strided_slice %235 {offsets = [0, 384], sizes = [8, 128], strides = [1, 1]} : vector<8x512xf32> to vector<8x128xf32>
    %251 = arith.negf %250 : vector<8x128xf32>
    %252 = math.exp %251 : vector<8x128xf32>
    %cst_67 = arith.constant 1.000000e+00 : f32
    %253 = vector.broadcast %cst_67 : f32 to vector<8x128xf32>
    %254 = arith.addf %253, %252 : vector<8x128xf32>
    %255 = arith.divf %253, %254 : vector<8x128xf32>
    %256 = arith.mulf %247, %195 : vector<8x128xf32>
    %257 = arith.mulf %241, %249 : vector<8x128xf32>
    %258 = arith.addf %256, %257 : vector<8x128xf32>
    %259 = math.tanh %258 : vector<8x128xf32>
    %260 = arith.mulf %255, %259 : vector<8x128xf32>
    %c4_i32 = arith.constant 4 : i32
    %261 = arith.index_cast %c4_i32 : i32 to index
    %c0_68 = arith.constant 0 : index
    %c0_69 = arith.constant 0 : index
    %262 = vector.load %arg0[%261, %c0_68, %c0_69] : memref<8x8x128xf32, #tpu.memory_space<vmem>>, vector<1x8x128xf32>
    %263 = vector.shape_cast %262 : vector<1x8x128xf32> to vector<8x128xf32>
    %264 = tpu.concatenate %263, %230 in 1 : vector<8x128xf32>, vector<8x128xf32> -> vector<8x256xf32>
    %c0_70 = arith.constant 0 : index
    %c0_71 = arith.constant 0 : index
    %c0_72 = arith.constant 0 : index
    %265 = vector.load %arg1[%c0_70, %c0_71, %c0_72] : memref<2x256x512xf32, #tpu.memory_space<vmem>>, vector<1x256x512xf32>
    %266 = vector.shape_cast %265 : vector<1x256x512xf32> to vector<256x512xf32>
    %cst_73 = arith.constant dense<0.000000e+00> : vector<8x512xf32>
    %267 = tpu.matmul %264, %266, %cst_73 {dimension_numbers = #tpu.dot_dimension_numbers<[1], [0], [0], [1], [0, 0, 1, 1], [], []>} : vector<8x256xf32>, vector<256x512xf32>, vector<8x512xf32> -> vector<8x512xf32>
    %268 = arith.addf %267, %3 : vector<8x512xf32>
    %269 = vector.extract_strided_slice %268 {offsets = [0, 0], sizes = [8, 128], strides = [1, 1]} : vector<8x512xf32> to vector<8x128xf32>
    %270 = arith.negf %269 : vector<8x128xf32>
    %271 = math.exp %270 : vector<8x128xf32>
    %cst_74 = arith.constant 1.000000e+00 : f32
    %272 = vector.broadcast %cst_74 : f32 to vector<8x128xf32>
    %273 = arith.addf %272, %271 : vector<8x128xf32>
    %274 = arith.divf %272, %273 : vector<8x128xf32>
    %275 = vector.extract_strided_slice %268 {offsets = [0, 128], sizes = [8, 128], strides = [1, 1]} : vector<8x512xf32> to vector<8x128xf32>
    %276 = arith.negf %275 : vector<8x128xf32>
    %277 = math.exp %276 : vector<8x128xf32>
    %cst_75 = arith.constant 1.000000e+00 : f32
    %278 = vector.broadcast %cst_75 : f32 to vector<8x128xf32>
    %279 = arith.addf %278, %277 : vector<8x128xf32>
    %280 = arith.divf %278, %279 : vector<8x128xf32>
    %281 = vector.extract_strided_slice %268 {offsets = [0, 256], sizes = [8, 128], strides = [1, 1]} : vector<8x512xf32> to vector<8x128xf32>
    %282 = math.tanh %281 : vector<8x128xf32>
    %283 = vector.extract_strided_slice %268 {offsets = [0, 384], sizes = [8, 128], strides = [1, 1]} : vector<8x512xf32> to vector<8x128xf32>
    %284 = arith.negf %283 : vector<8x128xf32>
    %285 = math.exp %284 : vector<8x128xf32>
    %cst_76 = arith.constant 1.000000e+00 : f32
    %286 = vector.broadcast %cst_76 : f32 to vector<8x128xf32>
    %287 = arith.addf %286, %285 : vector<8x128xf32>
    %288 = arith.divf %286, %287 : vector<8x128xf32>
    %289 = arith.mulf %280, %228 : vector<8x128xf32>
    %290 = arith.mulf %274, %282 : vector<8x128xf32>
    %291 = arith.addf %289, %290 : vector<8x128xf32>
    %292 = math.tanh %291 : vector<8x128xf32>
    %293 = arith.mulf %288, %292 : vector<8x128xf32>
    %294 = tpu.concatenate %293, %260 in 1 : vector<8x128xf32>, vector<8x128xf32> -> vector<8x256xf32>
    %c1_77 = arith.constant 1 : index
    %c0_78 = arith.constant 0 : index
    %c0_79 = arith.constant 0 : index
    %295 = vector.load %arg1[%c1_77, %c0_78, %c0_79] : memref<2x256x512xf32, #tpu.memory_space<vmem>>, vector<1x256x512xf32>
    %296 = vector.shape_cast %295 : vector<1x256x512xf32> to vector<256x512xf32>
    %cst_80 = arith.constant dense<0.000000e+00> : vector<8x512xf32>
    %297 = tpu.matmul %294, %296, %cst_80 {dimension_numbers = #tpu.dot_dimension_numbers<[1], [0], [0], [1], [0, 0, 1, 1], [], []>} : vector<8x256xf32>, vector<256x512xf32>, vector<8x512xf32> -> vector<8x512xf32>
    %298 = arith.addf %297, %7 : vector<8x512xf32>
    %299 = vector.extract_strided_slice %298 {offsets = [0, 0], sizes = [8, 128], strides = [1, 1]} : vector<8x512xf32> to vector<8x128xf32>
    %300 = arith.negf %299 : vector<8x128xf32>
    %301 = math.exp %300 : vector<8x128xf32>
    %cst_81 = arith.constant 1.000000e+00 : f32
    %302 = vector.broadcast %cst_81 : f32 to vector<8x128xf32>
    %303 = arith.addf %302, %301 : vector<8x128xf32>
    %304 = arith.divf %302, %303 : vector<8x128xf32>
    %305 = vector.extract_strided_slice %298 {offsets = [0, 128], sizes = [8, 128], strides = [1, 1]} : vector<8x512xf32> to vector<8x128xf32>
    %306 = arith.negf %305 : vector<8x128xf32>
    %307 = math.exp %306 : vector<8x128xf32>
    %cst_82 = arith.constant 1.000000e+00 : f32
    %308 = vector.broadcast %cst_82 : f32 to vector<8x128xf32>
    %309 = arith.addf %308, %307 : vector<8x128xf32>
    %310 = arith.divf %308, %309 : vector<8x128xf32>
    %311 = vector.extract_strided_slice %298 {offsets = [0, 256], sizes = [8, 128], strides = [1, 1]} : vector<8x512xf32> to vector<8x128xf32>
    %312 = math.tanh %311 : vector<8x128xf32>
    %313 = vector.extract_strided_slice %298 {offsets = [0, 384], sizes = [8, 128], strides = [1, 1]} : vector<8x512xf32> to vector<8x128xf32>
    %314 = arith.negf %313 : vector<8x128xf32>
    %315 = math.exp %314 : vector<8x128xf32>
    %cst_83 = arith.constant 1.000000e+00 : f32
    %316 = vector.broadcast %cst_83 : f32 to vector<8x128xf32>
    %317 = arith.addf %316, %315 : vector<8x128xf32>
    %318 = arith.divf %316, %317 : vector<8x128xf32>
    %319 = arith.mulf %310, %258 : vector<8x128xf32>
    %320 = arith.mulf %304, %312 : vector<8x128xf32>
    %321 = arith.addf %319, %320 : vector<8x128xf32>
    %322 = math.tanh %321 : vector<8x128xf32>
    %323 = arith.mulf %318, %322 : vector<8x128xf32>
    %c5_i32 = arith.constant 5 : i32
    %324 = arith.index_cast %c5_i32 : i32 to index
    %c0_84 = arith.constant 0 : index
    %c0_85 = arith.constant 0 : index
    %325 = vector.load %arg0[%324, %c0_84, %c0_85] : memref<8x8x128xf32, #tpu.memory_space<vmem>>, vector<1x8x128xf32>
    %326 = vector.shape_cast %325 : vector<1x8x128xf32> to vector<8x128xf32>
    %327 = tpu.concatenate %326, %293 in 1 : vector<8x128xf32>, vector<8x128xf32> -> vector<8x256xf32>
    %c0_86 = arith.constant 0 : index
    %c0_87 = arith.constant 0 : index
    %c0_88 = arith.constant 0 : index
    %328 = vector.load %arg1[%c0_86, %c0_87, %c0_88] : memref<2x256x512xf32, #tpu.memory_space<vmem>>, vector<1x256x512xf32>
    %329 = vector.shape_cast %328 : vector<1x256x512xf32> to vector<256x512xf32>
    %cst_89 = arith.constant dense<0.000000e+00> : vector<8x512xf32>
    %330 = tpu.matmul %327, %329, %cst_89 {dimension_numbers = #tpu.dot_dimension_numbers<[1], [0], [0], [1], [0, 0, 1, 1], [], []>} : vector<8x256xf32>, vector<256x512xf32>, vector<8x512xf32> -> vector<8x512xf32>
    %331 = arith.addf %330, %3 : vector<8x512xf32>
    %332 = vector.extract_strided_slice %331 {offsets = [0, 0], sizes = [8, 128], strides = [1, 1]} : vector<8x512xf32> to vector<8x128xf32>
    %333 = arith.negf %332 : vector<8x128xf32>
    %334 = math.exp %333 : vector<8x128xf32>
    %cst_90 = arith.constant 1.000000e+00 : f32
    %335 = vector.broadcast %cst_90 : f32 to vector<8x128xf32>
    %336 = arith.addf %335, %334 : vector<8x128xf32>
    %337 = arith.divf %335, %336 : vector<8x128xf32>
    %338 = vector.extract_strided_slice %331 {offsets = [0, 128], sizes = [8, 128], strides = [1, 1]} : vector<8x512xf32> to vector<8x128xf32>
    %339 = arith.negf %338 : vector<8x128xf32>
    %340 = math.exp %339 : vector<8x128xf32>
    %cst_91 = arith.constant 1.000000e+00 : f32
    %341 = vector.broadcast %cst_91 : f32 to vector<8x128xf32>
    %342 = arith.addf %341, %340 : vector<8x128xf32>
    %343 = arith.divf %341, %342 : vector<8x128xf32>
    %344 = vector.extract_strided_slice %331 {offsets = [0, 256], sizes = [8, 128], strides = [1, 1]} : vector<8x512xf32> to vector<8x128xf32>
    %345 = math.tanh %344 : vector<8x128xf32>
    %346 = vector.extract_strided_slice %331 {offsets = [0, 384], sizes = [8, 128], strides = [1, 1]} : vector<8x512xf32> to vector<8x128xf32>
    %347 = arith.negf %346 : vector<8x128xf32>
    %348 = math.exp %347 : vector<8x128xf32>
    %cst_92 = arith.constant 1.000000e+00 : f32
    %349 = vector.broadcast %cst_92 : f32 to vector<8x128xf32>
    %350 = arith.addf %349, %348 : vector<8x128xf32>
    %351 = arith.divf %349, %350 : vector<8x128xf32>
    %352 = arith.mulf %343, %291 : vector<8x128xf32>
    %353 = arith.mulf %337, %345 : vector<8x128xf32>
    %354 = arith.addf %352, %353 : vector<8x128xf32>
    %355 = math.tanh %354 : vector<8x128xf32>
    %356 = arith.mulf %351, %355 : vector<8x128xf32>
    %357 = tpu.concatenate %356, %323 in 1 : vector<8x128xf32>, vector<8x128xf32> -> vector<8x256xf32>
    %c1_93 = arith.constant 1 : index
    %c0_94 = arith.constant 0 : index
    %c0_95 = arith.constant 0 : index
    %358 = vector.load %arg1[%c1_93, %c0_94, %c0_95] : memref<2x256x512xf32, #tpu.memory_space<vmem>>, vector<1x256x512xf32>
    %359 = vector.shape_cast %358 : vector<1x256x512xf32> to vector<256x512xf32>
    %cst_96 = arith.constant dense<0.000000e+00> : vector<8x512xf32>
    %360 = tpu.matmul %357, %359, %cst_96 {dimension_numbers = #tpu.dot_dimension_numbers<[1], [0], [0], [1], [0, 0, 1, 1], [], []>} : vector<8x256xf32>, vector<256x512xf32>, vector<8x512xf32> -> vector<8x512xf32>
    %361 = arith.addf %360, %7 : vector<8x512xf32>
    %362 = vector.extract_strided_slice %361 {offsets = [0, 0], sizes = [8, 128], strides = [1, 1]} : vector<8x512xf32> to vector<8x128xf32>
    %363 = arith.negf %362 : vector<8x128xf32>
    %364 = math.exp %363 : vector<8x128xf32>
    %cst_97 = arith.constant 1.000000e+00 : f32
    %365 = vector.broadcast %cst_97 : f32 to vector<8x128xf32>
    %366 = arith.addf %365, %364 : vector<8x128xf32>
    %367 = arith.divf %365, %366 : vector<8x128xf32>
    %368 = vector.extract_strided_slice %361 {offsets = [0, 128], sizes = [8, 128], strides = [1, 1]} : vector<8x512xf32> to vector<8x128xf32>
    %369 = arith.negf %368 : vector<8x128xf32>
    %370 = math.exp %369 : vector<8x128xf32>
    %cst_98 = arith.constant 1.000000e+00 : f32
    %371 = vector.broadcast %cst_98 : f32 to vector<8x128xf32>
    %372 = arith.addf %371, %370 : vector<8x128xf32>
    %373 = arith.divf %371, %372 : vector<8x128xf32>
    %374 = vector.extract_strided_slice %361 {offsets = [0, 256], sizes = [8, 128], strides = [1, 1]} : vector<8x512xf32> to vector<8x128xf32>
    %375 = math.tanh %374 : vector<8x128xf32>
    %376 = vector.extract_strided_slice %361 {offsets = [0, 384], sizes = [8, 128], strides = [1, 1]} : vector<8x512xf32> to vector<8x128xf32>
    %377 = arith.negf %376 : vector<8x128xf32>
    %378 = math.exp %377 : vector<8x128xf32>
    %cst_99 = arith.constant 1.000000e+00 : f32
    %379 = vector.broadcast %cst_99 : f32 to vector<8x128xf32>
    %380 = arith.addf %379, %378 : vector<8x128xf32>
    %381 = arith.divf %379, %380 : vector<8x128xf32>
    %382 = arith.mulf %373, %321 : vector<8x128xf32>
    %383 = arith.mulf %367, %375 : vector<8x128xf32>
    %384 = arith.addf %382, %383 : vector<8x128xf32>
    %385 = math.tanh %384 : vector<8x128xf32>
    %386 = arith.mulf %381, %385 : vector<8x128xf32>
    %c6_i32 = arith.constant 6 : i32
    %387 = arith.index_cast %c6_i32 : i32 to index
    %c0_100 = arith.constant 0 : index
    %c0_101 = arith.constant 0 : index
    %388 = vector.load %arg0[%387, %c0_100, %c0_101] : memref<8x8x128xf32, #tpu.memory_space<vmem>>, vector<1x8x128xf32>
    %389 = vector.shape_cast %388 : vector<1x8x128xf32> to vector<8x128xf32>
    %390 = tpu.concatenate %389, %356 in 1 : vector<8x128xf32>, vector<8x128xf32> -> vector<8x256xf32>
    %c0_102 = arith.constant 0 : index
    %c0_103 = arith.constant 0 : index
    %c0_104 = arith.constant 0 : index
    %391 = vector.load %arg1[%c0_102, %c0_103, %c0_104] : memref<2x256x512xf32, #tpu.memory_space<vmem>>, vector<1x256x512xf32>
    %392 = vector.shape_cast %391 : vector<1x256x512xf32> to vector<256x512xf32>
    %cst_105 = arith.constant dense<0.000000e+00> : vector<8x512xf32>
    %393 = tpu.matmul %390, %392, %cst_105 {dimension_numbers = #tpu.dot_dimension_numbers<[1], [0], [0], [1], [0, 0, 1, 1], [], []>} : vector<8x256xf32>, vector<256x512xf32>, vector<8x512xf32> -> vector<8x512xf32>
    %394 = arith.addf %393, %3 : vector<8x512xf32>
    %395 = vector.extract_strided_slice %394 {offsets = [0, 0], sizes = [8, 128], strides = [1, 1]} : vector<8x512xf32> to vector<8x128xf32>
    %396 = arith.negf %395 : vector<8x128xf32>
    %397 = math.exp %396 : vector<8x128xf32>
    %cst_106 = arith.constant 1.000000e+00 : f32
    %398 = vector.broadcast %cst_106 : f32 to vector<8x128xf32>
    %399 = arith.addf %398, %397 : vector<8x128xf32>
    %400 = arith.divf %398, %399 : vector<8x128xf32>
    %401 = vector.extract_strided_slice %394 {offsets = [0, 128], sizes = [8, 128], strides = [1, 1]} : vector<8x512xf32> to vector<8x128xf32>
    %402 = arith.negf %401 : vector<8x128xf32>
    %403 = math.exp %402 : vector<8x128xf32>
    %cst_107 = arith.constant 1.000000e+00 : f32
    %404 = vector.broadcast %cst_107 : f32 to vector<8x128xf32>
    %405 = arith.addf %404, %403 : vector<8x128xf32>
    %406 = arith.divf %404, %405 : vector<8x128xf32>
    %407 = vector.extract_strided_slice %394 {offsets = [0, 256], sizes = [8, 128], strides = [1, 1]} : vector<8x512xf32> to vector<8x128xf32>
    %408 = math.tanh %407 : vector<8x128xf32>
    %409 = vector.extract_strided_slice %394 {offsets = [0, 384], sizes = [8, 128], strides = [1, 1]} : vector<8x512xf32> to vector<8x128xf32>
    %410 = arith.negf %409 : vector<8x128xf32>
    %411 = math.exp %410 : vector<8x128xf32>
    %cst_108 = arith.constant 1.000000e+00 : f32
    %412 = vector.broadcast %cst_108 : f32 to vector<8x128xf32>
    %413 = arith.addf %412, %411 : vector<8x128xf32>
    %414 = arith.divf %412, %413 : vector<8x128xf32>
    %415 = arith.mulf %406, %354 : vector<8x128xf32>
    %416 = arith.mulf %400, %408 : vector<8x128xf32>
    %417 = arith.addf %415, %416 : vector<8x128xf32>
    %418 = math.tanh %417 : vector<8x128xf32>
    %419 = arith.mulf %414, %418 : vector<8x128xf32>
    %420 = tpu.concatenate %419, %386 in 1 : vector<8x128xf32>, vector<8x128xf32> -> vector<8x256xf32>
    %c1_109 = arith.constant 1 : index
    %c0_110 = arith.constant 0 : index
    %c0_111 = arith.constant 0 : index
    %421 = vector.load %arg1[%c1_109, %c0_110, %c0_111] : memref<2x256x512xf32, #tpu.memory_space<vmem>>, vector<1x256x512xf32>
    %422 = vector.shape_cast %421 : vector<1x256x512xf32> to vector<256x512xf32>
    %cst_112 = arith.constant dense<0.000000e+00> : vector<8x512xf32>
    %423 = tpu.matmul %420, %422, %cst_112 {dimension_numbers = #tpu.dot_dimension_numbers<[1], [0], [0], [1], [0, 0, 1, 1], [], []>} : vector<8x256xf32>, vector<256x512xf32>, vector<8x512xf32> -> vector<8x512xf32>
    %424 = arith.addf %423, %7 : vector<8x512xf32>
    %425 = vector.extract_strided_slice %424 {offsets = [0, 0], sizes = [8, 128], strides = [1, 1]} : vector<8x512xf32> to vector<8x128xf32>
    %426 = arith.negf %425 : vector<8x128xf32>
    %427 = math.exp %426 : vector<8x128xf32>
    %cst_113 = arith.constant 1.000000e+00 : f32
    %428 = vector.broadcast %cst_113 : f32 to vector<8x128xf32>
    %429 = arith.addf %428, %427 : vector<8x128xf32>
    %430 = arith.divf %428, %429 : vector<8x128xf32>
    %431 = vector.extract_strided_slice %424 {offsets = [0, 128], sizes = [8, 128], strides = [1, 1]} : vector<8x512xf32> to vector<8x128xf32>
    %432 = arith.negf %431 : vector<8x128xf32>
    %433 = math.exp %432 : vector<8x128xf32>
    %cst_114 = arith.constant 1.000000e+00 : f32
    %434 = vector.broadcast %cst_114 : f32 to vector<8x128xf32>
    %435 = arith.addf %434, %433 : vector<8x128xf32>
    %436 = arith.divf %434, %435 : vector<8x128xf32>
    %437 = vector.extract_strided_slice %424 {offsets = [0, 256], sizes = [8, 128], strides = [1, 1]} : vector<8x512xf32> to vector<8x128xf32>
    %438 = math.tanh %437 : vector<8x128xf32>
    %439 = vector.extract_strided_slice %424 {offsets = [0, 384], sizes = [8, 128], strides = [1, 1]} : vector<8x512xf32> to vector<8x128xf32>
    %440 = arith.negf %439 : vector<8x128xf32>
    %441 = math.exp %440 : vector<8x128xf32>
    %cst_115 = arith.constant 1.000000e+00 : f32
    %442 = vector.broadcast %cst_115 : f32 to vector<8x128xf32>
    %443 = arith.addf %442, %441 : vector<8x128xf32>
    %444 = arith.divf %442, %443 : vector<8x128xf32>
    %445 = arith.mulf %436, %384 : vector<8x128xf32>
    %446 = arith.mulf %430, %438 : vector<8x128xf32>
    %447 = arith.addf %445, %446 : vector<8x128xf32>
    %448 = math.tanh %447 : vector<8x128xf32>
    %449 = arith.mulf %444, %448 : vector<8x128xf32>
    %c7_i32 = arith.constant 7 : i32
    %450 = arith.index_cast %c7_i32 : i32 to index
    %c0_116 = arith.constant 0 : index
    %c0_117 = arith.constant 0 : index
    %451 = vector.load %arg0[%450, %c0_116, %c0_117] : memref<8x8x128xf32, #tpu.memory_space<vmem>>, vector<1x8x128xf32>
    %452 = vector.shape_cast %451 : vector<1x8x128xf32> to vector<8x128xf32>
    %453 = tpu.concatenate %452, %419 in 1 : vector<8x128xf32>, vector<8x128xf32> -> vector<8x256xf32>
    %c0_118 = arith.constant 0 : index
    %c0_119 = arith.constant 0 : index
    %c0_120 = arith.constant 0 : index
    %454 = vector.load %arg1[%c0_118, %c0_119, %c0_120] : memref<2x256x512xf32, #tpu.memory_space<vmem>>, vector<1x256x512xf32>
    %455 = vector.shape_cast %454 : vector<1x256x512xf32> to vector<256x512xf32>
    %cst_121 = arith.constant dense<0.000000e+00> : vector<8x512xf32>
    %456 = tpu.matmul %453, %455, %cst_121 {dimension_numbers = #tpu.dot_dimension_numbers<[1], [0], [0], [1], [0, 0, 1, 1], [], []>} : vector<8x256xf32>, vector<256x512xf32>, vector<8x512xf32> -> vector<8x512xf32>
    %457 = arith.addf %456, %3 : vector<8x512xf32>
    %458 = vector.extract_strided_slice %457 {offsets = [0, 0], sizes = [8, 128], strides = [1, 1]} : vector<8x512xf32> to vector<8x128xf32>
    %459 = arith.negf %458 : vector<8x128xf32>
    %460 = math.exp %459 : vector<8x128xf32>
    %cst_122 = arith.constant 1.000000e+00 : f32
    %461 = vector.broadcast %cst_122 : f32 to vector<8x128xf32>
    %462 = arith.addf %461, %460 : vector<8x128xf32>
    %463 = arith.divf %461, %462 : vector<8x128xf32>
    %464 = vector.extract_strided_slice %457 {offsets = [0, 128], sizes = [8, 128], strides = [1, 1]} : vector<8x512xf32> to vector<8x128xf32>
    %465 = arith.negf %464 : vector<8x128xf32>
    %466 = math.exp %465 : vector<8x128xf32>
    %cst_123 = arith.constant 1.000000e+00 : f32
    %467 = vector.broadcast %cst_123 : f32 to vector<8x128xf32>
    %468 = arith.addf %467, %466 : vector<8x128xf32>
    %469 = arith.divf %467, %468 : vector<8x128xf32>
    %470 = vector.extract_strided_slice %457 {offsets = [0, 256], sizes = [8, 128], strides = [1, 1]} : vector<8x512xf32> to vector<8x128xf32>
    %471 = math.tanh %470 : vector<8x128xf32>
    %472 = vector.extract_strided_slice %457 {offsets = [0, 384], sizes = [8, 128], strides = [1, 1]} : vector<8x512xf32> to vector<8x128xf32>
    %473 = arith.negf %472 : vector<8x128xf32>
    %474 = math.exp %473 : vector<8x128xf32>
    %cst_124 = arith.constant 1.000000e+00 : f32
    %475 = vector.broadcast %cst_124 : f32 to vector<8x128xf32>
    %476 = arith.addf %475, %474 : vector<8x128xf32>
    %477 = arith.divf %475, %476 : vector<8x128xf32>
    %478 = arith.mulf %469, %417 : vector<8x128xf32>
    %479 = arith.mulf %463, %471 : vector<8x128xf32>
    %480 = arith.addf %478, %479 : vector<8x128xf32>
    %481 = math.tanh %480 : vector<8x128xf32>
    %482 = arith.mulf %477, %481 : vector<8x128xf32>
    %483 = tpu.concatenate %482, %449 in 1 : vector<8x128xf32>, vector<8x128xf32> -> vector<8x256xf32>
    %c1_125 = arith.constant 1 : index
    %c0_126 = arith.constant 0 : index
    %c0_127 = arith.constant 0 : index
    %484 = vector.load %arg1[%c1_125, %c0_126, %c0_127] : memref<2x256x512xf32, #tpu.memory_space<vmem>>, vector<1x256x512xf32>
    %485 = vector.shape_cast %484 : vector<1x256x512xf32> to vector<256x512xf32>
    %cst_128 = arith.constant dense<0.000000e+00> : vector<8x512xf32>
    %486 = tpu.matmul %483, %485, %cst_128 {dimension_numbers = #tpu.dot_dimension_numbers<[1], [0], [0], [1], [0, 0, 1, 1], [], []>} : vector<8x256xf32>, vector<256x512xf32>, vector<8x512xf32> -> vector<8x512xf32>
    %487 = arith.addf %486, %7 : vector<8x512xf32>
    %488 = vector.extract_strided_slice %487 {offsets = [0, 0], sizes = [8, 128], strides = [1, 1]} : vector<8x512xf32> to vector<8x128xf32>
    %489 = arith.negf %488 : vector<8x128xf32>
    %490 = math.exp %489 : vector<8x128xf32>
    %cst_129 = arith.constant 1.000000e+00 : f32
    %491 = vector.broadcast %cst_129 : f32 to vector<8x128xf32>
    %492 = arith.addf %491, %490 : vector<8x128xf32>
    %493 = arith.divf %491, %492 : vector<8x128xf32>
    %494 = vector.extract_strided_slice %487 {offsets = [0, 128], sizes = [8, 128], strides = [1, 1]} : vector<8x512xf32> to vector<8x128xf32>
    %495 = arith.negf %494 : vector<8x128xf32>
    %496 = math.exp %495 : vector<8x128xf32>
    %cst_130 = arith.constant 1.000000e+00 : f32
    %497 = vector.broadcast %cst_130 : f32 to vector<8x128xf32>
    %498 = arith.addf %497, %496 : vector<8x128xf32>
    %499 = arith.divf %497, %498 : vector<8x128xf32>
    %500 = vector.extract_strided_slice %487 {offsets = [0, 256], sizes = [8, 128], strides = [1, 1]} : vector<8x512xf32> to vector<8x128xf32>
    %501 = math.tanh %500 : vector<8x128xf32>
    %502 = vector.extract_strided_slice %487 {offsets = [0, 384], sizes = [8, 128], strides = [1, 1]} : vector<8x512xf32> to vector<8x128xf32>
    %503 = arith.negf %502 : vector<8x128xf32>
    %504 = math.exp %503 : vector<8x128xf32>
    %cst_131 = arith.constant 1.000000e+00 : f32
    %505 = vector.broadcast %cst_131 : f32 to vector<8x128xf32>
    %506 = arith.addf %505, %504 : vector<8x128xf32>
    %507 = arith.divf %505, %506 : vector<8x128xf32>
    %508 = arith.mulf %499, %447 : vector<8x128xf32>
    %509 = arith.mulf %493, %501 : vector<8x128xf32>
    %510 = arith.addf %508, %509 : vector<8x128xf32>
    %511 = math.tanh %510 : vector<8x128xf32>
    %512 = arith.mulf %507, %511 : vector<8x128xf32>
    %c8_i32 = arith.constant 8 : i32
    %c0_132 = arith.constant 0 : index
    %c0_133 = arith.constant 0 : index
    %513 = vector.load %arg3[%c0_132, %c0_133] : memref<128x1xf32, #tpu.memory_space<vmem>>, vector<128x1xf32>
    %cst_134 = arith.constant dense<0.000000e+00> : vector<8x1xf32>
    %514 = tpu.matmul %512, %513, %cst_134 {dimension_numbers = #tpu.dot_dimension_numbers<[1], [0], [0], [1], [0, 0, 1, 1], [], []>} : vector<8x128xf32>, vector<128x1xf32>, vector<8x1xf32> -> vector<8x1xf32>
    %c0_135 = arith.constant 0 : index
    %c0_136 = arith.constant 0 : index
    %515 = vector.load %arg4[%c0_135, %c0_136] : memref<1x1xf32, #tpu.memory_space<vmem>>, vector<1x1xf32>
    %516 = vector.broadcast %515 : vector<1x1xf32> to vector<8x1xf32>
    %517 = arith.addf %514, %516 : vector<8x1xf32>
    %c0_137 = arith.constant 0 : index
    %c0_138 = arith.constant 0 : index
    %518 = vector.load %arg5[%c0_137, %c0_138] : memref<8x1xf32, #tpu.memory_space<vmem>>, vector<8x1xf32>
    tpu.vector_store %arg5[%c0_137, %c0_138], %517 {strides = array<i32>} : memref<8x1xf32, #tpu.memory_space<vmem>>, vector<8x1xf32>,
    return
  }
}

</mosaic_0001>

<llo_original>
// kernel: lstm_model_forward.1
$region0: #{lstm_model_forward.1}
  #allocation0 [shape = 'u32[]', space=smem, size = 0x4, offset = 0x4, fixed_abs, tag = 'smem constant byte address 0x4 - core index']
  #allocation1 [shape = 'u32[144,128]{1,0:T(1,128)}', space=vmem, size = 0x12000, scoped, tag = 'internal scratch']
  #allocation2 [shape = 'f32[1,1]{1,0:T(1,128)S(1)}', space=vmem, size = 0x200, scoped, tag = 'scoped memory for lstm_model_forward.1']
  %s0 = inlined_call_operand.vmem [shape: f32[8,8,128], index: 0, kind: input, shape index: {}]
  %s1 = inlined_call_operand.hbm [shape: f32[2,256,512], index: 1, kind: input, shape index: {}]
  %s2 = inlined_call_operand.vmem [shape: f32[2,1,512], index: 2, kind: input, shape index: {}]
  %s3 = inlined_call_operand.vmem [shape: f32[128,1], index: 3, kind: input, shape index: {}]
  %s4 = inlined_call_operand.<no memory space> [shape: f32[1,1], index: 4, kind: input, shape index: {}]
  %s5 = inlined_call_operand.vmem [shape: f32[8,1], index: 5, kind: output, shape index: {}]
  %s6 = sld [smem:[#allocation0]]
  $region34: #{lstm_model_forward.1} parent=0
    _
  %s8 = ssub.s32 1, %s6
  %s9 = scalar_select 0, %s8, %s6
  %v10 = vstv %s4
  %11 = vst [vmem:[#allocation2] sm:$0x1] %v10
  $region1: #{lstm_model_forward.1} parent=0
    #allocation3 [shape = 'u8[1048576]{0}', space=vmem, size = 0x100000, scoped, tag = 'input window, operand 1, single buffered']
    #allocation4 [shape = 's32[1]{0}', space=sflag, size = 0x4, scoped, tag = 'scoped memory for lstm_model_forward.1']
    %12 = vsyncpa [#allocation4], 0
    // Predicated region
    $region2: #{lstm_model_forward.1} parent=1 // pred_check
      _
    $region3: #{lstm_model_forward.1} parent=1 // pred_check_branch
      %14 = sbr.rel (0) target = $region5
    $region4: #{lstm_model_forward.1} parent=1 // pred_region
      _
    $region5: #{lstm_model_forward.1} parent=1 // pred_fallthru
      _
    // Predicated region
    $region6: #{lstm_model_forward.1} parent=1 // pred_check
      _
    $region7: #{lstm_model_forward.1} parent=1 // pred_check_branch
      %16 = sbr.rel (0) target = $region9
    $region8: #{lstm_model_forward.1} parent=1 // pred_region
      %s18 = ssub.s32 32768, 32768
      %19 = vsyncadd [#allocation4], %s18
      %s20 = sshll.u32 [#allocation3], 4
      %s21 = int_to_ptr.vmem [resolvable:$true] %s20
      %26 = dma.hbm_to_vmem [thread:$0]  %s1, 32768, %s21, [#allocation4], 512, 512, 32
    $region9: #{lstm_model_forward.1} parent=1 // pred_fallthru
      _
    // Predicated region
    $region10: #{lstm_model_forward.1} parent=1 // pred_check
      _
    $region11: #{lstm_model_forward.1} parent=1 // pred_check_branch
      %28 = sbr.rel (0) target = $region13
    $region12: #{lstm_model_forward.1} parent=1 // pred_region
      _
    $region13: #{lstm_model_forward.1} parent=1 // pred_fallthru
      _
    // Predicated region
    $region14: #{lstm_model_forward.1} parent=1 // pred_check
      _
    $region15: #{lstm_model_forward.1} parent=1 // pred_check_branch
      %30 = sbr.rel (0) target = $region17
    $region16: #{lstm_model_forward.1} parent=1 // pred_region
      _
    $region17: #{lstm_model_forward.1} parent=1 // pred_fallthru
      _
    // Predicated region
    $region18: #{lstm_model_forward.1} parent=1 // pred_check
      _
    $region19: #{lstm_model_forward.1} parent=1 // pred_check_branch
      %32 = sbr.rel (0) target = $region21
    $region20: #{lstm_model_forward.1} parent=1 // pred_region
      _
    $region21: #{lstm_model_forward.1} parent=1 // pred_fallthru
      _
    // Predicated region
    $region22: #{lstm_model_forward.1} parent=1 // pred_check
      _
    $region23: #{lstm_model_forward.1} parent=1 // pred_check_branch
      %34 = sbr.rel (0) target = $region25
    $region24: #{lstm_model_forward.1} parent=1 // pred_region
      %35 = dma.done [#allocation4], 32768
    $region25: #{lstm_model_forward.1} parent=1 // pred_fallthru
      _
    %v36 = vld [vmem:[%s2] sm:$0xf]
    %v38 = vlaneseq
    %v39 = vshrl.u32 %v38, 7
    %v40 = vsub.s32 0, %v39
    %v41 = vrot.slane %v36, %v40
    %v42 = vlaneseq
    %v43 = vshrl.u32 %v42, 7
    %v44 = vsub.s32 1, %v43
    %v45 = vrot.slane %v36, %v44
    %v46 = vlaneseq
    %v47 = vshrl.u32 %v46, 7
    %v48 = vsub.s32 2, %v47
    %v49 = vrot.slane %v36, %v48
    %v50 = vlaneseq
    %v51 = vshrl.u32 %v50, 7
    %v52 = vsub.s32 3, %v51
    %v53 = vrot.slane %v36, %v52
    %s58 = scalar_lea.vmem %s2, 4
    %v59 = vld [vmem:[%s58] sm:$0xf]
    %v61 = vlaneseq
    %v62 = vshrl.u32 %v61, 7
    %v63 = vsub.s32 0, %v62
    %v64 = vrot.slane %v59, %v63
    %v65 = vlaneseq
    %v66 = vshrl.u32 %v65, 7
    %v67 = vsub.s32 1, %v66
    %v68 = vrot.slane %v59, %v67
    %v69 = vlaneseq
    %v70 = vshrl.u32 %v69, 7
    %v71 = vsub.s32 2, %v70
    %v72 = vrot.slane %v59, %v71
    %v73 = vlaneseq
    %v74 = vshrl.u32 %v73, 7
    %v75 = vsub.s32 3, %v74
    %v76 = vrot.slane %v59, %v75
    %v81 = vld [vmem:[%s0] sm:$0xff]
    %v82 = vld [vmem:[#allocation3] sm:$0xff]
    %v83 = vld [vmem:[#allocation3 + $0x8] sm:$0xff]
    %v84 = vld [vmem:[#allocation3 + $0x10] sm:$0xff]
    %v85 = vld [vmem:[#allocation3 + $0x18] sm:$0xff]
    %v86 = vld [vmem:[#allocation3 + $0x20] sm:$0xff]
    %v87 = vld [vmem:[#allocation3 + $0x28] sm:$0xff]
    %v88 = vld [vmem:[#allocation3 + $0x30] sm:$0xff]
    %v89 = vld [vmem:[#allocation3 + $0x38] sm:$0xff]
    %v90 = vld [vmem:[#allocation3 + $0x40] sm:$0xff]
    %v91 = vld [vmem:[#allocation3 + $0x48] sm:$0xff]
    %v92 = vld [vmem:[#allocation3 + $0x50] sm:$0xff]
    %v93 = vld [vmem:[#allocation3 + $0x58] sm:$0xff]
    %v94 = vld [vmem:[#allocation3 + $0x60] sm:$0xff]
    %v95 = vld [vmem:[#allocation3 + $0x68] sm:$0xff]
    %v96 = vld [vmem:[#allocation3 + $0x70] sm:$0xff]
    %v97 = vld [vmem:[#allocation3 + $0x78] sm:$0xff]
    %v98 = vld [vmem:[#allocation3 + $0x80] sm:$0xff]
    %v99 = vld [vmem:[#allocation3 + $0x88] sm:$0xff]
    %v100 = vld [vmem:[#allocation3 + $0x90] sm:$0xff]
    %v101 = vld [vmem:[#allocation3 + $0x98] sm:$0xff]
    %v102 = vld [vmem:[#allocation3 + $0xa0] sm:$0xff]
    %v103 = vld [vmem:[#allocation3 + $0xa8] sm:$0xff]
    %v104 = vld [vmem:[#allocation3 + $0xb0] sm:$0xff]
    %v105 = vld [vmem:[#allocation3 + $0xb8] sm:$0xff]
    %v106 = vld [vmem:[#allocation3 + $0xc0] sm:$0xff]
    %v107 = vld [vmem:[#allocation3 + $0xc8] sm:$0xff]
    %v108 = vld [vmem:[#allocation3 + $0xd0] sm:$0xff]
    %v109 = vld [vmem:[#allocation3 + $0xd8] sm:$0xff]
    %v110 = vld [vmem:[#allocation3 + $0xe0] sm:$0xff]
    %v111 = vld [vmem:[#allocation3 + $0xe8] sm:$0xff]
    %v112 = vld [vmem:[#allocation3 + $0xf0] sm:$0xff]
    %v113 = vld [vmem:[#allocation3 + $0xf8] sm:$0xff]
    %v114 = vld [vmem:[#allocation3 + $0x100] sm:$0xff]
    %v115 = vld [vmem:[#allocation3 + $0x108] sm:$0xff]
    %v116 = vld [vmem:[#allocation3 + $0x110] sm:$0xff]
    %v117 = vld [vmem:[#allocation3 + $0x118] sm:$0xff]
    %v118 = vld [vmem:[#allocation3 + $0x120] sm:$0xff]
    %v119 = vld [vmem:[#allocation3 + $0x128] sm:$0xff]
    %v120 = vld [vmem:[#allocation3 + $0x130] sm:$0xff]
    %v121 = vld [vmem:[#allocation3 + $0x138] sm:$0xff]
    %v122 = vld [vmem:[#allocation3 + $0x140] sm:$0xff]
    %v123 = vld [vmem:[#allocation3 + $0x148] sm:$0xff]
    %v124 = vld [vmem:[#allocation3 + $0x150] sm:$0xff]
    %v125 = vld [vmem:[#allocation3 + $0x158] sm:$0xff]
    %v126 = vld [vmem:[#allocation3 + $0x160] sm:$0xff]
    %v127 = vld [vmem:[#allocation3 + $0x168] sm:$0xff]
    %v128 = vld [vmem:[#allocation3 + $0x170] sm:$0xff]
    %v129 = vld [vmem:[#allocation3 + $0x178] sm:$0xff]
    %v130 = vld [vmem:[#allocation3 + $0x180] sm:$0xff]
    %v131 = vld [vmem:[#allocation3 + $0x188] sm:$0xff]
    %v132 = vld [vmem:[#allocation3 + $0x190] sm:$0xff]
    %v133 = vld [vmem:[#allocation3 + $0x198] sm:$0xff]
    %v134 = vld [vmem:[#allocation3 + $0x1a0] sm:$0xff]
    %v135 = vld [vmem:[#allocation3 + $0x1a8] sm:$0xff]
    %v136 = vld [vmem:[#allocation3 + $0x1b0] sm:$0xff]
    %v137 = vld [vmem:[#allocation3 + $0x1b8] sm:$0xff]
    %v138 = vld [vmem:[#allocation3 + $0x1c0] sm:$0xff]
    %v139 = vld [vmem:[#allocation3 + $0x1c8] sm:$0xff]
    %v140 = vld [vmem:[#allocation3 + $0x1d0] sm:$0xff]
    %v141 = vld [vmem:[#allocation3 + $0x1d8] sm:$0xff]
    %v142 = vld [vmem:[#allocation3 + $0x1e0] sm:$0xff]
    %v143 = vld [vmem:[#allocation3 + $0x1e8] sm:$0xff]
    %v144 = vld [vmem:[#allocation3 + $0x1f0] sm:$0xff]
    %v145 = vld [vmem:[#allocation3 + $0x1f8] sm:$0xff]
    %v146 = vld [vmem:[#allocation3 + $0x200] sm:$0xff]
    %v147 = vld [vmem:[#allocation3 + $0x208] sm:$0xff]
    %v148 = vld [vmem:[#allocation3 + $0x210] sm:$0xff]
    %v149 = vld [vmem:[#allocation3 + $0x218] sm:$0xff]
    %v150 = vld [vmem:[#allocation3 + $0x220] sm:$0xff]
    %v151 = vld [vmem:[#allocation3 + $0x228] sm:$0xff]
    %v152 = vld [vmem:[#allocation3 + $0x230] sm:$0xff]
    %v153 = vld [vmem:[#allocation3 + $0x238] sm:$0xff]
    %v154 = vld [vmem:[#allocation3 + $0x240] sm:$0xff]
    %v155 = vld [vmem:[#allocation3 + $0x248] sm:$0xff]
    %v156 = vld [vmem:[#allocation3 + $0x250] sm:$0xff]
    %v157 = vld [vmem:[#allocation3 + $0x258] sm:$0xff]
    %v158 = vld [vmem:[#allocation3 + $0x260] sm:$0xff]
    %v159 = vld [vmem:[#allocation3 + $0x268] sm:$0xff]
    %v160 = vld [vmem:[#allocation3 + $0x270] sm:$0xff]
    %v161 = vld [vmem:[#allocation3 + $0x278] sm:$0xff]
    %v162 = vld [vmem:[#allocation3 + $0x280] sm:$0xff]
    %v163 = vld [vmem:[#allocation3 + $0x288] sm:$0xff]
    %v164 = vld [vmem:[#allocation3 + $0x290] sm:$0xff]
    %v165 = vld [vmem:[#allocation3 + $0x298] sm:$0xff]
    %v166 = vld [vmem:[#allocation3 + $0x2a0] sm:$0xff]
    %v167 = vld [vmem:[#allocation3 + $0x2a8] sm:$0xff]
    %v168 = vld [vmem:[#allocation3 + $0x2b0] sm:$0xff]
    %v169 = vld [vmem:[#allocation3 + $0x2b8] sm:$0xff]
    %v170 = vld [vmem:[#allocation3 + $0x2c0] sm:$0xff]
    %v171 = vld [vmem:[#allocation3 + $0x2c8] sm:$0xff]
    %v172 = vld [vmem:[#allocation3 + $0x2d0] sm:$0xff]
    %v173 = vld [vmem:[#allocation3 + $0x2d8] sm:$0xff]
    %v174 = vld [vmem:[#allocation3 + $0x2e0] sm:$0xff]
    %v175 = vld [vmem:[#allocation3 + $0x2e8] sm:$0xff]
    %v176 = vld [vmem:[#allocation3 + $0x2f0] sm:$0xff]
    %v177 = vld [vmem:[#allocation3 + $0x2f8] sm:$0xff]
    %v178 = vld [vmem:[#allocation3 + $0x300] sm:$0xff]
    %v179 = vld [vmem:[#allocation3 + $0x308] sm:$0xff]
    %v180 = vld [vmem:[#allocation3 + $0x310] sm:$0xff]
    %v181 = vld [vmem:[#allocation3 + $0x318] sm:$0xff]
    %v182 = vld [vmem:[#allocation3 + $0x320] sm:$0xff]
    %v183 = vld [vmem:[#allocation3 + $0x328] sm:$0xff]
    %v184 = vld [vmem:[#allocation3 + $0x330] sm:$0xff]
    %v185 = vld [vmem:[#allocation3 + $0x338] sm:$0xff]
    %v186 = vld [vmem:[#allocation3 + $0x340] sm:$0xff]
    %v187 = vld [vmem:[#allocation3 + $0x348] sm:$0xff]
    %v188 = vld [vmem:[#allocation3 + $0x350] sm:$0xff]
    %v189 = vld [vmem:[#allocation3 + $0x358] sm:$0xff]
    %v190 = vld [vmem:[#allocation3 + $0x360] sm:$0xff]
    %v191 = vld [vmem:[#allocation3 + $0x368] sm:$0xff]
    %v192 = vld [vmem:[#allocation3 + $0x370] sm:$0xff]
    %v193 = vld [vmem:[#allocation3 + $0x378] sm:$0xff]
    %v194 = vld [vmem:[#allocation3 + $0x380] sm:$0xff]
    %v195 = vld [vmem:[#allocation3 + $0x388] sm:$0xff]
    %v196 = vld [vmem:[#allocation3 + $0x390] sm:$0xff]
    %v197 = vld [vmem:[#allocation3 + $0x398] sm:$0xff]
    %v198 = vld [vmem:[#allocation3 + $0x3a0] sm:$0xff]
    %v199 = vld [vmem:[#allocation3 + $0x3a8] sm:$0xff]
    %v200 = vld [vmem:[#allocation3 + $0x3b0] sm:$0xff]
    %v201 = vld [vmem:[#allocation3 + $0x3b8] sm:$0xff]
    %v202 = vld [vmem:[#allocation3 + $0x3c0] sm:$0xff]
    %v203 = vld [vmem:[#allocation3 + $0x3c8] sm:$0xff]
    %v204 = vld [vmem:[#allocation3 + $0x3d0] sm:$0xff]
    %v205 = vld [vmem:[#allocation3 + $0x3d8] sm:$0xff]
    %v206 = vld [vmem:[#allocation3 + $0x3e0] sm:$0xff]
    %v207 = vld [vmem:[#allocation3 + $0x3e8] sm:$0xff]
    %v208 = vld [vmem:[#allocation3 + $0x3f0] sm:$0xff]
    %v209 = vld [vmem:[#allocation3 + $0x3f8] sm:$0xff]
    %210 = vmatprep.subr.mxu0 %v83
    %211 = vmatpush1.msra.mxu0 %v82
    %212 = vmatprep.subr.mxu0 %v87
    %213 = vmatpush1.msra.mxu0 %v86
    %214 = vmatprep.subr.mxu0 %v91
    %215 = vmatpush1.msra.mxu0 %v90
    %216 = vmatprep.subr.mxu0 %v95
    %217 = vmatpush1.msra.mxu0 %v94
    %218 = vmatprep.subr.mxu0 %v99
    %219 = vmatpush1.msra.mxu0 %v98
    %220 = vmatprep.subr.mxu0 %v103
    %221 = vmatpush1.msra.mxu0 %v102
    %222 = vmatprep.subr.mxu0 %v107
    %223 = vmatpush1.msra.mxu0 %v106
    %224 = vmatprep.subr.mxu0 %v111
    %225 = vmatpush1.msra.mxu0 %v110
    %226 = vmatprep.subr.mxu0 %v115
    %227 = vmatpush1.msra.mxu0 %v114
    %228 = vmatprep.subr.mxu0 %v119
    %229 = vmatpush1.msra.mxu0 %v118
    %230 = vmatprep.subr.mxu0 %v123
    %231 = vmatpush1.msra.mxu0 %v122
    %232 = vmatprep.subr.mxu0 %v127
    %233 = vmatpush1.msra.mxu0 %v126
    %234 = vmatprep.subr.mxu0 %v131
    %235 = vmatpush1.msra.mxu0 %v130
    %236 = vmatprep.subr.mxu0 %v135
    %237 = vmatpush1.msra.mxu0 %v134
    %238 = vmatprep.subr.mxu0 %v139
    %239 = vmatpush1.msra.mxu0 %v138
    %240 = vmatprep.subr.mxu0 %v143
    %241 = vmatpush1.msra.mxu0 %v142
    %242 = vmatprep.subr.mxu0 %v147
    %243 = vmatpush1.msra.mxu0 %v146
    %244 = vmatprep.subr.mxu0 %v151
    %245 = vmatpush1.msra.mxu0 %v150
    %246 = vmatprep.subr.mxu0 %v155
    %247 = vmatpush1.msra.mxu0 %v154
    %248 = vmatprep.subr.mxu0 %v159
    %249 = vmatpush1.msra.mxu0 %v158
    %250 = vmatprep.subr.mxu0 %v163
    %251 = vmatpush1.msra.mxu0 %v162
    %252 = vmatprep.subr.mxu0 %v167
    %253 = vmatpush1.msra.mxu0 %v166
    %254 = vmatprep.subr.mxu0 %v171
    %255 = vmatpush1.msra.mxu0 %v170
    %256 = vmatprep.subr.mxu0 %v175
    %257 = vmatpush1.msra.mxu0 %v174
    %258 = vmatprep.subr.mxu0 %v179
    %259 = vmatpush1.msra.mxu0 %v178
    %260 = vmatprep.subr.mxu0 %v183
    %261 = vmatpush1.msra.mxu0 %v182
    %262 = vmatprep.subr.mxu0 %v187
    %263 = vmatpush1.msra.mxu0 %v186
    %264 = vmatprep.subr.mxu0 %v191
    %265 = vmatpush1.msra.mxu0 %v190
    %266 = vmatprep.subr.mxu0 %v195
    %267 = vmatpush1.msra.mxu0 %v194
    %268 = vmatprep.subr.mxu0 %v199
    %269 = vmatpush1.msra.mxu0 %v198
    %270 = vmatprep.subr.mxu0 %v203
    %271 = vmatpush1.msra.mxu0 %v202
    %272 = vmatprep.subr.mxu0 %v207
    %273 = vmatpush1.msra.mxu0 %v206
    %274 = vmatprep.mubr.f32.mxu0 0.0
    %275 = vmatmul.mubr.f32.gmra.mrb[0].mxu0 %v81
    %v276 = vpop.f32.mrb[0].mxu0
    %v277 = vadd.f32 %v41, %v276
    %v278 = vpop.f32.mrb[0].mxu0
    %v279 = vadd.f32 %v45, %v278
    %280 = vdwg.mxu0
    %281 = vmatprep.subr.mxu0 %v85
    %282 = vmatpush1.msra.mxu0 %v84
    %283 = vmatprep.subr.mxu0 %v89
    %284 = vmatpush1.msra.mxu0 %v88
    %285 = vmatprep.subr.mxu0 %v93
    %286 = vmatpush1.msra.mxu0 %v92
    %287 = vmatprep.subr.mxu0 %v97
    %288 = vmatpush1.msra.mxu0 %v96
    %289 = vmatprep.subr.mxu0 %v101
    %290 = vmatpush1.msra.mxu0 %v100
    %291 = vmatprep.subr.mxu0 %v105
    %292 = vmatpush1.msra.mxu0 %v104
    %293 = vmatprep.subr.mxu0 %v109
    %294 = vmatpush1.msra.mxu0 %v108
    %295 = vmatprep.subr.mxu0 %v113
    %296 = vmatpush1.msra.mxu0 %v112
    %297 = vmatprep.subr.mxu0 %v117
    %298 = vmatpush1.msra.mxu0 %v116
    %299 = vmatprep.subr.mxu0 %v121
    %300 = vmatpush1.msra.mxu0 %v120
    %301 = vmatprep.subr.mxu0 %v125
    %302 = vmatpush1.msra.mxu0 %v124
    %303 = vmatprep.subr.mxu0 %v129
    %304 = vmatpush1.msra.mxu0 %v128
    %305 = vmatprep.subr.mxu0 %v133
    %306 = vmatpush1.msra.mxu0 %v132
    %307 = vmatprep.subr.mxu0 %v137
    %308 = vmatpush1.msra.mxu0 %v136
    %309 = vmatprep.subr.mxu0 %v141
    %310 = vmatpush1.msra.mxu0 %v140
    %311 = vmatprep.subr.mxu0 %v145
    %312 = vmatpush1.msra.mxu0 %v144
    %313 = vmatprep.subr.mxu0 %v149
    %314 = vmatpush1.msra.mxu0 %v148
    %315 = vmatprep.subr.mxu0 %v153
    %316 = vmatpush1.msra.mxu0 %v152
    %317 = vmatprep.subr.mxu0 %v157
    %318 = vmatpush1.msra.mxu0 %v156
    %319 = vmatprep.subr.mxu0 %v161
    %320 = vmatpush1.msra.mxu0 %v160
    %321 = vmatprep.subr.mxu0 %v165
    %322 = vmatpush1.msra.mxu0 %v164
    %323 = vmatprep.subr.mxu0 %v169
    %324 = vmatpush1.msra.mxu0 %v168
    %325 = vmatprep.subr.mxu0 %v173
    %326 = vmatpush1.msra.mxu0 %v172
    %327 = vmatprep.subr.mxu0 %v177
    %328 = vmatpush1.msra.mxu0 %v176
    %329 = vmatprep.subr.mxu0 %v181
    %330 = vmatpush1.msra.mxu0 %v180
    %331 = vmatprep.subr.mxu0 %v185
    %332 = vmatpush1.msra.mxu0 %v184
    %333 = vmatprep.subr.mxu0 %v189
    %334 = vmatpush1.msra.mxu0 %v188
    %335 = vmatprep.subr.mxu0 %v193
    %336 = vmatpush1.msra.mxu0 %v192
    %337 = vmatprep.subr.mxu0 %v197
    %338 = vmatpush1.msra.mxu0 %v196
    %339 = vmatprep.subr.mxu0 %v201
    %340 = vmatpush1.msra.mxu0 %v200
    %341 = vmatprep.subr.mxu0 %v205
    %342 = vmatpush1.msra.mxu0 %v204
    %343 = vmatprep.subr.mxu0 %v209
    %344 = vmatpush1.msra.mxu0 %v208
    %345 = vmatprep.mubr.f32.mxu0 0.0
    %346 = vmatmul.mubr.f32.gmra.mrb[0].mxu0 %v81
    %v347 = vpop.f32.mrb[0].mxu0
    %v348 = vadd.f32 %v49, %v347
    %v349 = vpop.f32.mrb[0].mxu0
    %v350 = vadd.f32 %v53, %v349
    %351 = vdwg.mxu0
    %v352 = vxor.u32 %v277, 2147483648
    %v353 = vmul.f32 %v352, 1.442695
    %v354 = vpow.pop %v353
    %v355 = vadd.f32 %v354, 1.0
    %v356 = vrcp.pop %v355
    %v357 = vmul.f32 1.0, %v356
    %v358 = vxor.u32 %v279, 2147483648
    %v359 = vmul.f32 %v358, 1.442695
    %v360 = vpow.pop %v359
    %v361 = vadd.f32 %v360, 1.0
    %v362 = vrcp.pop %v361
    %v363 = vmul.f32 1.0, %v362
    %v364 = vtanh.pop %v348
    %v365 = vxor.u32 %v350, 2147483648
    %v366 = vmul.f32 %v365, 1.442695
    %v367 = vpow.pop %v366
    %v368 = vadd.f32 %v367, 1.0
    %v369 = vrcp.pop %v368
    %v370 = vmul.f32 1.0, %v369
    %v371 = vmul.f32 %v363, 0.0
    %v372 = vmul.f32 %v357, %v364
    %v373 = vadd.f32 %v371, %v372
    %v374 = vtanh.pop %v373
    %v375 = vmul.f32 %v370, %v374
    %s376 = scalar_lea.vmem [#allocation3], 1024
    %v377 = vld [vmem:[%s376] sm:$0xff]
    %v378 = vld [vmem:[%s376 + $0x8] sm:$0xff]
    %v379 = vld [vmem:[%s376 + $0x10] sm:$0xff]
    %v380 = vld [vmem:[%s376 + $0x18] sm:$0xff]
    %v381 = vld [vmem:[%s376 + $0x20] sm:$0xff]
    %v382 = vld [vmem:[%s376 + $0x28] sm:$0xff]
    %v383 = vld [vmem:[%s376 + $0x30] sm:$0xff]
    %v384 = vld [vmem:[%s376 + $0x38] sm:$0xff]
    %v385 = vld [vmem:[%s376 + $0x40] sm:$0xff]
    %v386 = vld [vmem:[%s376 + $0x48] sm:$0xff]
    %v387 = vld [vmem:[%s376 + $0x50] sm:$0xff]
    %v388 = vld [vmem:[%s376 + $0x58] sm:$0xff]
    %v389 = vld [vmem:[%s376 + $0x60] sm:$0xff]
    %v390 = vld [vmem:[%s376 + $0x68] sm:$0xff]
    %v391 = vld [vmem:[%s376 + $0x70] sm:$0xff]
    %v392 = vld [vmem:[%s376 + $0x78] sm:$0xff]
    %v393 = vld [vmem:[%s376 + $0x80] sm:$0xff]
    %v394 = vld [vmem:[%s376 + $0x88] sm:$0xff]
    %v395 = vld [vmem:[%s376 + $0x90] sm:$0xff]
    %v396 = vld [vmem:[%s376 + $0x98] sm:$0xff]
    %v397 = vld [vmem:[%s376 + $0xa0] sm:$0xff]
    %v398 = vld [vmem:[%s376 + $0xa8] sm:$0xff]
    %v399 = vld [vmem:[%s376 + $0xb0] sm:$0xff]
    %v400 = vld [vmem:[%s376 + $0xb8] sm:$0xff]
    %v401 = vld [vmem:[%s376 + $0xc0] sm:$0xff]
    %v402 = vld [vmem:[%s376 + $0xc8] sm:$0xff]
    %v403 = vld [vmem:[%s376 + $0xd0] sm:$0xff]
    %v404 = vld [vmem:[%s376 + $0xd8] sm:$0xff]
    %v405 = vld [vmem:[%s376 + $0xe0] sm:$0xff]
    %v406 = vld [vmem:[%s376 + $0xe8] sm:$0xff]
    %v407 = vld [vmem:[%s376 + $0xf0] sm:$0xff]
    %v408 = vld [vmem:[%s376 + $0xf8] sm:$0xff]
    %v409 = vld [vmem:[%s376 + $0x100] sm:$0xff]
    %v410 = vld [vmem:[%s376 + $0x108] sm:$0xff]
    %v411 = vld [vmem:[%s376 + $0x110] sm:$0xff]
    %v412 = vld [vmem:[%s376 + $0x118] sm:$0xff]
    %v413 = vld [vmem:[%s376 + $0x120] sm:$0xff]
    %v414 = vld [vmem:[%s376 + $0x128] sm:$0xff]
    %v415 = vld [vmem:[%s376 + $0x130] sm:$0xff]
    %v416 = vld [vmem:[%s376 + $0x138] sm:$0xff]
    %v417 = vld [vmem:[%s376 + $0x140] sm:$0xff]
    %v418 = vld [vmem:[%s376 + $0x148] sm:$0xff]
    %v419 = vld [vmem:[%s376 + $0x150] sm:$0xff]
    %v420 = vld [vmem:[%s376 + $0x158] sm:$0xff]
    %v421 = vld [vmem:[%s376 + $0x160] sm:$0xff]
    %v422 = vld [vmem:[%s376 + $0x168] sm:$0xff]
    %v423 = vld [vmem:[%s376 + $0x170] sm:$0xff]
    %v424 = vld [vmem:[%s376 + $0x178] sm:$0xff]
    %v425 = vld [vmem:[%s376 + $0x180] sm:$0xff]
    %v426 = vld [vmem:[%s376 + $0x188] sm:$0xff]
    %v427 = vld [vmem:[%s376 + $0x190] sm:$0xff]
    %v428 = vld [vmem:[%s376 + $0x198] sm:$0xff]
    %v429 = vld [vmem:[%s376 + $0x1a0] sm:$0xff]
    %v430 = vld [vmem:[%s376 + $0x1a8] sm:$0xff]
    %v431 = vld [vmem:[%s376 + $0x1b0] sm:$0xff]
    %v432 = vld [vmem:[%s376 + $0x1b8] sm:$0xff]
    %v433 = vld [vmem:[%s376 + $0x1c0] sm:$0xff]
    %v434 = vld [vmem:[%s376 + $0x1c8] sm:$0xff]
    %v435 = vld [vmem:[%s376 + $0x1d0] sm:$0xff]
    %v436 = vld [vmem:[%s376 + $0x1d8] sm:$0xff]
    %v437 = vld [vmem:[%s376 + $0x1e0] sm:$0xff]
    %v438 = vld [vmem:[%s376 + $0x1e8] sm:$0xff]
    %v439 = vld [vmem:[%s376 + $0x1f0] sm:$0xff]
    %v440 = vld [vmem:[%s376 + $0x1f8] sm:$0xff]
    %v441 = vld [vmem:[%s376 + $0x200] sm:$0xff]
    %v442 = vld [vmem:[%s376 + $0x208] sm:$0xff]
    %v443 = vld [vmem:[%s376 + $0x210] sm:$0xff]
    %v444 = vld [vmem:[%s376 + $0x218] sm:$0xff]
    %v445 = vld [vmem:[%s376 + $0x220] sm:$0xff]
    %v446 = vld [vmem:[%s376 + $0x228] sm:$0xff]
    %v447 = vld [vmem:[%s376 + $0x230] sm:$0xff]
    %v448 = vld [vmem:[%s376 + $0x238] sm:$0xff]
    %v449 = vld [vmem:[%s376 + $0x240] sm:$0xff]
    %v450 = vld [vmem:[%s376 + $0x248] sm:$0xff]
    %v451 = vld [vmem:[%s376 + $0x250] sm:$0xff]
    %v452 = vld [vmem:[%s376 + $0x258] sm:$0xff]
    %v453 = vld [vmem:[%s376 + $0x260] sm:$0xff]
    %v454 = vld [vmem:[%s376 + $0x268] sm:$0xff]
    %v455 = vld [vmem:[%s376 + $0x270] sm:$0xff]
    %v456 = vld [vmem:[%s376 + $0x278] sm:$0xff]
    %v457 = vld [vmem:[%s376 + $0x280] sm:$0xff]
    %v458 = vld [vmem:[%s376 + $0x288] sm:$0xff]
    %v459 = vld [vmem:[%s376 + $0x290] sm:$0xff]
    %v460 = vld [vmem:[%s376 + $0x298] sm:$0xff]
    %v461 = vld [vmem:[%s376 + $0x2a0] sm:$0xff]
    %v462 = vld [vmem:[%s376 + $0x2a8] sm:$0xff]
    %v463 = vld [vmem:[%s376 + $0x2b0] sm:$0xff]
    %v464 = vld [vmem:[%s376 + $0x2b8] sm:$0xff]
    %v465 = vld [vmem:[%s376 + $0x2c0] sm:$0xff]
    %v466 = vld [vmem:[%s376 + $0x2c8] sm:$0xff]
    %v467 = vld [vmem:[%s376 + $0x2d0] sm:$0xff]
    %v468 = vld [vmem:[%s376 + $0x2d8] sm:$0xff]
    %v469 = vld [vmem:[%s376 + $0x2e0] sm:$0xff]
    %v470 = vld [vmem:[%s376 + $0x2e8] sm:$0xff]
    %v471 = vld [vmem:[%s376 + $0x2f0] sm:$0xff]
    %v472 = vld [vmem:[%s376 + $0x2f8] sm:$0xff]
    %v473 = vld [vmem:[%s376 + $0x300] sm:$0xff]
    %v474 = vld [vmem:[%s376 + $0x308] sm:$0xff]
    %v475 = vld [vmem:[%s376 + $0x310] sm:$0xff]
    %v476 = vld [vmem:[%s376 + $0x318] sm:$0xff]
    %v477 = vld [vmem:[%s376 + $0x320] sm:$0xff]
    %v478 = vld [vmem:[%s376 + $0x328] sm:$0xff]
    %v479 = vld [vmem:[%s376 + $0x330] sm:$0xff]
    %v480 = vld [vmem:[%s376 + $0x338] sm:$0xff]
    %v481 = vld [vmem:[%s376 + $0x340] sm:$0xff]
    %v482 = vld [vmem:[%s376 + $0x348] sm:$0xff]
    %v483 = vld [vmem:[%s376 + $0x350] sm:$0xff]
    %v484 = vld [vmem:[%s376 + $0x358] sm:$0xff]
    %v485 = vld [vmem:[%s376 + $0x360] sm:$0xff]
    %v486 = vld [vmem:[%s376 + $0x368] sm:$0xff]
    %v487 = vld [vmem:[%s376 + $0x370] sm:$0xff]
    %v488 = vld [vmem:[%s376 + $0x378] sm:$0xff]
    %v489 = vld [vmem:[%s376 + $0x380] sm:$0xff]
    %v490 = vld [vmem:[%s376 + $0x388] sm:$0xff]
    %v491 = vld [vmem:[%s376 + $0x390] sm:$0xff]
    %v492 = vld [vmem:[%s376 + $0x398] sm:$0xff]
    %v493 = vld [vmem:[%s376 + $0x3a0] sm:$0xff]
    %v494 = vld [vmem:[%s376 + $0x3a8] sm:$0xff]
    %v495 = vld [vmem:[%s376 + $0x3b0] sm:$0xff]
    %v496 = vld [vmem:[%s376 + $0x3b8] sm:$0xff]
    %v497 = vld [vmem:[%s376 + $0x3c0] sm:$0xff]
    %v498 = vld [vmem:[%s376 + $0x3c8] sm:$0xff]
    %v499 = vld [vmem:[%s376 + $0x3d0] sm:$0xff]
    %v500 = vld [vmem:[%s376 + $0x3d8] sm:$0xff]
    %v501 = vld [vmem:[%s376 + $0x3e0] sm:$0xff]
    %v502 = vld [vmem:[%s376 + $0x3e8] sm:$0xff]
    %v503 = vld [vmem:[%s376 + $0x3f0] sm:$0xff]
    %v504 = vld [vmem:[%s376 + $0x3f8] sm:$0xff]
    %505 = vmatprep.subr.mxu0 %v378
    %506 = vmatpush1.msra.mxu0 %v377
    %507 = vmatprep.subr.mxu0 %v382
    %508 = vmatpush1.msra.mxu0 %v381
    %509 = vmatprep.subr.mxu0 %v386
    %510 = vmatpush1.msra.mxu0 %v385
    %511 = vmatprep.subr.mxu0 %v390
    %512 = vmatpush1.msra.mxu0 %v389
    %513 = vmatprep.subr.mxu0 %v394
    %514 = vmatpush1.msra.mxu0 %v393
    %515 = vmatprep.subr.mxu0 %v398
    %516 = vmatpush1.msra.mxu0 %v397
    %517 = vmatprep.subr.mxu0 %v402
    %518 = vmatpush1.msra.mxu0 %v401
    %519 = vmatprep.subr.mxu0 %v406
    %520 = vmatpush1.msra.mxu0 %v405
    %521 = vmatprep.subr.mxu0 %v410
    %522 = vmatpush1.msra.mxu0 %v409
    %523 = vmatprep.subr.mxu0 %v414
    %524 = vmatpush1.msra.mxu0 %v413
    %525 = vmatprep.subr.mxu0 %v418
    %526 = vmatpush1.msra.mxu0 %v417
    %527 = vmatprep.subr.mxu0 %v422
    %528 = vmatpush1.msra.mxu0 %v421
    %529 = vmatprep.subr.mxu0 %v426
    %530 = vmatpush1.msra.mxu0 %v425
    %531 = vmatprep.subr.mxu0 %v430
    %532 = vmatpush1.msra.mxu0 %v429
    %533 = vmatprep.subr.mxu0 %v434
    %534 = vmatpush1.msra.mxu0 %v433
    %535 = vmatprep.subr.mxu0 %v438
    %536 = vmatpush1.msra.mxu0 %v437
    %537 = vmatprep.subr.mxu0 %v442
    %538 = vmatpush1.msra.mxu0 %v441
    %539 = vmatprep.subr.mxu0 %v446
    %540 = vmatpush1.msra.mxu0 %v445
    %541 = vmatprep.subr.mxu0 %v450
    %542 = vmatpush1.msra.mxu0 %v449
    %543 = vmatprep.subr.mxu0 %v454
    %544 = vmatpush1.msra.mxu0 %v453
    %545 = vmatprep.subr.mxu0 %v458
    %546 = vmatpush1.msra.mxu0 %v457
    %547 = vmatprep.subr.mxu0 %v462
    %548 = vmatpush1.msra.mxu0 %v461
    %549 = vmatprep.subr.mxu0 %v466
    %550 = vmatpush1.msra.mxu0 %v465
    %551 = vmatprep.subr.mxu0 %v470
    %552 = vmatpush1.msra.mxu0 %v469
    %553 = vmatprep.subr.mxu0 %v474
    %554 = vmatpush1.msra.mxu0 %v473
    %555 = vmatprep.subr.mxu0 %v478
    %556 = vmatpush1.msra.mxu0 %v477
    %557 = vmatprep.subr.mxu0 %v482
    %558 = vmatpush1.msra.mxu0 %v481
    %559 = vmatprep.subr.mxu0 %v486
    %560 = vmatpush1.msra.mxu0 %v485
    %561 = vmatprep.subr.mxu0 %v490
    %562 = vmatpush1.msra.mxu0 %v489
    %563 = vmatprep.subr.mxu0 %v494
    %564 = vmatpush1.msra.mxu0 %v493
    %565 = vmatprep.subr.mxu0 %v498
    %566 = vmatpush1.msra.mxu0 %v497
    %567 = vmatprep.subr.mxu0 %v502
    %568 = vmatpush1.msra.mxu0 %v501
    %569 = vmatprep.mubr.f32.mxu0 0.0
    %570 = vmatmul.mubr.f32.gmra.mrb[0].mxu0 %v375
    %v571 = vpop.f32.mrb[0].mxu0
    %v572 = vadd.f32 %v64, %v571
    %v573 = vpop.f32.mrb[0].mxu0
    %v574 = vadd.f32 %v68, %v573
    %575 = vdwg.mxu0
    %576 = vmatprep.subr.mxu0 %v380
    %577 = vmatpush1.msra.mxu0 %v379
    %578 = vmatprep.subr.mxu0 %v384
    %579 = vmatpush1.msra.mxu0 %v383
    %580 = vmatprep.subr.mxu0 %v388
    %581 = vmatpush1.msra.mxu0 %v387
    %582 = vmatprep.subr.mxu0 %v392
    %583 = vmatpush1.msra.mxu0 %v391
    %584 = vmatprep.subr.mxu0 %v396
    %585 = vmatpush1.msra.mxu0 %v395
    %586 = vmatprep.subr.mxu0 %v400
    %587 = vmatpush1.msra.mxu0 %v399
    %588 = vmatprep.subr.mxu0 %v404
    %589 = vmatpush1.msra.mxu0 %v403
    %590 = vmatprep.subr.mxu0 %v408
    %591 = vmatpush1.msra.mxu0 %v407
    %592 = vmatprep.subr.mxu0 %v412
    %593 = vmatpush1.msra.mxu0 %v411
    %594 = vmatprep.subr.mxu0 %v416
    %595 = vmatpush1.msra.mxu0 %v415
    %596 = vmatprep.subr.mxu0 %v420
    %597 = vmatpush1.msra.mxu0 %v419
    %598 = vmatprep.subr.mxu0 %v424
    %599 = vmatpush1.msra.mxu0 %v423
    %600 = vmatprep.subr.mxu0 %v428
    %601 = vmatpush1.msra.mxu0 %v427
    %602 = vmatprep.subr.mxu0 %v432
    %603 = vmatpush1.msra.mxu0 %v431
    %604 = vmatprep.subr.mxu0 %v436
    %605 = vmatpush1.msra.mxu0 %v435
    %606 = vmatprep.subr.mxu0 %v440
    %607 = vmatpush1.msra.mxu0 %v439
    %608 = vmatprep.subr.mxu0 %v444
    %609 = vmatpush1.msra.mxu0 %v443
    %610 = vmatprep.subr.mxu0 %v448
    %611 = vmatpush1.msra.mxu0 %v447
    %612 = vmatprep.subr.mxu0 %v452
    %613 = vmatpush1.msra.mxu0 %v451
    %614 = vmatprep.subr.mxu0 %v456
    %615 = vmatpush1.msra.mxu0 %v455
    %616 = vmatprep.subr.mxu0 %v460
    %617 = vmatpush1.msra.mxu0 %v459
    %618 = vmatprep.subr.mxu0 %v464
    %619 = vmatpush1.msra.mxu0 %v463
    %620 = vmatprep.subr.mxu0 %v468
    %621 = vmatpush1.msra.mxu0 %v467
    %622 = vmatprep.subr.mxu0 %v472
    %623 = vmatpush1.msra.mxu0 %v471
    %624 = vmatprep.subr.mxu0 %v476
    %625 = vmatpush1.msra.mxu0 %v475
    %626 = vmatprep.subr.mxu0 %v480
    %627 = vmatpush1.msra.mxu0 %v479
    %628 = vmatprep.subr.mxu0 %v484
    %629 = vmatpush1.msra.mxu0 %v483
    %630 = vmatprep.subr.mxu0 %v488
    %631 = vmatpush1.msra.mxu0 %v487
    %632 = vmatprep.subr.mxu0 %v492
    %633 = vmatpush1.msra.mxu0 %v491
    %634 = vmatprep.subr.mxu0 %v496
    %635 = vmatpush1.msra.mxu0 %v495
    %636 = vmatprep.subr.mxu0 %v500
    %637 = vmatpush1.msra.mxu0 %v499
    %638 = vmatprep.subr.mxu0 %v504
    %639 = vmatpush1.msra.mxu0 %v503
    %640 = vmatprep.mubr.f32.mxu0 0.0
    %641 = vmatmul.mubr.f32.gmra.mrb[0].mxu0 %v375
    %v642 = vpop.f32.mrb[0].mxu0
    %v643 = vadd.f32 %v72, %v642
    %v644 = vpop.f32.mrb[0].mxu0
    %v645 = vadd.f32 %v76, %v644
    %646 = vdwg.mxu0
    %v647 = vxor.u32 %v572, 2147483648
    %v648 = vmul.f32 %v647, 1.442695
    %v649 = vpow.pop %v648
    %v650 = vadd.f32 %v649, 1.0
    %v651 = vrcp.pop %v650
    %v652 = vmul.f32 1.0, %v651
    %v653 = vxor.u32 %v574, 2147483648
    %v654 = vmul.f32 %v653, 1.442695
    %v655 = vpow.pop %v654
    %v656 = vadd.f32 %v655, 1.0
    %v657 = vrcp.pop %v656
    %v658 = vmul.f32 1.0, %v657
    %v659 = vtanh.pop %v643
    %v660 = vxor.u32 %v645, 2147483648
    %v661 = vmul.f32 %v660, 1.442695
    %v662 = vpow.pop %v661
    %v663 = vadd.f32 %v662, 1.0
    %v664 = vrcp.pop %v663
    %v665 = vmul.f32 1.0, %v664
    %v666 = vmul.f32 %v658, 0.0
    %v667 = vmul.f32 %v652, %v659
    %v668 = vadd.f32 %v666, %v667
    %v669 = vtanh.pop %v668
    %v670 = vmul.f32 %v665, %v669
    %s671 = scalar_lea.vmem %s0, 8
    %v672 = vld [vmem:[%s671] sm:$0xff]
    %673 = vmatprep.subr.mxu0 %v83
    %674 = vmatpush1.msra.mxu0 %v82
    %675 = vmatprep.subr.mxu0 %v87
    %676 = vmatpush1.msra.mxu0 %v86
    %677 = vmatprep.subr.mxu0 %v91
    %678 = vmatpush1.msra.mxu0 %v90
    %679 = vmatprep.subr.mxu0 %v95
    %680 = vmatpush1.msra.mxu0 %v94
    %681 = vmatprep.subr.mxu0 %v99
    %682 = vmatpush1.msra.mxu0 %v98
    %683 = vmatprep.subr.mxu0 %v103
    %684 = vmatpush1.msra.mxu0 %v102
    %685 = vmatprep.subr.mxu0 %v107
    %686 = vmatpush1.msra.mxu0 %v106
    %687 = vmatprep.subr.mxu0 %v111
    %688 = vmatpush1.msra.mxu0 %v110
    %689 = vmatprep.subr.mxu0 %v115
    %690 = vmatpush1.msra.mxu0 %v114
    %691 = vmatprep.subr.mxu0 %v119
    %692 = vmatpush1.msra.mxu0 %v118
    %693 = vmatprep.subr.mxu0 %v123
    %694 = vmatpush1.msra.mxu0 %v122
    %695 = vmatprep.subr.mxu0 %v127
    %696 = vmatpush1.msra.mxu0 %v126
    %697 = vmatprep.subr.mxu0 %v131
    %698 = vmatpush1.msra.mxu0 %v130
    %699 = vmatprep.subr.mxu0 %v135
    %700 = vmatpush1.msra.mxu0 %v134
    %701 = vmatprep.subr.mxu0 %v139
    %702 = vmatpush1.msra.mxu0 %v138
    %703 = vmatprep.subr.mxu0 %v143
    %704 = vmatpush1.msra.mxu0 %v142
    %705 = vmatprep.subr.mxu0 %v147
    %706 = vmatpush1.msra.mxu0 %v146
    %707 = vmatprep.subr.mxu0 %v151
    %708 = vmatpush1.msra.mxu0 %v150
    %709 = vmatprep.subr.mxu0 %v155
    %710 = vmatpush1.msra.mxu0 %v154
    %711 = vmatprep.subr.mxu0 %v159
    %712 = vmatpush1.msra.mxu0 %v158
    %713 = vmatprep.subr.mxu0 %v163
    %714 = vmatpush1.msra.mxu0 %v162
    %715 = vmatprep.subr.mxu0 %v167
    %716 = vmatpush1.msra.mxu0 %v166
    %717 = vmatprep.subr.mxu0 %v171
    %718 = vmatpush1.msra.mxu0 %v170
    %719 = vmatprep.subr.mxu0 %v175
    %720 = vmatpush1.msra.mxu0 %v174
    %721 = vmatprep.subr.mxu0 %v179
    %722 = vmatpush1.msra.mxu0 %v178
    %723 = vmatprep.subr.mxu0 %v183
    %724 = vmatpush1.msra.mxu0 %v182
    %725 = vmatprep.subr.mxu0 %v187
    %726 = vmatpush1.msra.mxu0 %v186
    %727 = vmatprep.subr.mxu0 %v191
    %728 = vmatpush1.msra.mxu0 %v190
    %729 = vmatprep.subr.mxu0 %v195
    %730 = vmatpush1.msra.mxu0 %v194
    %731 = vmatprep.subr.mxu0 %v199
    %732 = vmatpush1.msra.mxu0 %v198
    %733 = vmatprep.subr.mxu0 %v203
    %734 = vmatpush1.msra.mxu0 %v202
    %735 = vmatprep.subr.mxu0 %v207
    %736 = vmatpush1.msra.mxu0 %v206
    %737 = vmatprep.mubr.f32.mxu0 %v375
    %738 = vmatmul.mubr.f32.gmra.mrb[0].mxu0 %v672
    %v739 = vpop.f32.mrb[0].mxu0
    %v740 = vadd.f32 %v41, %v739
    %v741 = vpop.f32.mrb[0].mxu0
    %v742 = vadd.f32 %v45, %v741
    %743 = vdwg.mxu0
    %744 = vmatprep.subr.mxu0 %v85
    %745 = vmatpush1.msra.mxu0 %v84
    %746 = vmatprep.subr.mxu0 %v89
    %747 = vmatpush1.msra.mxu0 %v88
    %748 = vmatprep.subr.mxu0 %v93
    %749 = vmatpush1.msra.mxu0 %v92
    %750 = vmatprep.subr.mxu0 %v97
    %751 = vmatpush1.msra.mxu0 %v96
    %752 = vmatprep.subr.mxu0 %v101
    %753 = vmatpush1.msra.mxu0 %v100
    %754 = vmatprep.subr.mxu0 %v105
    %755 = vmatpush1.msra.mxu0 %v104
    %756 = vmatprep.subr.mxu0 %v109
    %757 = vmatpush1.msra.mxu0 %v108
    %758 = vmatprep.subr.mxu0 %v113
    %759 = vmatpush1.msra.mxu0 %v112
    %760 = vmatprep.subr.mxu0 %v117
    %761 = vmatpush1.msra.mxu0 %v116
    %762 = vmatprep.subr.mxu0 %v121
    %763 = vmatpush1.msra.mxu0 %v120
    %764 = vmatprep.subr.mxu0 %v125
    %765 = vmatpush1.msra.mxu0 %v124
    %766 = vmatprep.subr.mxu0 %v129
    %767 = vmatpush1.msra.mxu0 %v128
    %768 = vmatprep.subr.mxu0 %v133
    %769 = vmatpush1.msra.mxu0 %v132
    %770 = vmatprep.subr.mxu0 %v137
    %771 = vmatpush1.msra.mxu0 %v136
    %772 = vmatprep.subr.mxu0 %v141
    %773 = vmatpush1.msra.mxu0 %v140
    %774 = vmatprep.subr.mxu0 %v145
    %775 = vmatpush1.msra.mxu0 %v144
    %776 = vmatprep.subr.mxu0 %v149
    %777 = vmatpush1.msra.mxu0 %v148
    %778 = vmatprep.subr.mxu0 %v153
    %779 = vmatpush1.msra.mxu0 %v152
    %780 = vmatprep.subr.mxu0 %v157
    %781 = vmatpush1.msra.mxu0 %v156
    %782 = vmatprep.subr.mxu0 %v161
    %783 = vmatpush1.msra.mxu0 %v160
    %784 = vmatprep.subr.mxu0 %v165
    %785 = vmatpush1.msra.mxu0 %v164
    %786 = vmatprep.subr.mxu0 %v169
    %787 = vmatpush1.msra.mxu0 %v168
    %788 = vmatprep.subr.mxu0 %v173
    %789 = vmatpush1.msra.mxu0 %v172
    %790 = vmatprep.subr.mxu0 %v177
    %791 = vmatpush1.msra.mxu0 %v176
    %792 = vmatprep.subr.mxu0 %v181
    %793 = vmatpush1.msra.mxu0 %v180
    %794 = vmatprep.subr.mxu0 %v185
    %795 = vmatpush1.msra.mxu0 %v184
    %796 = vmatprep.subr.mxu0 %v189
    %797 = vmatpush1.msra.mxu0 %v188
    %798 = vmatprep.subr.mxu0 %v193
    %799 = vmatpush1.msra.mxu0 %v192
    %800 = vmatprep.subr.mxu0 %v197
    %801 = vmatpush1.msra.mxu0 %v196
    %802 = vmatprep.subr.mxu0 %v201
    %803 = vmatpush1.msra.mxu0 %v200
    %804 = vmatprep.subr.mxu0 %v205
    %805 = vmatpush1.msra.mxu0 %v204
    %806 = vmatprep.subr.mxu0 %v209
    %807 = vmatpush1.msra.mxu0 %v208
    %808 = vmatprep.mubr.f32.mxu0 %v375
    %809 = vmatmul.mubr.f32.gmra.mrb[0].mxu0 %v672
    %v810 = vpop.f32.mrb[0].mxu0
    %v811 = vadd.f32 %v49, %v810
    %v812 = vpop.f32.mrb[0].mxu0
    %v813 = vadd.f32 %v53, %v812
    %814 = vdwg.mxu0
    %v815 = vxor.u32 %v740, 2147483648
    %v816 = vmul.f32 %v815, 1.442695
    %v817 = vpow.pop %v816
    %v818 = vadd.f32 %v817, 1.0
    %v819 = vrcp.pop %v818
    %v820 = vmul.f32 1.0, %v819
    %v821 = vxor.u32 %v742, 2147483648
    %v822 = vmul.f32 %v821, 1.442695
    %v823 = vpow.pop %v822
    %v824 = vadd.f32 %v823, 1.0
    %v825 = vrcp.pop %v824
    %v826 = vmul.f32 1.0, %v825
    %v827 = vtanh.pop %v811
    %v828 = vxor.u32 %v813, 2147483648
    %v829 = vmul.f32 %v828, 1.442695
    %v830 = vpow.pop %v829
    %v831 = vadd.f32 %v830, 1.0
    %v832 = vrcp.pop %v831
    %v833 = vmul.f32 1.0, %v832
    %v834 = vmul.f32 %v826, %v373
    %v835 = vmul.f32 %v820, %v827
    %v836 = vadd.f32 %v834, %v835
    %v837 = vtanh.pop %v836
    %v838 = vmul.f32 %v833, %v837
    %839 = vmatprep.subr.mxu0 %v378
    %840 = vmatpush1.msra.mxu0 %v377
    %841 = vmatprep.subr.mxu0 %v382
    %842 = vmatpush1.msra.mxu0 %v381
    %843 = vmatprep.subr.mxu0 %v386
    %844 = vmatpush1.msra.mxu0 %v385
    %845 = vmatprep.subr.mxu0 %v390
    %846 = vmatpush1.msra.mxu0 %v389
    %847 = vmatprep.subr.mxu0 %v394
    %848 = vmatpush1.msra.mxu0 %v393
    %849 = vmatprep.subr.mxu0 %v398
    %850 = vmatpush1.msra.mxu0 %v397
    %851 = vmatprep.subr.mxu0 %v402
    %852 = vmatpush1.msra.mxu0 %v401
    %853 = vmatprep.subr.mxu0 %v406
    %854 = vmatpush1.msra.mxu0 %v405
    %855 = vmatprep.subr.mxu0 %v410
    %856 = vmatpush1.msra.mxu0 %v409
    %857 = vmatprep.subr.mxu0 %v414
    %858 = vmatpush1.msra.mxu0 %v413
    %859 = vmatprep.subr.mxu0 %v418
    %860 = vmatpush1.msra.mxu0 %v417
    %861 = vmatprep.subr.mxu0 %v422
    %862 = vmatpush1.msra.mxu0 %v421
    %863 = vmatprep.subr.mxu0 %v426
    %864 = vmatpush1.msra.mxu0 %v425
    %865 = vmatprep.subr.mxu0 %v430
    %866 = vmatpush1.msra.mxu0 %v429
    %867 = vmatprep.subr.mxu0 %v434
    %868 = vmatpush1.msra.mxu0 %v433
    %869 = vmatprep.subr.mxu0 %v438
    %870 = vmatpush1.msra.mxu0 %v437
    %871 = vmatprep.subr.mxu0 %v442
    %872 = vmatpush1.msra.mxu0 %v441
    %873 = vmatprep.subr.mxu0 %v446
    %874 = vmatpush1.msra.mxu0 %v445
    %875 = vmatprep.subr.mxu0 %v450
    %876 = vmatpush1.msra.mxu0 %v449
    %877 = vmatprep.subr.mxu0 %v454
    %878 = vmatpush1.msra.mxu0 %v453
    %879 = vmatprep.subr.mxu0 %v458
    %880 = vmatpush1.msra.mxu0 %v457
    %881 = vmatprep.subr.mxu0 %v462
    %882 = vmatpush1.msra.mxu0 %v461
    %883 = vmatprep.subr.mxu0 %v466
    %884 = vmatpush1.msra.mxu0 %v465
    %885 = vmatprep.subr.mxu0 %v470
    %886 = vmatpush1.msra.mxu0 %v469
    %887 = vmatprep.subr.mxu0 %v474
    %888 = vmatpush1.msra.mxu0 %v473
    %889 = vmatprep.subr.mxu0 %v478
    %890 = vmatpush1.msra.mxu0 %v477
    %891 = vmatprep.subr.mxu0 %v482
    %892 = vmatpush1.msra.mxu0 %v481
    %893 = vmatprep.subr.mxu0 %v486
    %894 = vmatpush1.msra.mxu0 %v485
    %895 = vmatprep.subr.mxu0 %v490
    %896 = vmatpush1.msra.mxu0 %v489
    %897 = vmatprep.subr.mxu0 %v494
    %898 = vmatpush1.msra.mxu0 %v493
    %899 = vmatprep.subr.mxu0 %v498
    %900 = vmatpush1.msra.mxu0 %v497
    %901 = vmatprep.subr.mxu0 %v502
    %902 = vmatpush1.msra.mxu0 %v501
    %903 = vmatprep.mubr.f32.mxu0 %v670
    %904 = vmatmul.mubr.f32.gmra.mrb[0].mxu0 %v838
    %v905 = vpop.f32.mrb[0].mxu0
    %v906 = vadd.f32 %v64, %v905
    %v907 = vpop.f32.mrb[0].mxu0
    %v908 = vadd.f32 %v68, %v907
    %909 = vdwg.mxu0
    %910 = vmatprep.subr.mxu0 %v380
    %911 = vmatpush1.msra.mxu0 %v379
    %912 = vmatprep.subr.mxu0 %v384
    %913 = vmatpush1.msra.mxu0 %v383
    %914 = vmatprep.subr.mxu0 %v388
    %915 = vmatpush1.msra.mxu0 %v387
    %916 = vmatprep.subr.mxu0 %v392
    %917 = vmatpush1.msra.mxu0 %v391
    %918 = vmatprep.subr.mxu0 %v396
    %919 = vmatpush1.msra.mxu0 %v395
    %920 = vmatprep.subr.mxu0 %v400
    %921 = vmatpush1.msra.mxu0 %v399
    %922 = vmatprep.subr.mxu0 %v404
    %923 = vmatpush1.msra.mxu0 %v403
    %924 = vmatprep.subr.mxu0 %v408
    %925 = vmatpush1.msra.mxu0 %v407
    %926 = vmatprep.subr.mxu0 %v412
    %927 = vmatpush1.msra.mxu0 %v411
    %928 = vmatprep.subr.mxu0 %v416
    %929 = vmatpush1.msra.mxu0 %v415
    %930 = vmatprep.subr.mxu0 %v420
    %931 = vmatpush1.msra.mxu0 %v419
    %932 = vmatprep.subr.mxu0 %v424
    %933 = vmatpush1.msra.mxu0 %v423
    %934 = vmatprep.subr.mxu0 %v428
    %935 = vmatpush1.msra.mxu0 %v427
    %936 = vmatprep.subr.mxu0 %v432
    %937 = vmatpush1.msra.mxu0 %v431
    %938 = vmatprep.subr.mxu0 %v436
    %939 = vmatpush1.msra.mxu0 %v435
    %940 = vmatprep.subr.mxu0 %v440
    %941 = vmatpush1.msra.mxu0 %v439
    %942 = vmatprep.subr.mxu0 %v444
    %943 = vmatpush1.msra.mxu0 %v443
    %944 = vmatprep.subr.mxu0 %v448
    %945 = vmatpush1.msra.mxu0 %v447
    %946 = vmatprep.subr.mxu0 %v452
    %947 = vmatpush1.msra.mxu0 %v451
    %948 = vmatprep.subr.mxu0 %v456
    %949 = vmatpush1.msra.mxu0 %v455
    %950 = vmatprep.subr.mxu0 %v460
    %951 = vmatpush1.msra.mxu0 %v459
    %952 = vmatprep.subr.mxu0 %v464
    %953 = vmatpush1.msra.mxu0 %v463
    %954 = vmatprep.subr.mxu0 %v468
    %955 = vmatpush1.msra.mxu0 %v467
    %956 = vmatprep.subr.mxu0 %v472
    %957 = vmatpush1.msra.mxu0 %v471
    %958 = vmatprep.subr.mxu0 %v476
    %959 = vmatpush1.msra.mxu0 %v475
    %960 = vmatprep.subr.mxu0 %v480
    %961 = vmatpush1.msra.mxu0 %v479
    %962 = vmatprep.subr.mxu0 %v484
    %963 = vmatpush1.msra.mxu0 %v483
    %964 = vmatprep.subr.mxu0 %v488
    %965 = vmatpush1.msra.mxu0 %v487
    %966 = vmatprep.subr.mxu0 %v492
    %967 = vmatpush1.msra.mxu0 %v491
    %968 = vmatprep.subr.mxu0 %v496
    %969 = vmatpush1.msra.mxu0 %v495
    %970 = vmatprep.subr.mxu0 %v500
    %971 = vmatpush1.msra.mxu0 %v499
    %972 = vmatprep.subr.mxu0 %v504
    %973 = vmatpush1.msra.mxu0 %v503
    %974 = vmatprep.mubr.f32.mxu0 %v670
    %975 = vmatmul.mubr.f32.gmra.mrb[0].mxu0 %v838
    %v976 = vpop.f32.mrb[0].mxu0
    %v977 = vadd.f32 %v72, %v976
    %v978 = vpop.f32.mrb[0].mxu0
    %v979 = vadd.f32 %v76, %v978
    %980 = vdwg.mxu0
    %v981 = vxor.u32 %v906, 2147483648
    %v982 = vmul.f32 %v981, 1.442695
    %v983 = vpow.pop %v982
    %v984 = vadd.f32 %v983, 1.0
    %v985 = vrcp.pop %v984
    %v986 = vmul.f32 1.0, %v985
    %v987 = vxor.u32 %v908, 2147483648
    %v988 = vmul.f32 %v987, 1.442695
    %v989 = vpow.pop %v988
    %v990 = vadd.f32 %v989, 1.0
    %v991 = vrcp.pop %v990
    %v992 = vmul.f32 1.0, %v991
    %v993 = vtanh.pop %v977
    %v994 = vxor.u32 %v979, 2147483648
    %v995 = vmul.f32 %v994, 1.442695
    %v996 = vpow.pop %v995
    %v997 = vadd.f32 %v996, 1.0
    %v998 = vrcp.pop %v997
    %v999 = vmul.f32 1.0, %v998
    %v1000 = vmul.f32 %v992, %v668
    %v1001 = vmul.f32 %v986, %v993
    %v1002 = vadd.f32 %v1000, %v1001
    %v1003 = vtanh.pop %v1002
    %v1004 = vmul.f32 %v999, %v1003
    %s1005 = scalar_lea.vmem %s0, 16
    %v1006 = vld [vmem:[%s1005] sm:$0xff]
    %1007 = vmatprep.subr.mxu0 %v83
    %1008 = vmatpush1.msra.mxu0 %v82
    %1009 = vmatprep.subr.mxu0 %v87
    %1010 = vmatpush1.msra.mxu0 %v86
    %1011 = vmatprep.subr.mxu0 %v91
    %1012 = vmatpush1.msra.mxu0 %v90
    %1013 = vmatprep.subr.mxu0 %v95
    %1014 = vmatpush1.msra.mxu0 %v94
    %1015 = vmatprep.subr.mxu0 %v99
    %1016 = vmatpush1.msra.mxu0 %v98
    %1017 = vmatprep.subr.mxu0 %v103
    %1018 = vmatpush1.msra.mxu0 %v102
    %1019 = vmatprep.subr.mxu0 %v107
    %1020 = vmatpush1.msra.mxu0 %v106
    %1021 = vmatprep.subr.mxu0 %v111
    %1022 = vmatpush1.msra.mxu0 %v110
    %1023 = vmatprep.subr.mxu0 %v115
    %1024 = vmatpush1.msra.mxu0 %v114
    %1025 = vmatprep.subr.mxu0 %v119
    %1026 = vmatpush1.msra.mxu0 %v118
    %1027 = vmatprep.subr.mxu0 %v123
    %1028 = vmatpush1.msra.mxu0 %v122
    %1029 = vmatprep.subr.mxu0 %v127
    %1030 = vmatpush1.msra.mxu0 %v126
    %1031 = vmatprep.subr.mxu0 %v131
    %1032 = vmatpush1.msra.mxu0 %v130
    %1033 = vmatprep.subr.mxu0 %v135
    %1034 = vmatpush1.msra.mxu0 %v134
    %1035 = vmatprep.subr.mxu0 %v139
    %1036 = vmatpush1.msra.mxu0 %v138
    %1037 = vmatprep.subr.mxu0 %v143
    %1038 = vmatpush1.msra.mxu0 %v142
    %1039 = vmatprep.subr.mxu0 %v147
    %1040 = vmatpush1.msra.mxu0 %v146
    %1041 = vmatprep.subr.mxu0 %v151
    %1042 = vmatpush1.msra.mxu0 %v150
    %1043 = vmatprep.subr.mxu0 %v155
    %1044 = vmatpush1.msra.mxu0 %v154
    %1045 = vmatprep.subr.mxu0 %v159
    %1046 = vmatpush1.msra.mxu0 %v158
    %1047 = vmatprep.subr.mxu0 %v163
    %1048 = vmatpush1.msra.mxu0 %v162
    %1049 = vmatprep.subr.mxu0 %v167
    %1050 = vmatpush1.msra.mxu0 %v166
    %1051 = vmatprep.subr.mxu0 %v171
    %1052 = vmatpush1.msra.mxu0 %v170
    %1053 = vmatprep.subr.mxu0 %v175
    %1054 = vmatpush1.msra.mxu0 %v174
    %1055 = vmatprep.subr.mxu0 %v179
    %1056 = vmatpush1.msra.mxu0 %v178
    %1057 = vmatprep.subr.mxu0 %v183
    %1058 = vmatpush1.msra.mxu0 %v182
    %1059 = vmatprep.subr.mxu0 %v187
    %1060 = vmatpush1.msra.mxu0 %v186
    %1061 = vmatprep.subr.mxu0 %v191
    %1062 = vmatpush1.msra.mxu0 %v190
    %1063 = vmatprep.subr.mxu0 %v195
    %1064 = vmatpush1.msra.mxu0 %v194
    %1065 = vmatprep.subr.mxu0 %v199
    %1066 = vmatpush1.msra.mxu0 %v198
    %1067 = vmatprep.subr.mxu0 %v203
    %1068 = vmatpush1.msra.mxu0 %v202
    %1069 = vmatprep.subr.mxu0 %v207
    %1070 = vmatpush1.msra.mxu0 %v206
    %1071 = vmatprep.mubr.f32.mxu0 %v838
    %1072 = vmatmul.mubr.f32.gmra.mrb[0].mxu0 %v1006
    %v1073 = vpop.f32.mrb[0].mxu0
    %v1074 = vadd.f32 %v41, %v1073
    %v1075 = vpop.f32.mrb[0].mxu0
    %v1076 = vadd.f32 %v45, %v1075
    %1077 = vdwg.mxu0
    %1078 = vmatprep.subr.mxu0 %v85
    %1079 = vmatpush1.msra.mxu0 %v84
    %1080 = vmatprep.subr.mxu0 %v89
    %1081 = vmatpush1.msra.mxu0 %v88
    %1082 = vmatprep.subr.mxu0 %v93
    %1083 = vmatpush1.msra.mxu0 %v92
    %1084 = vmatprep.subr.mxu0 %v97
    %1085 = vmatpush1.msra.mxu0 %v96
    %1086 = vmatprep.subr.mxu0 %v101
    %1087 = vmatpush1.msra.mxu0 %v100
    %1088 = vmatprep.subr.mxu0 %v105
    %1089 = vmatpush1.msra.mxu0 %v104
    %1090 = vmatprep.subr.mxu0 %v109
    %1091 = vmatpush1.msra.mxu0 %v108
    %1092 = vmatprep.subr.mxu0 %v113
    %1093 = vmatpush1.msra.mxu0 %v112
    %1094 = vmatprep.subr.mxu0 %v117
    %1095 = vmatpush1.msra.mxu0 %v116
    %1096 = vmatprep.subr.mxu0 %v121
    %1097 = vmatpush1.msra.mxu0 %v120
    %1098 = vmatprep.subr.mxu0 %v125
    %1099 = vmatpush1.msra.mxu0 %v124
    %1100 = vmatprep.subr.mxu0 %v129
    %1101 = vmatpush1.msra.mxu0 %v128
    %1102 = vmatprep.subr.mxu0 %v133
    %1103 = vmatpush1.msra.mxu0 %v132
    %1104 = vmatprep.subr.mxu0 %v137
    %1105 = vmatpush1.msra.mxu0 %v136
    %1106 = vmatprep.subr.mxu0 %v141
    %1107 = vmatpush1.msra.mxu0 %v140
    %1108 = vmatprep.subr.mxu0 %v145
    %1109 = vmatpush1.msra.mxu0 %v144
    %1110 = vmatprep.subr.mxu0 %v149
    %1111 = vmatpush1.msra.mxu0 %v148
    %1112 = vmatprep.subr.mxu0 %v153
    %1113 = vmatpush1.msra.mxu0 %v152
    %1114 = vmatprep.subr.mxu0 %v157
    %1115 = vmatpush1.msra.mxu0 %v156
    %1116 = vmatprep.subr.mxu0 %v161
    %1117 = vmatpush1.msra.mxu0 %v160
    %1118 = vmatprep.subr.mxu0 %v165
    %1119 = vmatpush1.msra.mxu0 %v164
    %1120 = vmatprep.subr.mxu0 %v169
    %1121 = vmatpush1.msra.mxu0 %v168
    %1122 = vmatprep.subr.mxu0 %v173
    %1123 = vmatpush1.msra.mxu0 %v172
    %1124 = vmatprep.subr.mxu0 %v177
    %1125 = vmatpush1.msra.mxu0 %v176
    %1126 = vmatprep.subr.mxu0 %v181
    %1127 = vmatpush1.msra.mxu0 %v180
    %1128 = vmatprep.subr.mxu0 %v185
    %1129 = vmatpush1.msra.mxu0 %v184
    %1130 = vmatprep.subr.mxu0 %v189
    %1131 = vmatpush1.msra.mxu0 %v188
    %1132 = vmatprep.subr.mxu0 %v193
    %1133 = vmatpush1.msra.mxu0 %v192
    %1134 = vmatprep.subr.mxu0 %v197
    %1135 = vmatpush1.msra.mxu0 %v196
    %1136 = vmatprep.subr.mxu0 %v201
    %1137 = vmatpush1.msra.mxu0 %v200
    %1138 = vmatprep.subr.mxu0 %v205
    %1139 = vmatpush1.msra.mxu0 %v204
    %1140 = vmatprep.subr.mxu0 %v209
    %1141 = vmatpush1.msra.mxu0 %v208
    %1142 = vmatprep.mubr.f32.mxu0 %v838
    %1143 = vmatmul.mubr.f32.gmra.mrb[0].mxu0 %v1006
    %v1144 = vpop.f32.mrb[0].mxu0
    %v1145 = vadd.f32 %v49, %v1144
    %v1146 = vpop.f32.mrb[0].mxu0
    %v1147 = vadd.f32 %v53, %v1146
    %1148 = vdwg.mxu0
    %v1149 = vxor.u32 %v1074, 2147483648
    %v1150 = vmul.f32 %v1149, 1.442695
    %v1151 = vpow.pop %v1150
    %v1152 = vadd.f32 %v1151, 1.0
    %v1153 = vrcp.pop %v1152
    %v1154 = vmul.f32 1.0, %v1153
    %v1155 = vxor.u32 %v1076, 2147483648
    %v1156 = vmul.f32 %v1155, 1.442695
    %v1157 = vpow.pop %v1156
    %v1158 = vadd.f32 %v1157, 1.0
    %v1159 = vrcp.pop %v1158
    %v1160 = vmul.f32 1.0, %v1159
    %v1161 = vtanh.pop %v1145
    %v1162 = vxor.u32 %v1147, 2147483648
    %v1163 = vmul.f32 %v1162, 1.442695
    %v1164 = vpow.pop %v1163
    %v1165 = vadd.f32 %v1164, 1.0
    %v1166 = vrcp.pop %v1165
    %v1167 = vmul.f32 1.0, %v1166
    %v1168 = vmul.f32 %v1160, %v836
    %v1169 = vmul.f32 %v1154, %v1161
    %v1170 = vadd.f32 %v1168, %v1169
    %v1171 = vtanh.pop %v1170
    %v1172 = vmul.f32 %v1167, %v1171
    %1173 = vmatprep.subr.mxu0 %v378
    %1174 = vmatpush1.msra.mxu0 %v377
    %1175 = vmatprep.subr.mxu0 %v382
    %1176 = vmatpush1.msra.mxu0 %v381
    %1177 = vmatprep.subr.mxu0 %v386
    %1178 = vmatpush1.msra.mxu0 %v385
    %1179 = vmatprep.subr.mxu0 %v390
    %1180 = vmatpush1.msra.mxu0 %v389
    %1181 = vmatprep.subr.mxu0 %v394
    %1182 = vmatpush1.msra.mxu0 %v393
    %1183 = vmatprep.subr.mxu0 %v398
    %1184 = vmatpush1.msra.mxu0 %v397
    %1185 = vmatprep.subr.mxu0 %v402
    %1186 = vmatpush1.msra.mxu0 %v401
    %1187 = vmatprep.subr.mxu0 %v406
    %1188 = vmatpush1.msra.mxu0 %v405
    %1189 = vmatprep.subr.mxu0 %v410
    %1190 = vmatpush1.msra.mxu0 %v409
    %1191 = vmatprep.subr.mxu0 %v414
    %1192 = vmatpush1.msra.mxu0 %v413
    %1193 = vmatprep.subr.mxu0 %v418
    %1194 = vmatpush1.msra.mxu0 %v417
    %1195 = vmatprep.subr.mxu0 %v422
    %1196 = vmatpush1.msra.mxu0 %v421
    %1197 = vmatprep.subr.mxu0 %v426
    %1198 = vmatpush1.msra.mxu0 %v425
    %1199 = vmatprep.subr.mxu0 %v430
    %1200 = vmatpush1.msra.mxu0 %v429
    %1201 = vmatprep.subr.mxu0 %v434
    %1202 = vmatpush1.msra.mxu0 %v433
    %1203 = vmatprep.subr.mxu0 %v438
    %1204 = vmatpush1.msra.mxu0 %v437
    %1205 = vmatprep.subr.mxu0 %v442
    %1206 = vmatpush1.msra.mxu0 %v441
    %1207 = vmatprep.subr.mxu0 %v446
    %1208 = vmatpush1.msra.mxu0 %v445
    %1209 = vmatprep.subr.mxu0 %v450
    %1210 = vmatpush1.msra.mxu0 %v449
    %1211 = vmatprep.subr.mxu0 %v454
    %1212 = vmatpush1.msra.mxu0 %v453
    %1213 = vmatprep.subr.mxu0 %v458
    %1214 = vmatpush1.msra.mxu0 %v457
    %1215 = vmatprep.subr.mxu0 %v462
    %1216 = vmatpush1.msra.mxu0 %v461
    %1217 = vmatprep.subr.mxu0 %v466
    %1218 = vmatpush1.msra.mxu0 %v465
    %1219 = vmatprep.subr.mxu0 %v470
    %1220 = vmatpush1.msra.mxu0 %v469
    %1221 = vmatprep.subr.mxu0 %v474
    %1222 = vmatpush1.msra.mxu0 %v473
    %1223 = vmatprep.subr.mxu0 %v478
    %1224 = vmatpush1.msra.mxu0 %v477
    %1225 = vmatprep.subr.mxu0 %v482
    %1226 = vmatpush1.msra.mxu0 %v481
    %1227 = vmatprep.subr.mxu0 %v486
    %1228 = vmatpush1.msra.mxu0 %v485
    %1229 = vmatprep.subr.mxu0 %v490
    %1230 = vmatpush1.msra.mxu0 %v489
    %1231 = vmatprep.subr.mxu0 %v494
    %1232 = vmatpush1.msra.mxu0 %v493
    %1233 = vmatprep.subr.mxu0 %v498
    %1234 = vmatpush1.msra.mxu0 %v497
    %1235 = vmatprep.subr.mxu0 %v502
    %1236 = vmatpush1.msra.mxu0 %v501
    %1237 = vmatprep.mubr.f32.mxu0 %v1004
    %1238 = vmatmul.mubr.f32.gmra.mrb[0].mxu0 %v1172
    %v1239 = vpop.f32.mrb[0].mxu0
    %v1240 = vadd.f32 %v64, %v1239
    %v1241 = vpop.f32.mrb[0].mxu0
    %v1242 = vadd.f32 %v68, %v1241
    %1243 = vdwg.mxu0
    %1244 = vmatprep.subr.mxu0 %v380
    %1245 = vmatpush1.msra.mxu0 %v379
    %1246 = vmatprep.subr.mxu0 %v384
    %1247 = vmatpush1.msra.mxu0 %v383
    %1248 = vmatprep.subr.mxu0 %v388
    %1249 = vmatpush1.msra.mxu0 %v387
    %1250 = vmatprep.subr.mxu0 %v392
    %1251 = vmatpush1.msra.mxu0 %v391
    %1252 = vmatprep.subr.mxu0 %v396
    %1253 = vmatpush1.msra.mxu0 %v395
    %1254 = vmatprep.subr.mxu0 %v400
    %1255 = vmatpush1.msra.mxu0 %v399
    %1256 = vmatprep.subr.mxu0 %v404
    %1257 = vmatpush1.msra.mxu0 %v403
    %1258 = vmatprep.subr.mxu0 %v408
    %1259 = vmatpush1.msra.mxu0 %v407
    %1260 = vmatprep.subr.mxu0 %v412
    %1261 = vmatpush1.msra.mxu0 %v411
    %1262 = vmatprep.subr.mxu0 %v416
    %1263 = vmatpush1.msra.mxu0 %v415
    %1264 = vmatprep.subr.mxu0 %v420
    %1265 = vmatpush1.msra.mxu0 %v419
    %1266 = vmatprep.subr.mxu0 %v424
    %1267 = vmatpush1.msra.mxu0 %v423
    %1268 = vmatprep.subr.mxu0 %v428
    %1269 = vmatpush1.msra.mxu0 %v427
    %1270 = vmatprep.subr.mxu0 %v432
    %1271 = vmatpush1.msra.mxu0 %v431
    %1272 = vmatprep.subr.mxu0 %v436
    %1273 = vmatpush1.msra.mxu0 %v435
    %1274 = vmatprep.subr.mxu0 %v440
    %1275 = vmatpush1.msra.mxu0 %v439
    %1276 = vmatprep.subr.mxu0 %v444
    %1277 = vmatpush1.msra.mxu0 %v443
    %1278 = vmatprep.subr.mxu0 %v448
    %1279 = vmatpush1.msra.mxu0 %v447
    %1280 = vmatprep.subr.mxu0 %v452
    %1281 = vmatpush1.msra.mxu0 %v451
    %1282 = vmatprep.subr.mxu0 %v456
    %1283 = vmatpush1.msra.mxu0 %v455
    %1284 = vmatprep.subr.mxu0 %v460
    %1285 = vmatpush1.msra.mxu0 %v459
    %1286 = vmatprep.subr.mxu0 %v464
    %1287 = vmatpush1.msra.mxu0 %v463
    %1288 = vmatprep.subr.mxu0 %v468
    %1289 = vmatpush1.msra.mxu0 %v467
    %1290 = vmatprep.subr.mxu0 %v472
    %1291 = vmatpush1.msra.mxu0 %v471
    %1292 = vmatprep.subr.mxu0 %v476
    %1293 = vmatpush1.msra.mxu0 %v475
    %1294 = vmatprep.subr.mxu0 %v480
    %1295 = vmatpush1.msra.mxu0 %v479
    %1296 = vmatprep.subr.mxu0 %v484
    %1297 = vmatpush1.msra.mxu0 %v483
    %1298 = vmatprep.subr.mxu0 %v488
    %1299 = vmatpush1.msra.mxu0 %v487
    %1300 = vmatprep.subr.mxu0 %v492
    %1301 = vmatpush1.msra.mxu0 %v491
    %1302 = vmatprep.subr.mxu0 %v496
    %1303 = vmatpush1.msra.mxu0 %v495
    %1304 = vmatprep.subr.mxu0 %v500
    %1305 = vmatpush1.msra.mxu0 %v499
    %1306 = vmatprep.subr.mxu0 %v504
    %1307 = vmatpush1.msra.mxu0 %v503
    %1308 = vmatprep.mubr.f32.mxu0 %v1004
    %1309 = vmatmul.mubr.f32.gmra.mrb[0].mxu0 %v1172
    %v1310 = vpop.f32.mrb[0].mxu0
    %v1311 = vadd.f32 %v72, %v1310
    %v1312 = vpop.f32.mrb[0].mxu0
    %v1313 = vadd.f32 %v76, %v1312
    %1314 = vdwg.mxu0
    %v1315 = vxor.u32 %v1240, 2147483648
    %v1316 = vmul.f32 %v1315, 1.442695
    %v1317 = vpow.pop %v1316
    %v1318 = vadd.f32 %v1317, 1.0
    %v1319 = vrcp.pop %v1318
    %v1320 = vmul.f32 1.0, %v1319
    %v1321 = vxor.u32 %v1242, 2147483648
    %v1322 = vmul.f32 %v1321, 1.442695
    %v1323 = vpow.pop %v1322
    %v1324 = vadd.f32 %v1323, 1.0
    %v1325 = vrcp.pop %v1324
    %v1326 = vmul.f32 1.0, %v1325
    %v1327 = vtanh.pop %v1311
    %v1328 = vxor.u32 %v1313, 2147483648
    %v1329 = vmul.f32 %v1328, 1.442695
    %v1330 = vpow.pop %v1329
    %v1331 = vadd.f32 %v1330, 1.0
    %v1332 = vrcp.pop %v1331
    %v1333 = vmul.f32 1.0, %v1332
    %v1334 = vmul.f32 %v1326, %v1002
    %v1335 = vmul.f32 %v1320, %v1327
    %v1336 = vadd.f32 %v1334, %v1335
    %v1337 = vtanh.pop %v1336
    %v1338 = vmul.f32 %v1333, %v1337
    %s1339 = scalar_lea.vmem %s0, 24
    %v1340 = vld [vmem:[%s1339] sm:$0xff]
    %1341 = vmatprep.subr.mxu0 %v83
    %1342 = vmatpush1.msra.mxu0 %v82
    %1343 = vmatprep.subr.mxu0 %v87
    %1344 = vmatpush1.msra.mxu0 %v86
    %1345 = vmatprep.subr.mxu0 %v91
    %1346 = vmatpush1.msra.mxu0 %v90
    %1347 = vmatprep.subr.mxu0 %v95
    %1348 = vmatpush1.msra.mxu0 %v94
    %1349 = vmatprep.subr.mxu0 %v99
    %1350 = vmatpush1.msra.mxu0 %v98
    %1351 = vmatprep.subr.mxu0 %v103
    %1352 = vmatpush1.msra.mxu0 %v102
    %1353 = vmatprep.subr.mxu0 %v107
    %1354 = vmatpush1.msra.mxu0 %v106
    %1355 = vmatprep.subr.mxu0 %v111
    %1356 = vmatpush1.msra.mxu0 %v110
    %1357 = vmatprep.subr.mxu0 %v115
    %1358 = vmatpush1.msra.mxu0 %v114
    %1359 = vmatprep.subr.mxu0 %v119
    %1360 = vmatpush1.msra.mxu0 %v118
    %1361 = vmatprep.subr.mxu0 %v123
    %1362 = vmatpush1.msra.mxu0 %v122
    %1363 = vmatprep.subr.mxu0 %v127
    %1364 = vmatpush1.msra.mxu0 %v126
    %1365 = vmatprep.subr.mxu0 %v131
    %1366 = vmatpush1.msra.mxu0 %v130
    %1367 = vmatprep.subr.mxu0 %v135
    %1368 = vmatpush1.msra.mxu0 %v134
    %1369 = vmatprep.subr.mxu0 %v139
    %1370 = vmatpush1.msra.mxu0 %v138
    %1371 = vmatprep.subr.mxu0 %v143
    %1372 = vmatpush1.msra.mxu0 %v142
    %1373 = vmatprep.subr.mxu0 %v147
    %1374 = vmatpush1.msra.mxu0 %v146
    %1375 = vmatprep.subr.mxu0 %v151
    %1376 = vmatpush1.msra.mxu0 %v150
    %1377 = vmatprep.subr.mxu0 %v155
    %1378 = vmatpush1.msra.mxu0 %v154
    %1379 = vmatprep.subr.mxu0 %v159
    %1380 = vmatpush1.msra.mxu0 %v158
    %1381 = vmatprep.subr.mxu0 %v163
    %1382 = vmatpush1.msra.mxu0 %v162
    %1383 = vmatprep.subr.mxu0 %v167
    %1384 = vmatpush1.msra.mxu0 %v166
    %1385 = vmatprep.subr.mxu0 %v171
    %1386 = vmatpush1.msra.mxu0 %v170
    %1387 = vmatprep.subr.mxu0 %v175
    %1388 = vmatpush1.msra.mxu0 %v174
    %1389 = vmatprep.subr.mxu0 %v179
    %1390 = vmatpush1.msra.mxu0 %v178
    %1391 = vmatprep.subr.mxu0 %v183
    %1392 = vmatpush1.msra.mxu0 %v182
    %1393 = vmatprep.subr.mxu0 %v187
    %1394 = vmatpush1.msra.mxu0 %v186
    %1395 = vmatprep.subr.mxu0 %v191
    %1396 = vmatpush1.msra.mxu0 %v190
    %1397 = vmatprep.subr.mxu0 %v195
    %1398 = vmatpush1.msra.mxu0 %v194
    %1399 = vmatprep.subr.mxu0 %v199
    %1400 = vmatpush1.msra.mxu0 %v198
    %1401 = vmatprep.subr.mxu0 %v203
    %1402 = vmatpush1.msra.mxu0 %v202
    %1403 = vmatprep.subr.mxu0 %v207
    %1404 = vmatpush1.msra.mxu0 %v206
    %1405 = vmatprep.mubr.f32.mxu0 %v1172
    %1406 = vmatmul.mubr.f32.gmra.mrb[0].mxu0 %v1340
    %v1407 = vpop.f32.mrb[0].mxu0
    %v1408 = vadd.f32 %v41, %v1407
    %v1409 = vpop.f32.mrb[0].mxu0
    %v1410 = vadd.f32 %v45, %v1409
    %1411 = vdwg.mxu0
    %1412 = vmatprep.subr.mxu0 %v85
    %1413 = vmatpush1.msra.mxu0 %v84
    %1414 = vmatprep.subr.mxu0 %v89
    %1415 = vmatpush1.msra.mxu0 %v88
    %1416 = vmatprep.subr.mxu0 %v93
    %1417 = vmatpush1.msra.mxu0 %v92
    %1418 = vmatprep.subr.mxu0 %v97
    %1419 = vmatpush1.msra.mxu0 %v96
    %1420 = vmatprep.subr.mxu0 %v101
    %1421 = vmatpush1.msra.mxu0 %v100
    %1422 = vmatprep.subr.mxu0 %v105
    %1423 = vmatpush1.msra.mxu0 %v104
    %1424 = vmatprep.subr.mxu0 %v109
    %1425 = vmatpush1.msra.mxu0 %v108
    %1426 = vmatprep.subr.mxu0 %v113
    %1427 = vmatpush1.msra.mxu0 %v112
    %1428 = vmatprep.subr.mxu0 %v117
    %1429 = vmatpush1.msra.mxu0 %v116
    %1430 = vmatprep.subr.mxu0 %v121
    %1431 = vmatpush1.msra.mxu0 %v120
    %1432 = vmatprep.subr.mxu0 %v125
    %1433 = vmatpush1.msra.mxu0 %v124
    %1434 = vmatprep.subr.mxu0 %v129
    %1435 = vmatpush1.msra.mxu0 %v128
    %1436 = vmatprep.subr.mxu0 %v133
    %1437 = vmatpush1.msra.mxu0 %v132
    %1438 = vmatprep.subr.mxu0 %v137
    %1439 = vmatpush1.msra.mxu0 %v136
    %1440 = vmatprep.subr.mxu0 %v141
    %1441 = vmatpush1.msra.mxu0 %v140
    %1442 = vmatprep.subr.mxu0 %v145
    %1443 = vmatpush1.msra.mxu0 %v144
    %1444 = vmatprep.subr.mxu0 %v149
    %1445 = vmatpush1.msra.mxu0 %v148
    %1446 = vmatprep.subr.mxu0 %v153
    %1447 = vmatpush1.msra.mxu0 %v152
    %1448 = vmatprep.subr.mxu0 %v157
    %1449 = vmatpush1.msra.mxu0 %v156
    %1450 = vmatprep.subr.mxu0 %v161
    %1451 = vmatpush1.msra.mxu0 %v160
    %1452 = vmatprep.subr.mxu0 %v165
    %1453 = vmatpush1.msra.mxu0 %v164
    %1454 = vmatprep.subr.mxu0 %v169
    %1455 = vmatpush1.msra.mxu0 %v168
    %1456 = vmatprep.subr.mxu0 %v173
    %1457 = vmatpush1.msra.mxu0 %v172
    %1458 = vmatprep.subr.mxu0 %v177
    %1459 = vmatpush1.msra.mxu0 %v176
    %1460 = vmatprep.subr.mxu0 %v181
    %1461 = vmatpush1.msra.mxu0 %v180
    %1462 = vmatprep.subr.mxu0 %v185
    %1463 = vmatpush1.msra.mxu0 %v184
    %1464 = vmatprep.subr.mxu0 %v189
    %1465 = vmatpush1.msra.mxu0 %v188
    %1466 = vmatprep.subr.mxu0 %v193
    %1467 = vmatpush1.msra.mxu0 %v192
    %1468 = vmatprep.subr.mxu0 %v197
    %1469 = vmatpush1.msra.mxu0 %v196
    %1470 = vmatprep.subr.mxu0 %v201
    %1471 = vmatpush1.msra.mxu0 %v200
    %1472 = vmatprep.subr.mxu0 %v205
    %1473 = vmatpush1.msra.mxu0 %v204
    %1474 = vmatprep.subr.mxu0 %v209
    %1475 = vmatpush1.msra.mxu0 %v208
    %1476 = vmatprep.mubr.f32.mxu0 %v1172
    %1477 = vmatmul.mubr.f32.gmra.mrb[0].mxu0 %v1340
    %v1478 = vpop.f32.mrb[0].mxu0
    %v1479 = vadd.f32 %v49, %v1478
    %v1480 = vpop.f32.mrb[0].mxu0
    %v1481 = vadd.f32 %v53, %v1480
    %1482 = vdwg.mxu0
    %v1483 = vxor.u32 %v1408, 2147483648
    %v1484 = vmul.f32 %v1483, 1.442695
    %v1485 = vpow.pop %v1484
    %v1486 = vadd.f32 %v1485, 1.0
    %v1487 = vrcp.pop %v1486
    %v1488 = vmul.f32 1.0, %v1487
    %v1489 = vxor.u32 %v1410, 2147483648
    %v1490 = vmul.f32 %v1489, 1.442695
    %v1491 = vpow.pop %v1490
    %v1492 = vadd.f32 %v1491, 1.0
    %v1493 = vrcp.pop %v1492
    %v1494 = vmul.f32 1.0, %v1493
    %v1495 = vtanh.pop %v1479
    %v1496 = vxor.u32 %v1481, 2147483648
    %v1497 = vmul.f32 %v1496, 1.442695
    %v1498 = vpow.pop %v1497
    %v1499 = vadd.f32 %v1498, 1.0
    %v1500 = vrcp.pop %v1499
    %v1501 = vmul.f32 1.0, %v1500
    %v1502 = vmul.f32 %v1494, %v1170
    %v1503 = vmul.f32 %v1488, %v1495
    %v1504 = vadd.f32 %v1502, %v1503
    %v1505 = vtanh.pop %v1504
    %v1506 = vmul.f32 %v1501, %v1505
    %1507 = vmatprep.subr.mxu0 %v378
    %1508 = vmatpush1.msra.mxu0 %v377
    %1509 = vmatprep.subr.mxu0 %v382
    %1510 = vmatpush1.msra.mxu0 %v381
    %1511 = vmatprep.subr.mxu0 %v386
    %1512 = vmatpush1.msra.mxu0 %v385
    %1513 = vmatprep.subr.mxu0 %v390
    %1514 = vmatpush1.msra.mxu0 %v389
    %1515 = vmatprep.subr.mxu0 %v394
    %1516 = vmatpush1.msra.mxu0 %v393
    %1517 = vmatprep.subr.mxu0 %v398
    %1518 = vmatpush1.msra.mxu0 %v397
    %1519 = vmatprep.subr.mxu0 %v402
    %1520 = vmatpush1.msra.mxu0 %v401
    %1521 = vmatprep.subr.mxu0 %v406
    %1522 = vmatpush1.msra.mxu0 %v405
    %1523 = vmatprep.subr.mxu0 %v410
    %1524 = vmatpush1.msra.mxu0 %v409
    %1525 = vmatprep.subr.mxu0 %v414
    %1526 = vmatpush1.msra.mxu0 %v413
    %1527 = vmatprep.subr.mxu0 %v418
    %1528 = vmatpush1.msra.mxu0 %v417
    %1529 = vmatprep.subr.mxu0 %v422
    %1530 = vmatpush1.msra.mxu0 %v421
    %1531 = vmatprep.subr.mxu0 %v426
    %1532 = vmatpush1.msra.mxu0 %v425
    %1533 = vmatprep.subr.mxu0 %v430
    %1534 = vmatpush1.msra.mxu0 %v429
    %1535 = vmatprep.subr.mxu0 %v434
    %1536 = vmatpush1.msra.mxu0 %v433
    %1537 = vmatprep.subr.mxu0 %v438
    %1538 = vmatpush1.msra.mxu0 %v437
    %1539 = vmatprep.subr.mxu0 %v442
    %1540 = vmatpush1.msra.mxu0 %v441
    %1541 = vmatprep.subr.mxu0 %v446
    %1542 = vmatpush1.msra.mxu0 %v445
    %1543 = vmatprep.subr.mxu0 %v450
    %1544 = vmatpush1.msra.mxu0 %v449
    %1545 = vmatprep.subr.mxu0 %v454
    %1546 = vmatpush1.msra.mxu0 %v453
    %1547 = vmatprep.subr.mxu0 %v458
    %1548 = vmatpush1.msra.mxu0 %v457
    %1549 = vmatprep.subr.mxu0 %v462
    %1550 = vmatpush1.msra.mxu0 %v461
    %1551 = vmatprep.subr.mxu0 %v466
    %1552 = vmatpush1.msra.mxu0 %v465
    %1553 = vmatprep.subr.mxu0 %v470
    %1554 = vmatpush1.msra.mxu0 %v469
    %1555 = vmatprep.subr.mxu0 %v474
    %1556 = vmatpush1.msra.mxu0 %v473
    %1557 = vmatprep.subr.mxu0 %v478
    %1558 = vmatpush1.msra.mxu0 %v477
    %1559 = vmatprep.subr.mxu0 %v482
    %1560 = vmatpush1.msra.mxu0 %v481
    %1561 = vmatprep.subr.mxu0 %v486
    %1562 = vmatpush1.msra.mxu0 %v485
    %1563 = vmatprep.subr.mxu0 %v490
    %1564 = vmatpush1.msra.mxu0 %v489
    %1565 = vmatprep.subr.mxu0 %v494
    %1566 = vmatpush1.msra.mxu0 %v493
    %1567 = vmatprep.subr.mxu0 %v498
    %1568 = vmatpush1.msra.mxu0 %v497
    %1569 = vmatprep.subr.mxu0 %v502
    %1570 = vmatpush1.msra.mxu0 %v501
    %1571 = vmatprep.mubr.f32.mxu0 %v1338
    %1572 = vmatmul.mubr.f32.gmra.mrb[0].mxu0 %v1506
    %v1573 = vpop.f32.mrb[0].mxu0
    %v1574 = vadd.f32 %v64, %v1573
    %v1575 = vpop.f32.mrb[0].mxu0
    %v1576 = vadd.f32 %v68, %v1575
    %1577 = vdwg.mxu0
    %1578 = vmatprep.subr.mxu0 %v380
    %1579 = vmatpush1.msra.mxu0 %v379
    %1580 = vmatprep.subr.mxu0 %v384
    %1581 = vmatpush1.msra.mxu0 %v383
    %1582 = vmatprep.subr.mxu0 %v388
    %1583 = vmatpush1.msra.mxu0 %v387
    %1584 = vmatprep.subr.mxu0 %v392
    %1585 = vmatpush1.msra.mxu0 %v391
    %1586 = vmatprep.subr.mxu0 %v396
    %1587 = vmatpush1.msra.mxu0 %v395
    %1588 = vmatprep.subr.mxu0 %v400
    %1589 = vmatpush1.msra.mxu0 %v399
    %1590 = vmatprep.subr.mxu0 %v404
    %1591 = vmatpush1.msra.mxu0 %v403
    %1592 = vmatprep.subr.mxu0 %v408
    %1593 = vmatpush1.msra.mxu0 %v407
    %1594 = vmatprep.subr.mxu0 %v412
    %1595 = vmatpush1.msra.mxu0 %v411
    %1596 = vmatprep.subr.mxu0 %v416
    %1597 = vmatpush1.msra.mxu0 %v415
    %1598 = vmatprep.subr.mxu0 %v420
    %1599 = vmatpush1.msra.mxu0 %v419
    %1600 = vmatprep.subr.mxu0 %v424
    %1601 = vmatpush1.msra.mxu0 %v423
    %1602 = vmatprep.subr.mxu0 %v428
    %1603 = vmatpush1.msra.mxu0 %v427
    %1604 = vmatprep.subr.mxu0 %v432
    %1605 = vmatpush1.msra.mxu0 %v431
    %1606 = vmatprep.subr.mxu0 %v436
    %1607 = vmatpush1.msra.mxu0 %v435
    %1608 = vmatprep.subr.mxu0 %v440
    %1609 = vmatpush1.msra.mxu0 %v439
    %1610 = vmatprep.subr.mxu0 %v444
    %1611 = vmatpush1.msra.mxu0 %v443
    %1612 = vmatprep.subr.mxu0 %v448
    %1613 = vmatpush1.msra.mxu0 %v447
    %1614 = vmatprep.subr.mxu0 %v452
    %1615 = vmatpush1.msra.mxu0 %v451
    %1616 = vmatprep.subr.mxu0 %v456
    %1617 = vmatpush1.msra.mxu0 %v455
    %1618 = vmatprep.subr.mxu0 %v460
    %1619 = vmatpush1.msra.mxu0 %v459
    %1620 = vmatprep.subr.mxu0 %v464
    %1621 = vmatpush1.msra.mxu0 %v463
    %1622 = vmatprep.subr.mxu0 %v468
    %1623 = vmatpush1.msra.mxu0 %v467
    %1624 = vmatprep.subr.mxu0 %v472
    %1625 = vmatpush1.msra.mxu0 %v471
    %1626 = vmatprep.subr.mxu0 %v476
    %1627 = vmatpush1.msra.mxu0 %v475
    %1628 = vmatprep.subr.mxu0 %v480
    %1629 = vmatpush1.msra.mxu0 %v479
    %1630 = vmatprep.subr.mxu0 %v484
    %1631 = vmatpush1.msra.mxu0 %v483
    %1632 = vmatprep.subr.mxu0 %v488
    %1633 = vmatpush1.msra.mxu0 %v487
    %1634 = vmatprep.subr.mxu0 %v492
    %1635 = vmatpush1.msra.mxu0 %v491
    %1636 = vmatprep.subr.mxu0 %v496
    %1637 = vmatpush1.msra.mxu0 %v495
    %1638 = vmatprep.subr.mxu0 %v500
    %1639 = vmatpush1.msra.mxu0 %v499
    %1640 = vmatprep.subr.mxu0 %v504
    %1641 = vmatpush1.msra.mxu0 %v503
    %1642 = vmatprep.mubr.f32.mxu0 %v1338
    %1643 = vmatmul.mubr.f32.gmra.mrb[0].mxu0 %v1506
    %v1644 = vpop.f32.mrb[0].mxu0
    %v1645 = vadd.f32 %v72, %v1644
    %v1646 = vpop.f32.mrb[0].mxu0
    %v1647 = vadd.f32 %v76, %v1646
    %1648 = vdwg.mxu0
    %v1649 = vxor.u32 %v1574, 2147483648
    %v1650 = vmul.f32 %v1649, 1.442695
    %v1651 = vpow.pop %v1650
    %v1652 = vadd.f32 %v1651, 1.0
    %v1653 = vrcp.pop %v1652
    %v1654 = vmul.f32 1.0, %v1653
    %v1655 = vxor.u32 %v1576, 2147483648
    %v1656 = vmul.f32 %v1655, 1.442695
    %v1657 = vpow.pop %v1656
    %v1658 = vadd.f32 %v1657, 1.0
    %v1659 = vrcp.pop %v1658
    %v1660 = vmul.f32 1.0, %v1659
    %v1661 = vtanh.pop %v1645
    %v1662 = vxor.u32 %v1647, 2147483648
    %v1663 = vmul.f32 %v1662, 1.442695
    %v1664 = vpow.pop %v1663
    %v1665 = vadd.f32 %v1664, 1.0
    %v1666 = vrcp.pop %v1665
    %v1667 = vmul.f32 1.0, %v1666
    %v1668 = vmul.f32 %v1660, %v1336
    %v1669 = vmul.f32 %v1654, %v1661
    %v1670 = vadd.f32 %v1668, %v1669
    %v1671 = vtanh.pop %v1670
    %v1672 = vmul.f32 %v1667, %v1671
    %s1673 = scalar_lea.vmem %s0, 32
    %v1674 = vld [vmem:[%s1673] sm:$0xff]
    %1675 = vmatprep.subr.mxu0 %v83
    %1676 = vmatpush1.msra.mxu0 %v82
    %1677 = vmatprep.subr.mxu0 %v87
    %1678 = vmatpush1.msra.mxu0 %v86
    %1679 = vmatprep.subr.mxu0 %v91
    %1680 = vmatpush1.msra.mxu0 %v90
    %1681 = vmatprep.subr.mxu0 %v95
    %1682 = vmatpush1.msra.mxu0 %v94
    %1683 = vmatprep.subr.mxu0 %v99
    %1684 = vmatpush1.msra.mxu0 %v98
    %1685 = vmatprep.subr.mxu0 %v103
    %1686 = vmatpush1.msra.mxu0 %v102
    %1687 = vmatprep.subr.mxu0 %v107
    %1688 = vmatpush1.msra.mxu0 %v106
    %1689 = vmatprep.subr.mxu0 %v111
    %1690 = vmatpush1.msra.mxu0 %v110
    %1691 = vmatprep.subr.mxu0 %v115
    %1692 = vmatpush1.msra.mxu0 %v114
    %1693 = vmatprep.subr.mxu0 %v119
    %1694 = vmatpush1.msra.mxu0 %v118
    %1695 = vmatprep.subr.mxu0 %v123
    %1696 = vmatpush1.msra.mxu0 %v122
    %1697 = vmatprep.subr.mxu0 %v127
    %1698 = vmatpush1.msra.mxu0 %v126
    %1699 = vmatprep.subr.mxu0 %v131
    %1700 = vmatpush1.msra.mxu0 %v130
    %1701 = vmatprep.subr.mxu0 %v135
    %1702 = vmatpush1.msra.mxu0 %v134
    %1703 = vmatprep.subr.mxu0 %v139
    %1704 = vmatpush1.msra.mxu0 %v138
    %1705 = vmatprep.subr.mxu0 %v143
    %1706 = vmatpush1.msra.mxu0 %v142
    %1707 = vmatprep.subr.mxu0 %v147
    %1708 = vmatpush1.msra.mxu0 %v146
    %1709 = vmatprep.subr.mxu0 %v151
    %1710 = vmatpush1.msra.mxu0 %v150
    %1711 = vmatprep.subr.mxu0 %v155
    %1712 = vmatpush1.msra.mxu0 %v154
    %1713 = vmatprep.subr.mxu0 %v159
    %1714 = vmatpush1.msra.mxu0 %v158
    %1715 = vmatprep.subr.mxu0 %v163
    %1716 = vmatpush1.msra.mxu0 %v162
    %1717 = vmatprep.subr.mxu0 %v167
    %1718 = vmatpush1.msra.mxu0 %v166
    %1719 = vmatprep.subr.mxu0 %v171
    %1720 = vmatpush1.msra.mxu0 %v170
    %1721 = vmatprep.subr.mxu0 %v175
    %1722 = vmatpush1.msra.mxu0 %v174
    %1723 = vmatprep.subr.mxu0 %v179
    %1724 = vmatpush1.msra.mxu0 %v178
    %1725 = vmatprep.subr.mxu0 %v183
    %1726 = vmatpush1.msra.mxu0 %v182
    %1727 = vmatprep.subr.mxu0 %v187
    %1728 = vmatpush1.msra.mxu0 %v186
    %1729 = vmatprep.subr.mxu0 %v191
    %1730 = vmatpush1.msra.mxu0 %v190
    %1731 = vmatprep.subr.mxu0 %v195
    %1732 = vmatpush1.msra.mxu0 %v194
    %1733 = vmatprep.subr.mxu0 %v199
    %1734 = vmatpush1.msra.mxu0 %v198
    %1735 = vmatprep.subr.mxu0 %v203
    %1736 = vmatpush1.msra.mxu0 %v202
    %1737 = vmatprep.subr.mxu0 %v207
    %1738 = vmatpush1.msra.mxu0 %v206
    %1739 = vmatprep.mubr.f32.mxu0 %v1506
    %1740 = vmatmul.mubr.f32.gmra.mrb[0].mxu0 %v1674
    %v1741 = vpop.f32.mrb[0].mxu0
    %v1742 = vadd.f32 %v41, %v1741
    %v1743 = vpop.f32.mrb[0].mxu0
    %v1744 = vadd.f32 %v45, %v1743
    %1745 = vdwg.mxu0
    %1746 = vmatprep.subr.mxu0 %v85
    %1747 = vmatpush1.msra.mxu0 %v84
    %1748 = vmatprep.subr.mxu0 %v89
    %1749 = vmatpush1.msra.mxu0 %v88
    %1750 = vmatprep.subr.mxu0 %v93
    %1751 = vmatpush1.msra.mxu0 %v92
    %1752 = vmatprep.subr.mxu0 %v97
    %1753 = vmatpush1.msra.mxu0 %v96
    %1754 = vmatprep.subr.mxu0 %v101
    %1755 = vmatpush1.msra.mxu0 %v100
    %1756 = vmatprep.subr.mxu0 %v105
    %1757 = vmatpush1.msra.mxu0 %v104
    %1758 = vmatprep.subr.mxu0 %v109
    %1759 = vmatpush1.msra.mxu0 %v108
    %1760 = vmatprep.subr.mxu0 %v113
    %1761 = vmatpush1.msra.mxu0 %v112
    %1762 = vmatprep.subr.mxu0 %v117
    %1763 = vmatpush1.msra.mxu0 %v116
    %1764 = vmatprep.subr.mxu0 %v121
    %1765 = vmatpush1.msra.mxu0 %v120
    %1766 = vmatprep.subr.mxu0 %v125
    %1767 = vmatpush1.msra.mxu0 %v124
    %1768 = vmatprep.subr.mxu0 %v129
    %1769 = vmatpush1.msra.mxu0 %v128
    %1770 = vmatprep.subr.mxu0 %v133
    %1771 = vmatpush1.msra.mxu0 %v132
    %1772 = vmatprep.subr.mxu0 %v137
    %1773 = vmatpush1.msra.mxu0 %v136
    %1774 = vmatprep.subr.mxu0 %v141
    %1775 = vmatpush1.msra.mxu0 %v140
    %1776 = vmatprep.subr.mxu0 %v145
    %1777 = vmatpush1.msra.mxu0 %v144
    %1778 = vmatprep.subr.mxu0 %v149
    %1779 = vmatpush1.msra.mxu0 %v148
    %1780 = vmatprep.subr.mxu0 %v153
    %1781 = vmatpush1.msra.mxu0 %v152
    %1782 = vmatprep.subr.mxu0 %v157
    %1783 = vmatpush1.msra.mxu0 %v156
    %1784 = vmatprep.subr.mxu0 %v161
    %1785 = vmatpush1.msra.mxu0 %v160
    %1786 = vmatprep.subr.mxu0 %v165
    %1787 = vmatpush1.msra.mxu0 %v164
    %1788 = vmatprep.subr.mxu0 %v169
    %1789 = vmatpush1.msra.mxu0 %v168
    %1790 = vmatprep.subr.mxu0 %v173
    %1791 = vmatpush1.msra.mxu0 %v172
    %1792 = vmatprep.subr.mxu0 %v177
    %1793 = vmatpush1.msra.mxu0 %v176
    %1794 = vmatprep.subr.mxu0 %v181
    %1795 = vmatpush1.msra.mxu0 %v180
    %1796 = vmatprep.subr.mxu0 %v185
    %1797 = vmatpush1.msra.mxu0 %v184
    %1798 = vmatprep.subr.mxu0 %v189
    %1799 = vmatpush1.msra.mxu0 %v188
    %1800 = vmatprep.subr.mxu0 %v193
    %1801 = vmatpush1.msra.mxu0 %v192
    %1802 = vmatprep.subr.mxu0 %v197
    %1803 = vmatpush1.msra.mxu0 %v196
    %1804 = vmatprep.subr.mxu0 %v201
    %1805 = vmatpush1.msra.mxu0 %v200
    %1806 = vmatprep.subr.mxu0 %v205
    %1807 = vmatpush1.msra.mxu0 %v204
    %1808 = vmatprep.subr.mxu0 %v209
    %1809 = vmatpush1.msra.mxu0 %v208
    %1810 = vmatprep.mubr.f32.mxu0 %v1506
    %1811 = vmatmul.mubr.f32.gmra.mrb[0].mxu0 %v1674
    %v1812 = vpop.f32.mrb[0].mxu0
    %v1813 = vadd.f32 %v49, %v1812
    %v1814 = vpop.f32.mrb[0].mxu0
    %v1815 = vadd.f32 %v53, %v1814
    %1816 = vdwg.mxu0
    %v1817 = vxor.u32 %v1742, 2147483648
    %v1818 = vmul.f32 %v1817, 1.442695
    %v1819 = vpow.pop %v1818
    %v1820 = vadd.f32 %v1819, 1.0
    %v1821 = vrcp.pop %v1820
    %v1822 = vmul.f32 1.0, %v1821
    %v1823 = vxor.u32 %v1744, 2147483648
    %v1824 = vmul.f32 %v1823, 1.442695
    %v1825 = vpow.pop %v1824
    %v1826 = vadd.f32 %v1825, 1.0
    %v1827 = vrcp.pop %v1826
    %v1828 = vmul.f32 1.0, %v1827
    %v1829 = vtanh.pop %v1813
    %v1830 = vxor.u32 %v1815, 2147483648
    %v1831 = vmul.f32 %v1830, 1.442695
    %v1832 = vpow.pop %v1831
    %v1833 = vadd.f32 %v1832, 1.0
    %v1834 = vrcp.pop %v1833
    %v1835 = vmul.f32 1.0, %v1834
    %v1836 = vmul.f32 %v1828, %v1504
    %v1837 = vmul.f32 %v1822, %v1829
    %v1838 = vadd.f32 %v1836, %v1837
    %v1839 = vtanh.pop %v1838
    %v1840 = vmul.f32 %v1835, %v1839
    %1841 = vmatprep.subr.mxu0 %v378
    %1842 = vmatpush1.msra.mxu0 %v377
    %1843 = vmatprep.subr.mxu0 %v382
    %1844 = vmatpush1.msra.mxu0 %v381
    %1845 = vmatprep.subr.mxu0 %v386
    %1846 = vmatpush1.msra.mxu0 %v385
    %1847 = vmatprep.subr.mxu0 %v390
    %1848 = vmatpush1.msra.mxu0 %v389
    %1849 = vmatprep.subr.mxu0 %v394
    %1850 = vmatpush1.msra.mxu0 %v393
    %1851 = vmatprep.subr.mxu0 %v398
    %1852 = vmatpush1.msra.mxu0 %v397
    %1853 = vmatprep.subr.mxu0 %v402
    %1854 = vmatpush1.msra.mxu0 %v401
    %1855 = vmatprep.subr.mxu0 %v406
    %1856 = vmatpush1.msra.mxu0 %v405
    %1857 = vmatprep.subr.mxu0 %v410
    %1858 = vmatpush1.msra.mxu0 %v409
    %1859 = vmatprep.subr.mxu0 %v414
    %1860 = vmatpush1.msra.mxu0 %v413
    %1861 = vmatprep.subr.mxu0 %v418
    %1862 = vmatpush1.msra.mxu0 %v417
    %1863 = vmatprep.subr.mxu0 %v422
    %1864 = vmatpush1.msra.mxu0 %v421
    %1865 = vmatprep.subr.mxu0 %v426
    %1866 = vmatpush1.msra.mxu0 %v425
    %1867 = vmatprep.subr.mxu0 %v430
    %1868 = vmatpush1.msra.mxu0 %v429
    %1869 = vmatprep.subr.mxu0 %v434
    %1870 = vmatpush1.msra.mxu0 %v433
    %1871 = vmatprep.subr.mxu0 %v438
    %1872 = vmatpush1.msra.mxu0 %v437
    %1873 = vmatprep.subr.mxu0 %v442
    %1874 = vmatpush1.msra.mxu0 %v441
    %1875 = vmatprep.subr.mxu0 %v446
    %1876 = vmatpush1.msra.mxu0 %v445
    %1877 = vmatprep.subr.mxu0 %v450
    %1878 = vmatpush1.msra.mxu0 %v449
    %1879 = vmatprep.subr.mxu0 %v454
    %1880 = vmatpush1.msra.mxu0 %v453
    %1881 = vmatprep.subr.mxu0 %v458
    %1882 = vmatpush1.msra.mxu0 %v457
    %1883 = vmatprep.subr.mxu0 %v462
    %1884 = vmatpush1.msra.mxu0 %v461
    %1885 = vmatprep.subr.mxu0 %v466
    %1886 = vmatpush1.msra.mxu0 %v465
    %1887 = vmatprep.subr.mxu0 %v470
    %1888 = vmatpush1.msra.mxu0 %v469
    %1889 = vmatprep.subr.mxu0 %v474
    %1890 = vmatpush1.msra.mxu0 %v473
    %1891 = vmatprep.subr.mxu0 %v478
    %1892 = vmatpush1.msra.mxu0 %v477
    %1893 = vmatprep.subr.mxu0 %v482
    %1894 = vmatpush1.msra.mxu0 %v481
    %1895 = vmatprep.subr.mxu0 %v486
    %1896 = vmatpush1.msra.mxu0 %v485
    %1897 = vmatprep.subr.mxu0 %v490
    %1898 = vmatpush1.msra.mxu0 %v489
    %1899 = vmatprep.subr.mxu0 %v494
    %1900 = vmatpush1.msra.mxu0 %v493
    %1901 = vmatprep.subr.mxu0 %v498
    %1902 = vmatpush1.msra.mxu0 %v497
    %1903 = vmatprep.subr.mxu0 %v502
    %1904 = vmatpush1.msra.mxu0 %v501
    %1905 = vmatprep.mubr.f32.mxu0 %v1672
    %1906 = vmatmul.mubr.f32.gmra.mrb[0].mxu0 %v1840
    %v1907 = vpop.f32.mrb[0].mxu0
    %v1908 = vadd.f32 %v64, %v1907
    %v1909 = vpop.f32.mrb[0].mxu0
    %v1910 = vadd.f32 %v68, %v1909
    %1911 = vdwg.mxu0
    %1912 = vmatprep.subr.mxu0 %v380
    %1913 = vmatpush1.msra.mxu0 %v379
    %1914 = vmatprep.subr.mxu0 %v384
    %1915 = vmatpush1.msra.mxu0 %v383
    %1916 = vmatprep.subr.mxu0 %v388
    %1917 = vmatpush1.msra.mxu0 %v387
    %1918 = vmatprep.subr.mxu0 %v392
    %1919 = vmatpush1.msra.mxu0 %v391
    %1920 = vmatprep.subr.mxu0 %v396
    %1921 = vmatpush1.msra.mxu0 %v395
    %1922 = vmatprep.subr.mxu0 %v400
    %1923 = vmatpush1.msra.mxu0 %v399
    %1924 = vmatprep.subr.mxu0 %v404
    %1925 = vmatpush1.msra.mxu0 %v403
    %1926 = vmatprep.subr.mxu0 %v408
    %1927 = vmatpush1.msra.mxu0 %v407
    %1928 = vmatprep.subr.mxu0 %v412
    %1929 = vmatpush1.msra.mxu0 %v411
    %1930 = vmatprep.subr.mxu0 %v416
    %1931 = vmatpush1.msra.mxu0 %v415
    %1932 = vmatprep.subr.mxu0 %v420
    %1933 = vmatpush1.msra.mxu0 %v419
    %1934 = vmatprep.subr.mxu0 %v424
    %1935 = vmatpush1.msra.mxu0 %v423
    %1936 = vmatprep.subr.mxu0 %v428
    %1937 = vmatpush1.msra.mxu0 %v427
    %1938 = vmatprep.subr.mxu0 %v432
    %1939 = vmatpush1.msra.mxu0 %v431
    %1940 = vmatprep.subr.mxu0 %v436
    %1941 = vmatpush1.msra.mxu0 %v435
    %1942 = vmatprep.subr.mxu0 %v440
    %1943 = vmatpush1.msra.mxu0 %v439
    %1944 = vmatprep.subr.mxu0 %v444
    %1945 = vmatpush1.msra.mxu0 %v443
    %1946 = vmatprep.subr.mxu0 %v448
    %1947 = vmatpush1.msra.mxu0 %v447
    %1948 = vmatprep.subr.mxu0 %v452
    %1949 = vmatpush1.msra.mxu0 %v451
    %1950 = vmatprep.subr.mxu0 %v456
    %1951 = vmatpush1.msra.mxu0 %v455
    %1952 = vmatprep.subr.mxu0 %v460
    %1953 = vmatpush1.msra.mxu0 %v459
    %1954 = vmatprep.subr.mxu0 %v464
    %1955 = vmatpush1.msra.mxu0 %v463
    %1956 = vmatprep.subr.mxu0 %v468
    %1957 = vmatpush1.msra.mxu0 %v467
    %1958 = vmatprep.subr.mxu0 %v472
    %1959 = vmatpush1.msra.mxu0 %v471
    %1960 = vmatprep.subr.mxu0 %v476
    %1961 = vmatpush1.msra.mxu0 %v475
    %1962 = vmatprep.subr.mxu0 %v480
    %1963 = vmatpush1.msra.mxu0 %v479
    %1964 = vmatprep.subr.mxu0 %v484
    %1965 = vmatpush1.msra.mxu0 %v483
    %1966 = vmatprep.subr.mxu0 %v488
    %1967 = vmatpush1.msra.mxu0 %v487
    %1968 = vmatprep.subr.mxu0 %v492
    %1969 = vmatpush1.msra.mxu0 %v491
    %1970 = vmatprep.subr.mxu0 %v496
    %1971 = vmatpush1.msra.mxu0 %v495
    %1972 = vmatprep.subr.mxu0 %v500
    %1973 = vmatpush1.msra.mxu0 %v499
    %1974 = vmatprep.subr.mxu0 %v504
    %1975 = vmatpush1.msra.mxu0 %v503
    %1976 = vmatprep.mubr.f32.mxu0 %v1672
    %1977 = vmatmul.mubr.f32.gmra.mrb[0].mxu0 %v1840
    %v1978 = vpop.f32.mrb[0].mxu0
    %v1979 = vadd.f32 %v72, %v1978
    %v1980 = vpop.f32.mrb[0].mxu0
    %v1981 = vadd.f32 %v76, %v1980
    %1982 = vdwg.mxu0
    %v1983 = vxor.u32 %v1908, 2147483648
    %v1984 = vmul.f32 %v1983, 1.442695
    %v1985 = vpow.pop %v1984
    %v1986 = vadd.f32 %v1985, 1.0
    %v1987 = vrcp.pop %v1986
    %v1988 = vmul.f32 1.0, %v1987
    %v1989 = vxor.u32 %v1910, 2147483648
    %v1990 = vmul.f32 %v1989, 1.442695
    %v1991 = vpow.pop %v1990
    %v1992 = vadd.f32 %v1991, 1.0
    %v1993 = vrcp.pop %v1992
    %v1994 = vmul.f32 1.0, %v1993
    %v1995 = vtanh.pop %v1979
    %v1996 = vxor.u32 %v1981, 2147483648
    %v1997 = vmul.f32 %v1996, 1.442695
    %v1998 = vpow.pop %v1997
    %v1999 = vadd.f32 %v1998, 1.0
    %v2000 = vrcp.pop %v1999
    %v2001 = vmul.f32 1.0, %v2000
    %v2002 = vmul.f32 %v1994, %v1670
    %v2003 = vmul.f32 %v1988, %v1995
    %v2004 = vadd.f32 %v2002, %v2003
    %v2005 = vtanh.pop %v2004
    %v2006 = vmul.f32 %v2001, %v2005
    %s2007 = scalar_lea.vmem %s0, 40
    %v2008 = vld [vmem:[%s2007] sm:$0xff]
    %2009 = vmatprep.subr.mxu0 %v83
    %2010 = vmatpush1.msra.mxu0 %v82
    %2011 = vmatprep.subr.mxu0 %v87
    %2012 = vmatpush1.msra.mxu0 %v86
    %2013 = vmatprep.subr.mxu0 %v91
    %2014 = vmatpush1.msra.mxu0 %v90
    %2015 = vmatprep.subr.mxu0 %v95
    %2016 = vmatpush1.msra.mxu0 %v94
    %2017 = vmatprep.subr.mxu0 %v99
    %2018 = vmatpush1.msra.mxu0 %v98
    %2019 = vmatprep.subr.mxu0 %v103
    %2020 = vmatpush1.msra.mxu0 %v102
    %2021 = vmatprep.subr.mxu0 %v107
    %2022 = vmatpush1.msra.mxu0 %v106
    %2023 = vmatprep.subr.mxu0 %v111
    %2024 = vmatpush1.msra.mxu0 %v110
    %2025 = vmatprep.subr.mxu0 %v115
    %2026 = vmatpush1.msra.mxu0 %v114
    %2027 = vmatprep.subr.mxu0 %v119
    %2028 = vmatpush1.msra.mxu0 %v118
    %2029 = vmatprep.subr.mxu0 %v123
    %2030 = vmatpush1.msra.mxu0 %v122
    %2031 = vmatprep.subr.mxu0 %v127
    %2032 = vmatpush1.msra.mxu0 %v126
    %2033 = vmatprep.subr.mxu0 %v131
    %2034 = vmatpush1.msra.mxu0 %v130
    %2035 = vmatprep.subr.mxu0 %v135
    %2036 = vmatpush1.msra.mxu0 %v134
    %2037 = vmatprep.subr.mxu0 %v139
    %2038 = vmatpush1.msra.mxu0 %v138
    %2039 = vmatprep.subr.mxu0 %v143
    %2040 = vmatpush1.msra.mxu0 %v142
    %2041 = vmatprep.subr.mxu0 %v147
    %2042 = vmatpush1.msra.mxu0 %v146
    %2043 = vmatprep.subr.mxu0 %v151
    %2044 = vmatpush1.msra.mxu0 %v150
    %2045 = vmatprep.subr.mxu0 %v155
    %2046 = vmatpush1.msra.mxu0 %v154
    %2047 = vmatprep.subr.mxu0 %v159
    %2048 = vmatpush1.msra.mxu0 %v158
    %2049 = vmatprep.subr.mxu0 %v163
    %2050 = vmatpush1.msra.mxu0 %v162
    %2051 = vmatprep.subr.mxu0 %v167
    %2052 = vmatpush1.msra.mxu0 %v166
    %2053 = vmatprep.subr.mxu0 %v171
    %2054 = vmatpush1.msra.mxu0 %v170
    %2055 = vmatprep.subr.mxu0 %v175
    %2056 = vmatpush1.msra.mxu0 %v174
    %2057 = vmatprep.subr.mxu0 %v179
    %2058 = vmatpush1.msra.mxu0 %v178
    %2059 = vmatprep.subr.mxu0 %v183
    %2060 = vmatpush1.msra.mxu0 %v182
    %2061 = vmatprep.subr.mxu0 %v187
    %2062 = vmatpush1.msra.mxu0 %v186
    %2063 = vmatprep.subr.mxu0 %v191
    %2064 = vmatpush1.msra.mxu0 %v190
    %2065 = vmatprep.subr.mxu0 %v195
    %2066 = vmatpush1.msra.mxu0 %v194
    %2067 = vmatprep.subr.mxu0 %v199
    %2068 = vmatpush1.msra.mxu0 %v198
    %2069 = vmatprep.subr.mxu0 %v203
    %2070 = vmatpush1.msra.mxu0 %v202
    %2071 = vmatprep.subr.mxu0 %v207
    %2072 = vmatpush1.msra.mxu0 %v206
    %2073 = vmatprep.mubr.f32.mxu0 %v1840
    %2074 = vmatmul.mubr.f32.gmra.mrb[0].mxu0 %v2008
    %v2075 = vpop.f32.mrb[0].mxu0
    %v2076 = vadd.f32 %v41, %v2075
    %v2077 = vpop.f32.mrb[0].mxu0
    %v2078 = vadd.f32 %v45, %v2077
    %2079 = vdwg.mxu0
    %2080 = vmatprep.subr.mxu0 %v85
    %2081 = vmatpush1.msra.mxu0 %v84
    %2082 = vmatprep.subr.mxu0 %v89
    %2083 = vmatpush1.msra.mxu0 %v88
    %2084 = vmatprep.subr.mxu0 %v93
    %2085 = vmatpush1.msra.mxu0 %v92
    %2086 = vmatprep.subr.mxu0 %v97
    %2087 = vmatpush1.msra.mxu0 %v96
    %2088 = vmatprep.subr.mxu0 %v101
    %2089 = vmatpush1.msra.mxu0 %v100
    %2090 = vmatprep.subr.mxu0 %v105
    %2091 = vmatpush1.msra.mxu0 %v104
    %2092 = vmatprep.subr.mxu0 %v109
    %2093 = vmatpush1.msra.mxu0 %v108
    %2094 = vmatprep.subr.mxu0 %v113
    %2095 = vmatpush1.msra.mxu0 %v112
    %2096 = vmatprep.subr.mxu0 %v117
    %2097 = vmatpush1.msra.mxu0 %v116
    %2098 = vmatprep.subr.mxu0 %v121
    %2099 = vmatpush1.msra.mxu0 %v120
    %2100 = vmatprep.subr.mxu0 %v125
    %2101 = vmatpush1.msra.mxu0 %v124
    %2102 = vmatprep.subr.mxu0 %v129
    %2103 = vmatpush1.msra.mxu0 %v128
    %2104 = vmatprep.subr.mxu0 %v133
    %2105 = vmatpush1.msra.mxu0 %v132
    %2106 = vmatprep.subr.mxu0 %v137
    %2107 = vmatpush1.msra.mxu0 %v136
    %2108 = vmatprep.subr.mxu0 %v141
    %2109 = vmatpush1.msra.mxu0 %v140
    %2110 = vmatprep.subr.mxu0 %v145
    %2111 = vmatpush1.msra.mxu0 %v144
    %2112 = vmatprep.subr.mxu0 %v149
    %2113 = vmatpush1.msra.mxu0 %v148
    %2114 = vmatprep.subr.mxu0 %v153
    %2115 = vmatpush1.msra.mxu0 %v152
    %2116 = vmatprep.subr.mxu0 %v157
    %2117 = vmatpush1.msra.mxu0 %v156
    %2118 = vmatprep.subr.mxu0 %v161
    %2119 = vmatpush1.msra.mxu0 %v160
    %2120 = vmatprep.subr.mxu0 %v165
    %2121 = vmatpush1.msra.mxu0 %v164
    %2122 = vmatprep.subr.mxu0 %v169
    %2123 = vmatpush1.msra.mxu0 %v168
    %2124 = vmatprep.subr.mxu0 %v173
    %2125 = vmatpush1.msra.mxu0 %v172
    %2126 = vmatprep.subr.mxu0 %v177
    %2127 = vmatpush1.msra.mxu0 %v176
    %2128 = vmatprep.subr.mxu0 %v181
    %2129 = vmatpush1.msra.mxu0 %v180
    %2130 = vmatprep.subr.mxu0 %v185
    %2131 = vmatpush1.msra.mxu0 %v184
    %2132 = vmatprep.subr.mxu0 %v189
    %2133 = vmatpush1.msra.mxu0 %v188
    %2134 = vmatprep.subr.mxu0 %v193
    %2135 = vmatpush1.msra.mxu0 %v192
    %2136 = vmatprep.subr.mxu0 %v197
    %2137 = vmatpush1.msra.mxu0 %v196
    %2138 = vmatprep.subr.mxu0 %v201
    %2139 = vmatpush1.msra.mxu0 %v200
    %2140 = vmatprep.subr.mxu0 %v205
    %2141 = vmatpush1.msra.mxu0 %v204
    %2142 = vmatprep.subr.mxu0 %v209
    %2143 = vmatpush1.msra.mxu0 %v208
    %2144 = vmatprep.mubr.f32.mxu0 %v1840
    %2145 = vmatmul.mubr.f32.gmra.mrb[0].mxu0 %v2008
    %v2146 = vpop.f32.mrb[0].mxu0
    %v2147 = vadd.f32 %v49, %v2146
    %v2148 = vpop.f32.mrb[0].mxu0
    %v2149 = vadd.f32 %v53, %v2148
    %2150 = vdwg.mxu0
    %v2151 = vxor.u32 %v2076, 2147483648
    %v2152 = vmul.f32 %v2151, 1.442695
    %v2153 = vpow.pop %v2152
    %v2154 = vadd.f32 %v2153, 1.0
    %v2155 = vrcp.pop %v2154
    %v2156 = vmul.f32 1.0, %v2155
    %v2157 = vxor.u32 %v2078, 2147483648
    %v2158 = vmul.f32 %v2157, 1.442695
    %v2159 = vpow.pop %v2158
    %v2160 = vadd.f32 %v2159, 1.0
    %v2161 = vrcp.pop %v2160
    %v2162 = vmul.f32 1.0, %v2161
    %v2163 = vtanh.pop %v2147
    %v2164 = vxor.u32 %v2149, 2147483648
    %v2165 = vmul.f32 %v2164, 1.442695
    %v2166 = vpow.pop %v2165
    %v2167 = vadd.f32 %v2166, 1.0
    %v2168 = vrcp.pop %v2167
    %v2169 = vmul.f32 1.0, %v2168
    %v2170 = vmul.f32 %v2162, %v1838
    %v2171 = vmul.f32 %v2156, %v2163
    %v2172 = vadd.f32 %v2170, %v2171
    %v2173 = vtanh.pop %v2172
    %v2174 = vmul.f32 %v2169, %v2173
    %2175 = vmatprep.subr.mxu0 %v378
    %2176 = vmatpush1.msra.mxu0 %v377
    %2177 = vmatprep.subr.mxu0 %v382
    %2178 = vmatpush1.msra.mxu0 %v381
    %2179 = vmatprep.subr.mxu0 %v386
    %2180 = vmatpush1.msra.mxu0 %v385
    %2181 = vmatprep.subr.mxu0 %v390
    %2182 = vmatpush1.msra.mxu0 %v389
    %2183 = vmatprep.subr.mxu0 %v394
    %2184 = vmatpush1.msra.mxu0 %v393
    %2185 = vmatprep.subr.mxu0 %v398
    %2186 = vmatpush1.msra.mxu0 %v397
    %2187 = vmatprep.subr.mxu0 %v402
    %2188 = vmatpush1.msra.mxu0 %v401
    %2189 = vmatprep.subr.mxu0 %v406
    %2190 = vmatpush1.msra.mxu0 %v405
    %2191 = vmatprep.subr.mxu0 %v410
    %2192 = vmatpush1.msra.mxu0 %v409
    %2193 = vmatprep.subr.mxu0 %v414
    %2194 = vmatpush1.msra.mxu0 %v413
    %2195 = vmatprep.subr.mxu0 %v418
    %2196 = vmatpush1.msra.mxu0 %v417
    %2197 = vmatprep.subr.mxu0 %v422
    %2198 = vmatpush1.msra.mxu0 %v421
    %2199 = vmatprep.subr.mxu0 %v426
    %2200 = vmatpush1.msra.mxu0 %v425
    %2201 = vmatprep.subr.mxu0 %v430
    %2202 = vmatpush1.msra.mxu0 %v429
    %2203 = vmatprep.subr.mxu0 %v434
    %2204 = vmatpush1.msra.mxu0 %v433
    %2205 = vmatprep.subr.mxu0 %v438
    %2206 = vmatpush1.msra.mxu0 %v437
    %2207 = vmatprep.subr.mxu0 %v442
    %2208 = vmatpush1.msra.mxu0 %v441
    %2209 = vmatprep.subr.mxu0 %v446
    %2210 = vmatpush1.msra.mxu0 %v445
    %2211 = vmatprep.subr.mxu0 %v450
    %2212 = vmatpush1.msra.mxu0 %v449
    %2213 = vmatprep.subr.mxu0 %v454
    %2214 = vmatpush1.msra.mxu0 %v453
    %2215 = vmatprep.subr.mxu0 %v458
    %2216 = vmatpush1.msra.mxu0 %v457
    %2217 = vmatprep.subr.mxu0 %v462
    %2218 = vmatpush1.msra.mxu0 %v461
    %2219 = vmatprep.subr.mxu0 %v466
    %2220 = vmatpush1.msra.mxu0 %v465
    %2221 = vmatprep.subr.mxu0 %v470
    %2222 = vmatpush1.msra.mxu0 %v469
    %2223 = vmatprep.subr.mxu0 %v474
    %2224 = vmatpush1.msra.mxu0 %v473
    %2225 = vmatprep.subr.mxu0 %v478
    %2226 = vmatpush1.msra.mxu0 %v477
    %2227 = vmatprep.subr.mxu0 %v482
    %2228 = vmatpush1.msra.mxu0 %v481
    %2229 = vmatprep.subr.mxu0 %v486
    %2230 = vmatpush1.msra.mxu0 %v485
    %2231 = vmatprep.subr.mxu0 %v490
    %2232 = vmatpush1.msra.mxu0 %v489
    %2233 = vmatprep.subr.mxu0 %v494
    %2234 = vmatpush1.msra.mxu0 %v493
    %2235 = vmatprep.subr.mxu0 %v498
    %2236 = vmatpush1.msra.mxu0 %v497
    %2237 = vmatprep.subr.mxu0 %v502
    %2238 = vmatpush1.msra.mxu0 %v501
    %2239 = vmatprep.mubr.f32.mxu0 %v2006
    %2240 = vmatmul.mubr.f32.gmra.mrb[0].mxu0 %v2174
    %v2241 = vpop.f32.mrb[0].mxu0
    %v2242 = vadd.f32 %v64, %v2241
    %v2243 = vpop.f32.mrb[0].mxu0
    %v2244 = vadd.f32 %v68, %v2243
    %2245 = vdwg.mxu0
    %2246 = vmatprep.subr.mxu0 %v380
    %2247 = vmatpush1.msra.mxu0 %v379
    %2248 = vmatprep.subr.mxu0 %v384
    %2249 = vmatpush1.msra.mxu0 %v383
    %2250 = vmatprep.subr.mxu0 %v388
    %2251 = vmatpush1.msra.mxu0 %v387
    %2252 = vmatprep.subr.mxu0 %v392
    %2253 = vmatpush1.msra.mxu0 %v391
    %2254 = vmatprep.subr.mxu0 %v396
    %2255 = vmatpush1.msra.mxu0 %v395
    %2256 = vmatprep.subr.mxu0 %v400
    %2257 = vmatpush1.msra.mxu0 %v399
    %2258 = vmatprep.subr.mxu0 %v404
    %2259 = vmatpush1.msra.mxu0 %v403
    %2260 = vmatprep.subr.mxu0 %v408
    %2261 = vmatpush1.msra.mxu0 %v407
    %2262 = vmatprep.subr.mxu0 %v412
    %2263 = vmatpush1.msra.mxu0 %v411
    %2264 = vmatprep.subr.mxu0 %v416
    %2265 = vmatpush1.msra.mxu0 %v415
    %2266 = vmatprep.subr.mxu0 %v420
    %2267 = vmatpush1.msra.mxu0 %v419
    %2268 = vmatprep.subr.mxu0 %v424
    %2269 = vmatpush1.msra.mxu0 %v423
    %2270 = vmatprep.subr.mxu0 %v428
    %2271 = vmatpush1.msra.mxu0 %v427
    %2272 = vmatprep.subr.mxu0 %v432
    %2273 = vmatpush1.msra.mxu0 %v431
    %2274 = vmatprep.subr.mxu0 %v436
    %2275 = vmatpush1.msra.mxu0 %v435
    %2276 = vmatprep.subr.mxu0 %v440
    %2277 = vmatpush1.msra.mxu0 %v439
    %2278 = vmatprep.subr.mxu0 %v444
    %2279 = vmatpush1.msra.mxu0 %v443
    %2280 = vmatprep.subr.mxu0 %v448
    %2281 = vmatpush1.msra.mxu0 %v447
    %2282 = vmatprep.subr.mxu0 %v452
    %2283 = vmatpush1.msra.mxu0 %v451
    %2284 = vmatprep.subr.mxu0 %v456
    %2285 = vmatpush1.msra.mxu0 %v455
    %2286 = vmatprep.subr.mxu0 %v460
    %2287 = vmatpush1.msra.mxu0 %v459
    %2288 = vmatprep.subr.mxu0 %v464
    %2289 = vmatpush1.msra.mxu0 %v463
    %2290 = vmatprep.subr.mxu0 %v468
    %2291 = vmatpush1.msra.mxu0 %v467
    %2292 = vmatprep.subr.mxu0 %v472
    %2293 = vmatpush1.msra.mxu0 %v471
    %2294 = vmatprep.subr.mxu0 %v476
    %2295 = vmatpush1.msra.mxu0 %v475
    %2296 = vmatprep.subr.mxu0 %v480
    %2297 = vmatpush1.msra.mxu0 %v479
    %2298 = vmatprep.subr.mxu0 %v484
    %2299 = vmatpush1.msra.mxu0 %v483
    %2300 = vmatprep.subr.mxu0 %v488
    %2301 = vmatpush1.msra.mxu0 %v487
    %2302 = vmatprep.subr.mxu0 %v492
    %2303 = vmatpush1.msra.mxu0 %v491
    %2304 = vmatprep.subr.mxu0 %v496
    %2305 = vmatpush1.msra.mxu0 %v495
    %2306 = vmatprep.subr.mxu0 %v500
    %2307 = vmatpush1.msra.mxu0 %v499
    %2308 = vmatprep.subr.mxu0 %v504
    %2309 = vmatpush1.msra.mxu0 %v503
    %2310 = vmatprep.mubr.f32.mxu0 %v2006
    %2311 = vmatmul.mubr.f32.gmra.mrb[0].mxu0 %v2174
    %v2312 = vpop.f32.mrb[0].mxu0
    %v2313 = vadd.f32 %v72, %v2312
    %v2314 = vpop.f32.mrb[0].mxu0
    %v2315 = vadd.f32 %v76, %v2314
    %2316 = vdwg.mxu0
    %v2317 = vxor.u32 %v2242, 2147483648
    %v2318 = vmul.f32 %v2317, 1.442695
    %v2319 = vpow.pop %v2318
    %v2320 = vadd.f32 %v2319, 1.0
    %v2321 = vrcp.pop %v2320
    %v2322 = vmul.f32 1.0, %v2321
    %v2323 = vxor.u32 %v2244, 2147483648
    %v2324 = vmul.f32 %v2323, 1.442695
    %v2325 = vpow.pop %v2324
    %v2326 = vadd.f32 %v2325, 1.0
    %v2327 = vrcp.pop %v2326
    %v2328 = vmul.f32 1.0, %v2327
    %v2329 = vtanh.pop %v2313
    %v2330 = vxor.u32 %v2315, 2147483648
    %v2331 = vmul.f32 %v2330, 1.442695
    %v2332 = vpow.pop %v2331
    %v2333 = vadd.f32 %v2332, 1.0
    %v2334 = vrcp.pop %v2333
    %v2335 = vmul.f32 1.0, %v2334
    %v2336 = vmul.f32 %v2328, %v2004
    %v2337 = vmul.f32 %v2322, %v2329
    %v2338 = vadd.f32 %v2336, %v2337
    %v2339 = vtanh.pop %v2338
    %v2340 = vmul.f32 %v2335, %v2339
    %s2341 = scalar_lea.vmem %s0, 48
    %v2342 = vld [vmem:[%s2341] sm:$0xff]
    %2343 = vmatprep.subr.mxu0 %v83
    %2344 = vmatpush1.msra.mxu0 %v82
    %2345 = vmatprep.subr.mxu0 %v87
    %2346 = vmatpush1.msra.mxu0 %v86
    %2347 = vmatprep.subr.mxu0 %v91
    %2348 = vmatpush1.msra.mxu0 %v90
    %2349 = vmatprep.subr.mxu0 %v95
    %2350 = vmatpush1.msra.mxu0 %v94
    %2351 = vmatprep.subr.mxu0 %v99
    %2352 = vmatpush1.msra.mxu0 %v98
    %2353 = vmatprep.subr.mxu0 %v103
    %2354 = vmatpush1.msra.mxu0 %v102
    %2355 = vmatprep.subr.mxu0 %v107
    %2356 = vmatpush1.msra.mxu0 %v106
    %2357 = vmatprep.subr.mxu0 %v111
    %2358 = vmatpush1.msra.mxu0 %v110
    %2359 = vmatprep.subr.mxu0 %v115
    %2360 = vmatpush1.msra.mxu0 %v114
    %2361 = vmatprep.subr.mxu0 %v119
    %2362 = vmatpush1.msra.mxu0 %v118
    %2363 = vmatprep.subr.mxu0 %v123
    %2364 = vmatpush1.msra.mxu0 %v122
    %2365 = vmatprep.subr.mxu0 %v127
    %2366 = vmatpush1.msra.mxu0 %v126
    %2367 = vmatprep.subr.mxu0 %v131
    %2368 = vmatpush1.msra.mxu0 %v130
    %2369 = vmatprep.subr.mxu0 %v135
    %2370 = vmatpush1.msra.mxu0 %v134
    %2371 = vmatprep.subr.mxu0 %v139
    %2372 = vmatpush1.msra.mxu0 %v138
    %2373 = vmatprep.subr.mxu0 %v143
    %2374 = vmatpush1.msra.mxu0 %v142
    %2375 = vmatprep.subr.mxu0 %v147
    %2376 = vmatpush1.msra.mxu0 %v146
    %2377 = vmatprep.subr.mxu0 %v151
    %2378 = vmatpush1.msra.mxu0 %v150
    %2379 = vmatprep.subr.mxu0 %v155
    %2380 = vmatpush1.msra.mxu0 %v154
    %2381 = vmatprep.subr.mxu0 %v159
    %2382 = vmatpush1.msra.mxu0 %v158
    %2383 = vmatprep.subr.mxu0 %v163
    %2384 = vmatpush1.msra.mxu0 %v162
    %2385 = vmatprep.subr.mxu0 %v167
    %2386 = vmatpush1.msra.mxu0 %v166
    %2387 = vmatprep.subr.mxu0 %v171
    %2388 = vmatpush1.msra.mxu0 %v170
    %2389 = vmatprep.subr.mxu0 %v175
    %2390 = vmatpush1.msra.mxu0 %v174
    %2391 = vmatprep.subr.mxu0 %v179
    %2392 = vmatpush1.msra.mxu0 %v178
    %2393 = vmatprep.subr.mxu0 %v183
    %2394 = vmatpush1.msra.mxu0 %v182
    %2395 = vmatprep.subr.mxu0 %v187
    %2396 = vmatpush1.msra.mxu0 %v186
    %2397 = vmatprep.subr.mxu0 %v191
    %2398 = vmatpush1.msra.mxu0 %v190
    %2399 = vmatprep.subr.mxu0 %v195
    %2400 = vmatpush1.msra.mxu0 %v194
    %2401 = vmatprep.subr.mxu0 %v199
    %2402 = vmatpush1.msra.mxu0 %v198
    %2403 = vmatprep.subr.mxu0 %v203
    %2404 = vmatpush1.msra.mxu0 %v202
    %2405 = vmatprep.subr.mxu0 %v207
    %2406 = vmatpush1.msra.mxu0 %v206
    %2407 = vmatprep.mubr.f32.mxu0 %v2174
    %2408 = vmatmul.mubr.f32.gmra.mrb[0].mxu0 %v2342
    %v2409 = vpop.f32.mrb[0].mxu0
    %v2410 = vadd.f32 %v41, %v2409
    %v2411 = vpop.f32.mrb[0].mxu0
    %v2412 = vadd.f32 %v45, %v2411
    %2413 = vdwg.mxu0
    %2414 = vmatprep.subr.mxu0 %v85
    %2415 = vmatpush1.msra.mxu0 %v84
    %2416 = vmatprep.subr.mxu0 %v89
    %2417 = vmatpush1.msra.mxu0 %v88
    %2418 = vmatprep.subr.mxu0 %v93
    %2419 = vmatpush1.msra.mxu0 %v92
    %2420 = vmatprep.subr.mxu0 %v97
    %2421 = vmatpush1.msra.mxu0 %v96
    %2422 = vmatprep.subr.mxu0 %v101
    %2423 = vmatpush1.msra.mxu0 %v100
    %2424 = vmatprep.subr.mxu0 %v105
    %2425 = vmatpush1.msra.mxu0 %v104
    %2426 = vmatprep.subr.mxu0 %v109
    %2427 = vmatpush1.msra.mxu0 %v108
    %2428 = vmatprep.subr.mxu0 %v113
    %2429 = vmatpush1.msra.mxu0 %v112
    %2430 = vmatprep.subr.mxu0 %v117
    %2431 = vmatpush1.msra.mxu0 %v116
    %2432 = vmatprep.subr.mxu0 %v121
    %2433 = vmatpush1.msra.mxu0 %v120
    %2434 = vmatprep.subr.mxu0 %v125
    %2435 = vmatpush1.msra.mxu0 %v124
    %2436 = vmatprep.subr.mxu0 %v129
    %2437 = vmatpush1.msra.mxu0 %v128
    %2438 = vmatprep.subr.mxu0 %v133
    %2439 = vmatpush1.msra.mxu0 %v132
    %2440 = vmatprep.subr.mxu0 %v137
    %2441 = vmatpush1.msra.mxu0 %v136
    %2442 = vmatprep.subr.mxu0 %v141
    %2443 = vmatpush1.msra.mxu0 %v140
    %2444 = vmatprep.subr.mxu0 %v145
    %2445 = vmatpush1.msra.mxu0 %v144
    %2446 = vmatprep.subr.mxu0 %v149
    %2447 = vmatpush1.msra.mxu0 %v148
    %2448 = vmatprep.subr.mxu0 %v153
    %2449 = vmatpush1.msra.mxu0 %v152
    %2450 = vmatprep.subr.mxu0 %v157
    %2451 = vmatpush1.msra.mxu0 %v156
    %2452 = vmatprep.subr.mxu0 %v161
    %2453 = vmatpush1.msra.mxu0 %v160
    %2454 = vmatprep.subr.mxu0 %v165
    %2455 = vmatpush1.msra.mxu0 %v164
    %2456 = vmatprep.subr.mxu0 %v169
    %2457 = vmatpush1.msra.mxu0 %v168
    %2458 = vmatprep.subr.mxu0 %v173
    %2459 = vmatpush1.msra.mxu0 %v172
    %2460 = vmatprep.subr.mxu0 %v177
    %2461 = vmatpush1.msra.mxu0 %v176
    %2462 = vmatprep.subr.mxu0 %v181
    %2463 = vmatpush1.msra.mxu0 %v180
    %2464 = vmatprep.subr.mxu0 %v185
    %2465 = vmatpush1.msra.mxu0 %v184
    %2466 = vmatprep.subr.mxu0 %v189
    %2467 = vmatpush1.msra.mxu0 %v188
    %2468 = vmatprep.subr.mxu0 %v193
    %2469 = vmatpush1.msra.mxu0 %v192
    %2470 = vmatprep.subr.mxu0 %v197
    %2471 = vmatpush1.msra.mxu0 %v196
    %2472 = vmatprep.subr.mxu0 %v201
    %2473 = vmatpush1.msra.mxu0 %v200
    %2474 = vmatprep.subr.mxu0 %v205
    %2475 = vmatpush1.msra.mxu0 %v204
    %2476 = vmatprep.subr.mxu0 %v209
    %2477 = vmatpush1.msra.mxu0 %v208
    %2478 = vmatprep.mubr.f32.mxu0 %v2174
    %2479 = vmatmul.mubr.f32.gmra.mrb[0].mxu0 %v2342
    %v2480 = vpop.f32.mrb[0].mxu0
    %v2481 = vadd.f32 %v49, %v2480
    %v2482 = vpop.f32.mrb[0].mxu0
    %v2483 = vadd.f32 %v53, %v2482
    %2484 = vdwg.mxu0
    %v2485 = vxor.u32 %v2410, 2147483648
    %v2486 = vmul.f32 %v2485, 1.442695
    %v2487 = vpow.pop %v2486
    %v2488 = vadd.f32 %v2487, 1.0
    %v2489 = vrcp.pop %v2488
    %v2490 = vmul.f32 1.0, %v2489
    %v2491 = vxor.u32 %v2412, 2147483648
    %v2492 = vmul.f32 %v2491, 1.442695
    %v2493 = vpow.pop %v2492
    %v2494 = vadd.f32 %v2493, 1.0
    %v2495 = vrcp.pop %v2494
    %v2496 = vmul.f32 1.0, %v2495
    %v2497 = vtanh.pop %v2481
    %v2498 = vxor.u32 %v2483, 2147483648
    %v2499 = vmul.f32 %v2498, 1.442695
    %v2500 = vpow.pop %v2499
    %v2501 = vadd.f32 %v2500, 1.0
    %v2502 = vrcp.pop %v2501
    %v2503 = vmul.f32 1.0, %v2502
    %v2504 = vmul.f32 %v2496, %v2172
    %v2505 = vmul.f32 %v2490, %v2497
    %v2506 = vadd.f32 %v2504, %v2505
    %v2507 = vtanh.pop %v2506
    %v2508 = vmul.f32 %v2503, %v2507
    %2509 = vmatprep.subr.mxu0 %v378
    %2510 = vmatpush1.msra.mxu0 %v377
    %2511 = vmatprep.subr.mxu0 %v382
    %2512 = vmatpush1.msra.mxu0 %v381
    %2513 = vmatprep.subr.mxu0 %v386
    %2514 = vmatpush1.msra.mxu0 %v385
    %2515 = vmatprep.subr.mxu0 %v390
    %2516 = vmatpush1.msra.mxu0 %v389
    %2517 = vmatprep.subr.mxu0 %v394
    %2518 = vmatpush1.msra.mxu0 %v393
    %2519 = vmatprep.subr.mxu0 %v398
    %2520 = vmatpush1.msra.mxu0 %v397
    %2521 = vmatprep.subr.mxu0 %v402
    %2522 = vmatpush1.msra.mxu0 %v401
    %2523 = vmatprep.subr.mxu0 %v406
    %2524 = vmatpush1.msra.mxu0 %v405
    %2525 = vmatprep.subr.mxu0 %v410
    %2526 = vmatpush1.msra.mxu0 %v409
    %2527 = vmatprep.subr.mxu0 %v414
    %2528 = vmatpush1.msra.mxu0 %v413
    %2529 = vmatprep.subr.mxu0 %v418
    %2530 = vmatpush1.msra.mxu0 %v417
    %2531 = vmatprep.subr.mxu0 %v422
    %2532 = vmatpush1.msra.mxu0 %v421
    %2533 = vmatprep.subr.mxu0 %v426
    %2534 = vmatpush1.msra.mxu0 %v425
    %2535 = vmatprep.subr.mxu0 %v430
    %2536 = vmatpush1.msra.mxu0 %v429
    %2537 = vmatprep.subr.mxu0 %v434
    %2538 = vmatpush1.msra.mxu0 %v433
    %2539 = vmatprep.subr.mxu0 %v438
    %2540 = vmatpush1.msra.mxu0 %v437
    %2541 = vmatprep.subr.mxu0 %v442
    %2542 = vmatpush1.msra.mxu0 %v441
    %2543 = vmatprep.subr.mxu0 %v446
    %2544 = vmatpush1.msra.mxu0 %v445
    %2545 = vmatprep.subr.mxu0 %v450
    %2546 = vmatpush1.msra.mxu0 %v449
    %2547 = vmatprep.subr.mxu0 %v454
    %2548 = vmatpush1.msra.mxu0 %v453
    %2549 = vmatprep.subr.mxu0 %v458
    %2550 = vmatpush1.msra.mxu0 %v457
    %2551 = vmatprep.subr.mxu0 %v462
    %2552 = vmatpush1.msra.mxu0 %v461
    %2553 = vmatprep.subr.mxu0 %v466
    %2554 = vmatpush1.msra.mxu0 %v465
    %2555 = vmatprep.subr.mxu0 %v470
    %2556 = vmatpush1.msra.mxu0 %v469
    %2557 = vmatprep.subr.mxu0 %v474
    %2558 = vmatpush1.msra.mxu0 %v473
    %2559 = vmatprep.subr.mxu0 %v478
    %2560 = vmatpush1.msra.mxu0 %v477
    %2561 = vmatprep.subr.mxu0 %v482
    %2562 = vmatpush1.msra.mxu0 %v481
    %2563 = vmatprep.subr.mxu0 %v486
    %2564 = vmatpush1.msra.mxu0 %v485
    %2565 = vmatprep.subr.mxu0 %v490
    %2566 = vmatpush1.msra.mxu0 %v489
    %2567 = vmatprep.subr.mxu0 %v494
    %2568 = vmatpush1.msra.mxu0 %v493
    %2569 = vmatprep.subr.mxu0 %v498
    %2570 = vmatpush1.msra.mxu0 %v497
    %2571 = vmatprep.subr.mxu0 %v502
    %2572 = vmatpush1.msra.mxu0 %v501
    %2573 = vmatprep.mubr.f32.mxu0 %v2340
    %2574 = vmatmul.mubr.f32.gmra.mrb[0].mxu0 %v2508
    %v2575 = vpop.f32.mrb[0].mxu0
    %v2576 = vadd.f32 %v64, %v2575
    %v2577 = vpop.f32.mrb[0].mxu0
    %v2578 = vadd.f32 %v68, %v2577
    %2579 = vdwg.mxu0
    %2580 = vmatprep.subr.mxu0 %v380
    %2581 = vmatpush1.msra.mxu0 %v379
    %2582 = vmatprep.subr.mxu0 %v384
    %2583 = vmatpush1.msra.mxu0 %v383
    %2584 = vmatprep.subr.mxu0 %v388
    %2585 = vmatpush1.msra.mxu0 %v387
    %2586 = vmatprep.subr.mxu0 %v392
    %2587 = vmatpush1.msra.mxu0 %v391
    %2588 = vmatprep.subr.mxu0 %v396
    %2589 = vmatpush1.msra.mxu0 %v395
    %2590 = vmatprep.subr.mxu0 %v400
    %2591 = vmatpush1.msra.mxu0 %v399
    %2592 = vmatprep.subr.mxu0 %v404
    %2593 = vmatpush1.msra.mxu0 %v403
    %2594 = vmatprep.subr.mxu0 %v408
    %2595 = vmatpush1.msra.mxu0 %v407
    %2596 = vmatprep.subr.mxu0 %v412
    %2597 = vmatpush1.msra.mxu0 %v411
    %2598 = vmatprep.subr.mxu0 %v416
    %2599 = vmatpush1.msra.mxu0 %v415
    %2600 = vmatprep.subr.mxu0 %v420
    %2601 = vmatpush1.msra.mxu0 %v419
    %2602 = vmatprep.subr.mxu0 %v424
    %2603 = vmatpush1.msra.mxu0 %v423
    %2604 = vmatprep.subr.mxu0 %v428
    %2605 = vmatpush1.msra.mxu0 %v427
    %2606 = vmatprep.subr.mxu0 %v432
    %2607 = vmatpush1.msra.mxu0 %v431
    %2608 = vmatprep.subr.mxu0 %v436
    %2609 = vmatpush1.msra.mxu0 %v435
    %2610 = vmatprep.subr.mxu0 %v440
    %2611 = vmatpush1.msra.mxu0 %v439
    %2612 = vmatprep.subr.mxu0 %v444
    %2613 = vmatpush1.msra.mxu0 %v443
    %2614 = vmatprep.subr.mxu0 %v448
    %2615 = vmatpush1.msra.mxu0 %v447
    %2616 = vmatprep.subr.mxu0 %v452
    %2617 = vmatpush1.msra.mxu0 %v451
    %2618 = vmatprep.subr.mxu0 %v456
    %2619 = vmatpush1.msra.mxu0 %v455
    %2620 = vmatprep.subr.mxu0 %v460
    %2621 = vmatpush1.msra.mxu0 %v459
    %2622 = vmatprep.subr.mxu0 %v464
    %2623 = vmatpush1.msra.mxu0 %v463
    %2624 = vmatprep.subr.mxu0 %v468
    %2625 = vmatpush1.msra.mxu0 %v467
    %2626 = vmatprep.subr.mxu0 %v472
    %2627 = vmatpush1.msra.mxu0 %v471
    %2628 = vmatprep.subr.mxu0 %v476
    %2629 = vmatpush1.msra.mxu0 %v475
    %2630 = vmatprep.subr.mxu0 %v480
    %2631 = vmatpush1.msra.mxu0 %v479
    %2632 = vmatprep.subr.mxu0 %v484
    %2633 = vmatpush1.msra.mxu0 %v483
    %2634 = vmatprep.subr.mxu0 %v488
    %2635 = vmatpush1.msra.mxu0 %v487
    %2636 = vmatprep.subr.mxu0 %v492
    %2637 = vmatpush1.msra.mxu0 %v491
    %2638 = vmatprep.subr.mxu0 %v496
    %2639 = vmatpush1.msra.mxu0 %v495
    %2640 = vmatprep.subr.mxu0 %v500
    %2641 = vmatpush1.msra.mxu0 %v499
    %2642 = vmatprep.subr.mxu0 %v504
    %2643 = vmatpush1.msra.mxu0 %v503
    %2644 = vmatprep.mubr.f32.mxu0 %v2340
    %2645 = vmatmul.mubr.f32.gmra.mrb[0].mxu0 %v2508
    %v2646 = vpop.f32.mrb[0].mxu0
    %v2647 = vadd.f32 %v72, %v2646
    %v2648 = vpop.f32.mrb[0].mxu0
    %v2649 = vadd.f32 %v76, %v2648
    %2650 = vdwg.mxu0
    %v2651 = vxor.u32 %v2576, 2147483648
    %v2652 = vmul.f32 %v2651, 1.442695
    %v2653 = vpow.pop %v2652
    %v2654 = vadd.f32 %v2653, 1.0
    %v2655 = vrcp.pop %v2654
    %v2656 = vmul.f32 1.0, %v2655
    %v2657 = vxor.u32 %v2578, 2147483648
    %v2658 = vmul.f32 %v2657, 1.442695
    %v2659 = vpow.pop %v2658
    %v2660 = vadd.f32 %v2659, 1.0
    %v2661 = vrcp.pop %v2660
    %v2662 = vmul.f32 1.0, %v2661
    %v2663 = vtanh.pop %v2647
    %v2664 = vxor.u32 %v2649, 2147483648
    %v2665 = vmul.f32 %v2664, 1.442695
    %v2666 = vpow.pop %v2665
    %v2667 = vadd.f32 %v2666, 1.0
    %v2668 = vrcp.pop %v2667
    %v2669 = vmul.f32 1.0, %v2668
    %v2670 = vmul.f32 %v2662, %v2338
    %v2671 = vmul.f32 %v2656, %v2663
    %v2672 = vadd.f32 %v2670, %v2671
    %v2673 = vtanh.pop %v2672
    %v2674 = vmul.f32 %v2669, %v2673
    %s2675 = scalar_lea.vmem %s0, 56
    %v2676 = vld [vmem:[%s2675] sm:$0xff]
    %2677 = vmatprep.subr.mxu0 %v83
    %2678 = vmatpush1.msra.mxu0 %v82
    %2679 = vmatprep.subr.mxu0 %v87
    %2680 = vmatpush1.msra.mxu0 %v86
    %2681 = vmatprep.subr.mxu0 %v91
    %2682 = vmatpush1.msra.mxu0 %v90
    %2683 = vmatprep.subr.mxu0 %v95
    %2684 = vmatpush1.msra.mxu0 %v94
    %2685 = vmatprep.subr.mxu0 %v99
    %2686 = vmatpush1.msra.mxu0 %v98
    %2687 = vmatprep.subr.mxu0 %v103
    %2688 = vmatpush1.msra.mxu0 %v102
    %2689 = vmatprep.subr.mxu0 %v107
    %2690 = vmatpush1.msra.mxu0 %v106
    %2691 = vmatprep.subr.mxu0 %v111
    %2692 = vmatpush1.msra.mxu0 %v110
    %2693 = vmatprep.subr.mxu0 %v115
    %2694 = vmatpush1.msra.mxu0 %v114
    %2695 = vmatprep.subr.mxu0 %v119
    %2696 = vmatpush1.msra.mxu0 %v118
    %2697 = vmatprep.subr.mxu0 %v123
    %2698 = vmatpush1.msra.mxu0 %v122
    %2699 = vmatprep.subr.mxu0 %v127
    %2700 = vmatpush1.msra.mxu0 %v126
    %2701 = vmatprep.subr.mxu0 %v131
    %2702 = vmatpush1.msra.mxu0 %v130
    %2703 = vmatprep.subr.mxu0 %v135
    %2704 = vmatpush1.msra.mxu0 %v134
    %2705 = vmatprep.subr.mxu0 %v139
    %2706 = vmatpush1.msra.mxu0 %v138
    %2707 = vmatprep.subr.mxu0 %v143
    %2708 = vmatpush1.msra.mxu0 %v142
    %2709 = vmatprep.subr.mxu0 %v147
    %2710 = vmatpush1.msra.mxu0 %v146
    %2711 = vmatprep.subr.mxu0 %v151
    %2712 = vmatpush1.msra.mxu0 %v150
    %2713 = vmatprep.subr.mxu0 %v155
    %2714 = vmatpush1.msra.mxu0 %v154
    %2715 = vmatprep.subr.mxu0 %v159
    %2716 = vmatpush1.msra.mxu0 %v158
    %2717 = vmatprep.subr.mxu0 %v163
    %2718 = vmatpush1.msra.mxu0 %v162
    %2719 = vmatprep.subr.mxu0 %v167
    %2720 = vmatpush1.msra.mxu0 %v166
    %2721 = vmatprep.subr.mxu0 %v171
    %2722 = vmatpush1.msra.mxu0 %v170
    %2723 = vmatprep.subr.mxu0 %v175
    %2724 = vmatpush1.msra.mxu0 %v174
    %2725 = vmatprep.subr.mxu0 %v179
    %2726 = vmatpush1.msra.mxu0 %v178
    %2727 = vmatprep.subr.mxu0 %v183
    %2728 = vmatpush1.msra.mxu0 %v182
    %2729 = vmatprep.subr.mxu0 %v187
    %2730 = vmatpush1.msra.mxu0 %v186
    %2731 = vmatprep.subr.mxu0 %v191
    %2732 = vmatpush1.msra.mxu0 %v190
    %2733 = vmatprep.subr.mxu0 %v195
    %2734 = vmatpush1.msra.mxu0 %v194
    %2735 = vmatprep.subr.mxu0 %v199
    %2736 = vmatpush1.msra.mxu0 %v198
    %2737 = vmatprep.subr.mxu0 %v203
    %2738 = vmatpush1.msra.mxu0 %v202
    %2739 = vmatprep.subr.mxu0 %v207
    %2740 = vmatpush1.msra.mxu0 %v206
    %2741 = vmatprep.mubr.f32.mxu0 %v2508
    %2742 = vmatmul.mubr.f32.gmra.mrb[0].mxu0 %v2676
    %v2743 = vpop.f32.mrb[0].mxu0
    %v2744 = vadd.f32 %v41, %v2743
    %v2745 = vpop.f32.mrb[0].mxu0
    %v2746 = vadd.f32 %v45, %v2745
    %2747 = vdwg.mxu0
    %2748 = vmatprep.subr.mxu0 %v85
    %2749 = vmatpush1.msra.mxu0 %v84
    %2750 = vmatprep.subr.mxu0 %v89
    %2751 = vmatpush1.msra.mxu0 %v88
    %2752 = vmatprep.subr.mxu0 %v93
    %2753 = vmatpush1.msra.mxu0 %v92
    %2754 = vmatprep.subr.mxu0 %v97
    %2755 = vmatpush1.msra.mxu0 %v96
    %2756 = vmatprep.subr.mxu0 %v101
    %2757 = vmatpush1.msra.mxu0 %v100
    %2758 = vmatprep.subr.mxu0 %v105
    %2759 = vmatpush1.msra.mxu0 %v104
    %2760 = vmatprep.subr.mxu0 %v109
    %2761 = vmatpush1.msra.mxu0 %v108
    %2762 = vmatprep.subr.mxu0 %v113
    %2763 = vmatpush1.msra.mxu0 %v112
    %2764 = vmatprep.subr.mxu0 %v117
    %2765 = vmatpush1.msra.mxu0 %v116
    %2766 = vmatprep.subr.mxu0 %v121
    %2767 = vmatpush1.msra.mxu0 %v120
    %2768 = vmatprep.subr.mxu0 %v125
    %2769 = vmatpush1.msra.mxu0 %v124
    %2770 = vmatprep.subr.mxu0 %v129
    %2771 = vmatpush1.msra.mxu0 %v128
    %2772 = vmatprep.subr.mxu0 %v133
    %2773 = vmatpush1.msra.mxu0 %v132
    %2774 = vmatprep.subr.mxu0 %v137
    %2775 = vmatpush1.msra.mxu0 %v136
    %2776 = vmatprep.subr.mxu0 %v141
    %2777 = vmatpush1.msra.mxu0 %v140
    %2778 = vmatprep.subr.mxu0 %v145
    %2779 = vmatpush1.msra.mxu0 %v144
    %2780 = vmatprep.subr.mxu0 %v149
    %2781 = vmatpush1.msra.mxu0 %v148
    %2782 = vmatprep.subr.mxu0 %v153
    %2783 = vmatpush1.msra.mxu0 %v152
    %2784 = vmatprep.subr.mxu0 %v157
    %2785 = vmatpush1.msra.mxu0 %v156
    %2786 = vmatprep.subr.mxu0 %v161
    %2787 = vmatpush1.msra.mxu0 %v160
    %2788 = vmatprep.subr.mxu0 %v165
    %2789 = vmatpush1.msra.mxu0 %v164
    %2790 = vmatprep.subr.mxu0 %v169
    %2791 = vmatpush1.msra.mxu0 %v168
    %2792 = vmatprep.subr.mxu0 %v173
    %2793 = vmatpush1.msra.mxu0 %v172
    %2794 = vmatprep.subr.mxu0 %v177
    %2795 = vmatpush1.msra.mxu0 %v176
    %2796 = vmatprep.subr.mxu0 %v181
    %2797 = vmatpush1.msra.mxu0 %v180
    %2798 = vmatprep.subr.mxu0 %v185
    %2799 = vmatpush1.msra.mxu0 %v184
    %2800 = vmatprep.subr.mxu0 %v189
    %2801 = vmatpush1.msra.mxu0 %v188
    %2802 = vmatprep.subr.mxu0 %v193
    %2803 = vmatpush1.msra.mxu0 %v192
    %2804 = vmatprep.subr.mxu0 %v197
    %2805 = vmatpush1.msra.mxu0 %v196
    %2806 = vmatprep.subr.mxu0 %v201
    %2807 = vmatpush1.msra.mxu0 %v200
    %2808 = vmatprep.subr.mxu0 %v205
    %2809 = vmatpush1.msra.mxu0 %v204
    %2810 = vmatprep.subr.mxu0 %v209
    %2811 = vmatpush1.msra.mxu0 %v208
    %2812 = vmatprep.mubr.f32.mxu0 %v2508
    %2813 = vmatmul.mubr.f32.gmra.mrb[0].mxu0 %v2676
    %v2814 = vpop.f32.mrb[0].mxu0
    %v2815 = vadd.f32 %v49, %v2814
    %v2816 = vpop.f32.mrb[0].mxu0
    %v2817 = vadd.f32 %v53, %v2816
    %2818 = vdwg.mxu0
    %v2819 = vxor.u32 %v2744, 2147483648
    %v2820 = vmul.f32 %v2819, 1.442695
    %v2821 = vpow.pop %v2820
    %v2822 = vadd.f32 %v2821, 1.0
    %v2823 = vrcp.pop %v2822
    %v2824 = vmul.f32 1.0, %v2823
    %v2825 = vxor.u32 %v2746, 2147483648
    %v2826 = vmul.f32 %v2825, 1.442695
    %v2827 = vpow.pop %v2826
    %v2828 = vadd.f32 %v2827, 1.0
    %v2829 = vrcp.pop %v2828
    %v2830 = vmul.f32 1.0, %v2829
    %v2831 = vtanh.pop %v2815
    %v2832 = vxor.u32 %v2817, 2147483648
    %v2833 = vmul.f32 %v2832, 1.442695
    %v2834 = vpow.pop %v2833
    %v2835 = vadd.f32 %v2834, 1.0
    %v2836 = vrcp.pop %v2835
    %v2837 = vmul.f32 1.0, %v2836
    %v2838 = vmul.f32 %v2830, %v2506
    %v2839 = vmul.f32 %v2824, %v2831
    %v2840 = vadd.f32 %v2838, %v2839
    %v2841 = vtanh.pop %v2840
    %v2842 = vmul.f32 %v2837, %v2841
    %2843 = vmatprep.subr.mxu0 %v378
    %2844 = vmatpush1.msra.mxu0 %v377
    %2845 = vmatprep.subr.mxu0 %v382
    %2846 = vmatpush1.msra.mxu0 %v381
    %2847 = vmatprep.subr.mxu0 %v386
    %2848 = vmatpush1.msra.mxu0 %v385
    %2849 = vmatprep.subr.mxu0 %v390
    %2850 = vmatpush1.msra.mxu0 %v389
    %2851 = vmatprep.subr.mxu0 %v394
    %2852 = vmatpush1.msra.mxu0 %v393
    %2853 = vmatprep.subr.mxu0 %v398
    %2854 = vmatpush1.msra.mxu0 %v397
    %2855 = vmatprep.subr.mxu0 %v402
    %2856 = vmatpush1.msra.mxu0 %v401
    %2857 = vmatprep.subr.mxu0 %v406
    %2858 = vmatpush1.msra.mxu0 %v405
    %2859 = vmatprep.subr.mxu0 %v410
    %2860 = vmatpush1.msra.mxu0 %v409
    %2861 = vmatprep.subr.mxu0 %v414
    %2862 = vmatpush1.msra.mxu0 %v413
    %2863 = vmatprep.subr.mxu0 %v418
    %2864 = vmatpush1.msra.mxu0 %v417
    %2865 = vmatprep.subr.mxu0 %v422
    %2866 = vmatpush1.msra.mxu0 %v421
    %2867 = vmatprep.subr.mxu0 %v426
    %2868 = vmatpush1.msra.mxu0 %v425
    %2869 = vmatprep.subr.mxu0 %v430
    %2870 = vmatpush1.msra.mxu0 %v429
    %2871 = vmatprep.subr.mxu0 %v434
    %2872 = vmatpush1.msra.mxu0 %v433
    %2873 = vmatprep.subr.mxu0 %v438
    %2874 = vmatpush1.msra.mxu0 %v437
    %2875 = vmatprep.subr.mxu0 %v442
    %2876 = vmatpush1.msra.mxu0 %v441
    %2877 = vmatprep.subr.mxu0 %v446
    %2878 = vmatpush1.msra.mxu0 %v445
    %2879 = vmatprep.subr.mxu0 %v450
    %2880 = vmatpush1.msra.mxu0 %v449
    %2881 = vmatprep.subr.mxu0 %v454
    %2882 = vmatpush1.msra.mxu0 %v453
    %2883 = vmatprep.subr.mxu0 %v458
    %2884 = vmatpush1.msra.mxu0 %v457
    %2885 = vmatprep.subr.mxu0 %v462
    %2886 = vmatpush1.msra.mxu0 %v461
    %2887 = vmatprep.subr.mxu0 %v466
    %2888 = vmatpush1.msra.mxu0 %v465
    %2889 = vmatprep.subr.mxu0 %v470
    %2890 = vmatpush1.msra.mxu0 %v469
    %2891 = vmatprep.subr.mxu0 %v474
    %2892 = vmatpush1.msra.mxu0 %v473
    %2893 = vmatprep.subr.mxu0 %v478
    %2894 = vmatpush1.msra.mxu0 %v477
    %2895 = vmatprep.subr.mxu0 %v482
    %2896 = vmatpush1.msra.mxu0 %v481
    %2897 = vmatprep.subr.mxu0 %v486
    %2898 = vmatpush1.msra.mxu0 %v485
    %2899 = vmatprep.subr.mxu0 %v490
    %2900 = vmatpush1.msra.mxu0 %v489
    %2901 = vmatprep.subr.mxu0 %v494
    %2902 = vmatpush1.msra.mxu0 %v493
    %2903 = vmatprep.subr.mxu0 %v498
    %2904 = vmatpush1.msra.mxu0 %v497
    %2905 = vmatprep.subr.mxu0 %v502
    %2906 = vmatpush1.msra.mxu0 %v501
    %2907 = vmatprep.mubr.f32.mxu0 %v2674
    %2908 = vmatmul.mubr.f32.gmra.mrb[0].mxu0 %v2842
    %v2909 = vpop.f32.mrb[0].mxu0
    %v2910 = vadd.f32 %v64, %v2909
    %v2911 = vpop.f32.mrb[0].mxu0
    %v2912 = vadd.f32 %v68, %v2911
    %2913 = vdwg.mxu0
    %2914 = vmatprep.subr.mxu0 %v380
    %2915 = vmatpush1.msra.mxu0 %v379
    %2916 = vmatprep.subr.mxu0 %v384
    %2917 = vmatpush1.msra.mxu0 %v383
    %2918 = vmatprep.subr.mxu0 %v388
    %2919 = vmatpush1.msra.mxu0 %v387
    %2920 = vmatprep.subr.mxu0 %v392
    %2921 = vmatpush1.msra.mxu0 %v391
    %2922 = vmatprep.subr.mxu0 %v396
    %2923 = vmatpush1.msra.mxu0 %v395
    %2924 = vmatprep.subr.mxu0 %v400
    %2925 = vmatpush1.msra.mxu0 %v399
    %2926 = vmatprep.subr.mxu0 %v404
    %2927 = vmatpush1.msra.mxu0 %v403
    %2928 = vmatprep.subr.mxu0 %v408
    %2929 = vmatpush1.msra.mxu0 %v407
    %2930 = vmatprep.subr.mxu0 %v412
    %2931 = vmatpush1.msra.mxu0 %v411
    %2932 = vmatprep.subr.mxu0 %v416
    %2933 = vmatpush1.msra.mxu0 %v415
    %2934 = vmatprep.subr.mxu0 %v420
    %2935 = vmatpush1.msra.mxu0 %v419
    %2936 = vmatprep.subr.mxu0 %v424
    %2937 = vmatpush1.msra.mxu0 %v423
    %2938 = vmatprep.subr.mxu0 %v428
    %2939 = vmatpush1.msra.mxu0 %v427
    %2940 = vmatprep.subr.mxu0 %v432
    %2941 = vmatpush1.msra.mxu0 %v431
    %2942 = vmatprep.subr.mxu0 %v436
    %2943 = vmatpush1.msra.mxu0 %v435
    %2944 = vmatprep.subr.mxu0 %v440
    %2945 = vmatpush1.msra.mxu0 %v439
    %2946 = vmatprep.subr.mxu0 %v444
    %2947 = vmatpush1.msra.mxu0 %v443
    %2948 = vmatprep.subr.mxu0 %v448
    %2949 = vmatpush1.msra.mxu0 %v447
    %2950 = vmatprep.subr.mxu0 %v452
    %2951 = vmatpush1.msra.mxu0 %v451
    %2952 = vmatprep.subr.mxu0 %v456
    %2953 = vmatpush1.msra.mxu0 %v455
    %2954 = vmatprep.subr.mxu0 %v460
    %2955 = vmatpush1.msra.mxu0 %v459
    %2956 = vmatprep.subr.mxu0 %v464
    %2957 = vmatpush1.msra.mxu0 %v463
    %2958 = vmatprep.subr.mxu0 %v468
    %2959 = vmatpush1.msra.mxu0 %v467
    %2960 = vmatprep.subr.mxu0 %v472
    %2961 = vmatpush1.msra.mxu0 %v471
    %2962 = vmatprep.subr.mxu0 %v476
    %2963 = vmatpush1.msra.mxu0 %v475
    %2964 = vmatprep.subr.mxu0 %v480
    %2965 = vmatpush1.msra.mxu0 %v479
    %2966 = vmatprep.subr.mxu0 %v484
    %2967 = vmatpush1.msra.mxu0 %v483
    %2968 = vmatprep.subr.mxu0 %v488
    %2969 = vmatpush1.msra.mxu0 %v487
    %2970 = vmatprep.subr.mxu0 %v492
    %2971 = vmatpush1.msra.mxu0 %v491
    %2972 = vmatprep.subr.mxu0 %v496
    %2973 = vmatpush1.msra.mxu0 %v495
    %2974 = vmatprep.subr.mxu0 %v500
    %2975 = vmatpush1.msra.mxu0 %v499
    %2976 = vmatprep.subr.mxu0 %v504
    %2977 = vmatpush1.msra.mxu0 %v503
    %2978 = vmatprep.mubr.f32.mxu0 %v2674
    %2979 = vmatmul.mubr.f32.gmra.mrb[0].mxu0 %v2842
    %v2980 = vpop.f32.mrb[0].mxu0
    %v2981 = vadd.f32 %v72, %v2980
    %v2982 = vpop.f32.mrb[0].mxu0
    %v2983 = vadd.f32 %v76, %v2982
    %2984 = vdwg.mxu0
    %v2985 = vxor.u32 %v2910, 2147483648
    %v2986 = vmul.f32 %v2985, 1.442695
    %v2987 = vpow.pop %v2986
    %v2988 = vadd.f32 %v2987, 1.0
    %v2989 = vrcp.pop %v2988
    %v2990 = vmul.f32 1.0, %v2989
    %v2991 = vxor.u32 %v2912, 2147483648
    %v2992 = vmul.f32 %v2991, 1.442695
    %v2993 = vpow.pop %v2992
    %v2994 = vadd.f32 %v2993, 1.0
    %v2995 = vrcp.pop %v2994
    %v2996 = vmul.f32 1.0, %v2995
    %v2997 = vtanh.pop %v2981
    %v2998 = vxor.u32 %v2983, 2147483648
    %v2999 = vmul.f32 %v2998, 1.442695
    %v3000 = vpow.pop %v2999
    %v3001 = vadd.f32 %v3000, 1.0
    %v3002 = vrcp.pop %v3001
    %v3003 = vmul.f32 1.0, %v3002
    %v3004 = vmul.f32 %v2996, %v2672
    %v3005 = vmul.f32 %v2990, %v2997
    %v3006 = vadd.f32 %v3004, %v3005
    %v3007 = vtanh.pop %v3006
    %v3008 = vmul.f32 %v3003, %v3007
    %v3009 = vld [vmem:[%s3] sm:$0xff]
    %v3010 = vld [vmem:[%s3 + $0x8] sm:$0xff]
    %v3011 = vld [vmem:[%s3 + $0x10] sm:$0xff]
    %v3012 = vld [vmem:[%s3 + $0x18] sm:$0xff]
    %v3013 = vld [vmem:[%s3 + $0x20] sm:$0xff]
    %v3014 = vld [vmem:[%s3 + $0x28] sm:$0xff]
    %v3015 = vld [vmem:[%s3 + $0x30] sm:$0xff]
    %v3016 = vld [vmem:[%s3 + $0x38] sm:$0xff]
    %v3017 = vld [vmem:[%s3 + $0x40] sm:$0xff]
    %v3018 = vld [vmem:[%s3 + $0x48] sm:$0xff]
    %v3019 = vld [vmem:[%s3 + $0x50] sm:$0xff]
    %v3020 = vld [vmem:[%s3 + $0x58] sm:$0xff]
    %v3021 = vld [vmem:[%s3 + $0x60] sm:$0xff]
    %v3022 = vld [vmem:[%s3 + $0x68] sm:$0xff]
    %v3023 = vld [vmem:[%s3 + $0x70] sm:$0xff]
    %v3024 = vld [vmem:[%s3 + $0x78] sm:$0xff]
    %v3025 = vld [vmem:[#allocation2] sm:$0x1]
    %v3027 = vlaneseq
    %v3028 = vshrl.u32 %v3027, 7
    %v3029 = vsub.s32 0, %v3028
    %v3030 = vrot.slane %v3025, %v3029
    %3032 = vmatprep.subr.mxu0 0.0
    %3033 = vmatpush1.msra.mxu0 %v3009
    %3034 = vmatprep.subr.mxu0 0.0
    %3035 = vmatpush1.msra.mxu0 %v3010
    %3036 = vmatprep.subr.mxu0 0.0
    %3037 = vmatpush1.msra.mxu0 %v3011
    %3038 = vmatprep.subr.mxu0 0.0
    %3039 = vmatpush1.msra.mxu0 %v3012
    %3040 = vmatprep.subr.mxu0 0.0
    %3041 = vmatpush1.msra.mxu0 %v3013
    %3042 = vmatprep.subr.mxu0 0.0
    %3043 = vmatpush1.msra.mxu0 %v3014
    %3044 = vmatprep.subr.mxu0 0.0
    %3045 = vmatpush1.msra.mxu0 %v3015
    %3046 = vmatprep.subr.mxu0 0.0
    %3047 = vmatpush1.msra.mxu0 %v3016
    %3048 = vmatprep.subr.mxu0 0.0
    %3049 = vmatpush1.msra.mxu0 %v3017
    %3050 = vmatprep.subr.mxu0 0.0
    %3051 = vmatpush1.msra.mxu0 %v3018
    %3052 = vmatprep.subr.mxu0 0.0
    %3053 = vmatpush1.msra.mxu0 %v3019
    %3054 = vmatprep.subr.mxu0 0.0
    %3055 = vmatpush1.msra.mxu0 %v3020
    %3056 = vmatprep.subr.mxu0 0.0
    %3057 = vmatpush1.msra.mxu0 %v3021
    %3058 = vmatprep.subr.mxu0 0.0
    %3059 = vmatpush1.msra.mxu0 %v3022
    %3060 = vmatprep.subr.mxu0 0.0
    %3061 = vmatpush1.msra.mxu0 %v3023
    %3062 = vmatprep.subr.mxu0 0.0
    %3063 = vmatpush1.msra.mxu0 %v3024
    %3064 = vmatprep.subr.mxu0 0.0
    %3065 = vmatpush1.msra.mxu0 0.0
    %3066 = vmatprep.subr.mxu0 0.0
    %3067 = vmatpush1.msra.mxu0 0.0
    %3068 = vmatprep.subr.mxu0 0.0
    %3069 = vmatpush1.msra.mxu0 0.0
    %3070 = vmatprep.subr.mxu0 0.0
    %3071 = vmatpush1.msra.mxu0 0.0
    %3072 = vmatprep.subr.mxu0 0.0
    %3073 = vmatpush1.msra.mxu0 0.0
    %3074 = vmatprep.subr.mxu0 0.0
    %3075 = vmatpush1.msra.mxu0 0.0
    %3076 = vmatprep.subr.mxu0 0.0
    %3077 = vmatpush1.msra.mxu0 0.0
    %3078 = vmatprep.subr.mxu0 0.0
    %3079 = vmatpush1.msra.mxu0 0.0
    %3080 = vmatprep.subr.mxu0 0.0
    %3081 = vmatpush1.msra.mxu0 0.0
    %3082 = vmatprep.subr.mxu0 0.0
    %3083 = vmatpush1.msra.mxu0 0.0
    %3084 = vmatprep.subr.mxu0 0.0
    %3085 = vmatpush1.msra.mxu0 0.0
    %3086 = vmatprep.subr.mxu0 0.0
    %3087 = vmatpush1.msra.mxu0 0.0
    %3088 = vmatprep.subr.mxu0 0.0
    %3089 = vmatpush1.msra.mxu0 0.0
    %3090 = vmatprep.subr.mxu0 0.0
    %3091 = vmatpush1.msra.mxu0 0.0
    %3092 = vmatprep.subr.mxu0 0.0
    %3093 = vmatpush1.msra.mxu0 0.0
    %3094 = vmatprep.subr.mxu0 0.0
    %3095 = vmatpush1.msra.mxu0 0.0
    %3096 = vmatprep.mubr.f32.mxu0 0.0
    %3097 = vmatmul.mubr.f32.gmra.mrb[0].mxu0 %v3008
    %v3098 = vpop.f32.mrb[0].mxu0
    %v3099 = vadd.f32 %v3030, %v3098
    %v3100 = vpop.f32.mrb[0].mxu0
    %3101 = vdwg.mxu0
    %vm3102 = vcmask 7168
    %3103 = vst.msk [vmem:[%s5] sm:$0xff] %vm3102, %v3099
    // Predicated region
    $region26: #{lstm_model_forward.1} parent=1 // pred_check
      _
    $region27: #{lstm_model_forward.1} parent=1 // pred_check_branch
      %3105 = sbr.rel (0) target = $region29
    $region28: #{lstm_model_forward.1} parent=1 // pred_region
      _
    $region29: #{lstm_model_forward.1} parent=1 // pred_fallthru
      _
    // Predicated region
    $region30: #{lstm_model_forward.1} parent=1 // pred_check
      _
    $region31: #{lstm_model_forward.1} parent=1 // pred_check_branch
      %3107 = sbr.rel (0) target = $region33
    $region32: #{lstm_model_forward.1} parent=1 // pred_region
      _
    $region33: #{lstm_model_forward.1} parent=1 // pred_fallthru
      _
    %3108 = vsyncpa [#allocation4], 1

</llo_original>
